<compile_context>
chip_gen: v6e
topology: v6e:2x2x1
jax: 0.10.0
libtpu: 0.0.40
codegen_flags: <defaults>
</compile_context>

<pallas_src>
import math
import functools

import jax
import jax.numpy as jnp
from jax import lax
from jax.experimental import pallas as pl
from jax.experimental.pallas import tpu as pltpu


# ---------------------------------------------------------------------------
# Fused SelfAttention kernel (one batch element per grid step)
# ---------------------------------------------------------------------------
def _self_attn_kernel(x_ref, gamma_ref, beta_ref, m_ref, mt_ref,
                      wqkv_ref, wout_ref, bout_ref,
                      o_ref, *, inv_n_per_group, scale):
    Dd, S, C = x_ref.shape[1:]                    # depth, H*W, channels (static)
    x = x_ref[0].reshape(Dd * S, C)               # (N, C) f32, N = D*H*W

    # ---- GroupNorm: two-pass f32 stats, group reduce/broadcast via one-hot matmuls ----
    ch_sum = jnp.sum(x, axis=0, keepdims=True)                                   # (1, C)
    mean_g = jnp.dot(ch_sum, m_ref[...],
                     preferred_element_type=jnp.float32) * inv_n_per_group       # (1, G)
    mean_c = jnp.dot(mean_g, mt_ref[...], preferred_element_type=jnp.float32)    # (1, C)
    xc = x - mean_c
    ss_c = jnp.sum(xc * xc, axis=0, keepdims=True)                               # (1, C)
    var_g = jnp.dot(ss_c, m_ref[...],
                    preferred_element_type=jnp.float32) * inv_n_per_group        # (1, G)
    inv_c = jnp.dot(lax.rsqrt(var_g + 1e-5), mt_ref[...],
                    preferred_element_type=jnp.float32)                          # (1, C)
    norm = (xc * inv_c * gamma_ref[...] + beta_ref[...]).astype(jnp.bfloat16)    # (N, C)

    # ---- qkv projection (1x1x1 conv, no bias): ONE bf16 MXU matmul, f32 accumulate ----
    qkv = jnp.dot(norm, wqkv_ref[...], preferred_element_type=jnp.float32)       # (N, 3C)
    q3 = qkv[:, :C].astype(jnp.bfloat16).reshape(Dd, S, C)
    k3 = qkv[:, C:2 * C].astype(jnp.bfloat16).reshape(Dd, S, C)
    v3 = qkv[:, 2 * C:].astype(jnp.bfloat16).reshape(Dd, S, C)

    # ---- attention scores per depth slice: (D, Sq, Sk), f32, contract over channels ----
    scores = jnp.einsum('dsc,dtc->dst', q3, k3,
                        preferred_element_type=jnp.float32) * scale

    # softmax over the depth axis d (matches torch.softmax on the last dim of 'bnhwyxd')
    mx = jnp.max(scores, axis=0, keepdims=True)
    e = jnp.exp(scores - mx)
    attn = e * pl.reciprocal(jnp.sum(e, axis=0, keepdims=True), approx=True)

    # ---- attention output: contract over key positions (y,x), per depth ----
    ctx = jnp.einsum('dst,dtc->dsc', attn.astype(jnp.bfloat16), v3,
                     preferred_element_type=jnp.float32)                         # (D, S, C)

    # ---- output 1x1x1 conv + bias + residual (fused epilogue) ----
    y = jnp.dot(ctx.reshape(Dd * S, C).astype(jnp.bfloat16), wout_ref[...],
                preferred_element_type=jnp.float32)
    o_ref[0] = (y + bout_ref[...] + x).reshape(Dd, S, C)


# ---------------------------------------------------------------------------
# Wrapper: layout conversion + pallas_call
# ---------------------------------------------------------------------------
def self_attention(x, params, n_head=1):
    """x: (B, C, H, W, D) in PyTorch layout; returns the same layout."""
    assert n_head == 1  # TODO(synk): multi-head (n_head > 1) path; module default is 1.
    B, C, H, W, Dp = x.shape
    G = params['norm_groups']
    cg = C // G
    S = H * W

    # channels-last, per-depth-slice layout: (B, D, H*W, C)
    xr = jnp.transpose(x.astype(jnp.float32), (0, 4, 2, 3, 1)).reshape(B, Dp, S, C)

    # one-hot group-assignment matrix for GroupNorm reductions
    m = (jnp.arange(C)[:, None] // cg == jnp.arange(G)[None, :]).astype(jnp.float32)

    # conv weights as (Cin, Cout) matrices, bf16 for the MXU; q/k/v weights fused
    wqkv = params['qkv_w'].reshape(3 * C, C).T.astype(jnp.bfloat16)       # (C, 3C)
    wout = params['out_w'].reshape(C, C).T.astype(jnp.bfloat16)           # (C, C)
    bout = params['out_b'].reshape(1, C).astype(jnp.float32)
    gamma = params['gn_g'].reshape(1, C).astype(jnp.float32)
    beta = params['gn_b'].reshape(1, C).astype(jnp.float32)

    kern = functools.partial(_self_attn_kernel,
                             inv_n_per_group=1.0 / float(Dp * S * cg),
                             scale=1.0 / math.sqrt(C))

    out = pl.pallas_call(
        kern,
        out_shape=jax.ShapeDtypeStruct((B, Dp, S, C), jnp.float32),
        grid_spec=pltpu.PrefetchScalarGridSpec(
            num_scalar_prefetch=0,
            grid=(B,),
            in_specs=[
                pl.BlockSpec((1, Dp, S, C), lambda b: (b, 0, 0, 0)),   # x
                pl.BlockSpec((1, C), lambda b: (0, 0)),                # gamma
                pl.BlockSpec((1, C), lambda b: (0, 0)),                # beta
                pl.BlockSpec((C, G), lambda b: (0, 0)),                # one-hot M
                pl.BlockSpec((G, C), lambda b: (0, 0)),                # M^T
                pl.BlockSpec((C, 3 * C), lambda b: (0, 0)),            # W_qkv (fused)
                pl.BlockSpec((C, C), lambda b: (0, 0)),                # W_out
                pl.BlockSpec((1, C), lambda b: (0, 0)),                # b_out
            ],
            out_specs=pl.BlockSpec((1, Dp, S, C), lambda b: (b, 0, 0, 0)),
        ),
        compiler_params=pltpu.CompilerParams(
            dimension_semantics=("parallel",)),   # lets v7x shard batches over its 2 TCs
    )(xr, gamma, beta, m, m.T, wqkv, wout, bout)

    # back to PyTorch layout (B, C, H, W, D)
    return jnp.transpose(out.reshape(B, Dp, H, W, C), (0, 4, 2, 3, 1))


# ---------------------------------------------------------------------------
# Pure-JAX reference (f32) for a sanity check against the torch semantics
# ---------------------------------------------------------------------------
def self_attention_ref(x, params):
    B, C, H, W, Dp = x.shape
    G = params['norm_groups']
    xg = x.reshape(B, G, C // G, H, W, Dp)
    mean = xg.mean(axis=(2, 3, 4, 5), keepdims=True)
    var = xg.var(axis=(2, 3, 4, 5), keepdims=True)
    norm = ((xg - mean) * lax.rsqrt(var + 1e-5)).reshape(B, C, H, W, Dp)
    norm = norm * params['gn_g'].reshape(1, C, 1, 1, 1) + params['gn_b'].reshape(1, C, 1, 1, 1)
    wqkv = params['qkv_w'].reshape(3 * C, C)
    qkv = jnp.einsum('oc,bchwd->bohwd', wqkv, norm)
    q, k, v = qkv[:, :C], qkv[:, C:2 * C], qkv[:, 2 * C:]
    attn = jnp.einsum('bchwd,bcyxd->bhwyxd', q, k) / math.sqrt(C)
    attn = jax.nn.softmax(attn, axis=-1)
    out = jnp.einsum('bhwyxd,bcyxd->bchwd', attn, v)
    wo = params['out_w'].reshape(C, C)
    out = jnp.einsum('oc,bchwd->bohwd', wo, out) + params['out_b'].reshape(1, C, 1, 1, 1)
    return out + x


# ---------------------------------------------------------------------------
# Deterministic parameter init (PyTorch-like scales)
# ---------------------------------------------------------------------------
def init_self_attention(key, in_channel, norm_groups=32):
    c = in_channel
    k1, k2, k3, k4, k5 = jax.random.split(key, 5)
    s = 1.0 / math.sqrt(c)
    return {
        'gn_g': jnp.ones((c,), jnp.float32) + 0.1 * jax.random.normal(k1, (c,), jnp.float32),
        'gn_b': 0.1 * jax.random.normal(k2, (c,), jnp.float32),
        'qkv_w': jax.random.uniform(k3, (3 * c, c, 1, 1, 1), jnp.float32, -s, s),
        'out_w': jax.random.uniform(k4, (c, c, 1, 1, 1), jnp.float32, -s, s),
        'out_b': jax.random.uniform(k5, (c,), jnp.float32, -s, s),
        'norm_groups': norm_groups,
    }


# ---------------------------------------------------------------------------
if __name__ == "__main__":
    B, C, H, W, Dp = 2, 128, 8, 8, 8           # in_channel=128, norm_groups=32 (default)
    key = jax.random.PRNGKey(0)
    kp, kx = jax.random.split(key)
    params = init_self_attention(kp, C, norm_groups=32)
    x = jax.random.normal(kx, (B, C, H, W, Dp), jnp.float32)

    fwd = jax.jit(functools.partial(self_attention, params=params))
    out = jax.block_until_ready(fwd(x))
    assert out.shape == (B, C, H, W, Dp), out.shape
    assert bool(jnp.all(jnp.isfinite(out)))

    ref = jax.block_until_ready(jax.jit(functools.partial(self_attention_ref, params=params))(x))
    max_err = float(jnp.max(jnp.abs(out - ref)))
    mean_err = float(jnp.mean(jnp.abs(out - ref)))
    # bf16 MXU inputs / f32 accumulation / approx reciprocal -> loose tolerance;
    # still catches any layout/axis bugs.
    assert mean_err < 5e-2 and max_err < 5e-1, (mean_err, max_err)

    print("KERNEL_OK")
</pallas_src>

<mosaic_0001>
module attributes {stable_mosaic.version = 11 : i64} {
  func.func @_self_attn_kernel(%arg0: i32, %arg1: memref<1x8x64x128xf32, #tpu.memory_space<vmem>>, %arg2: memref<1x128xf32, #tpu.memory_space<vmem>>, %arg3: memref<1x128xf32, #tpu.memory_space<vmem>>, %arg4: memref<128x32xf32, #tpu.memory_space<vmem>>, %arg5: memref<32x128xf32, #tpu.memory_space<vmem>>, %arg6: memref<128x384xbf16, #tpu.memory_space<vmem>>, %arg7: memref<128x128xbf16, #tpu.memory_space<vmem>>, %arg8: memref<1x128xf32, #tpu.memory_space<vmem>>, %arg9: memref<1x8x64x128xf32, #tpu.memory_space<vmem>>) attributes {dimension_semantics = [#tpu.dimension_semantics<parallel>], iteration_bounds = array<i64: 2>, scalar_prefetch = 0 : i64, scratch_operands = 0 : i64, tpu.core_type = #tpu.core_type<tc>, window_params = [{transform_indices = @transform_0, window_bounds = array<i64: 1, 8, 64, 128>}, {pipeline_mode = #tpu.pipeline_mode<synchronous>, transform_indices = @transform_1, window_bounds = array<i64: 1, 128>}, {pipeline_mode = #tpu.pipeline_mode<synchronous>, transform_indices = @transform_2, window_bounds = array<i64: 1, 128>}, {pipeline_mode = #tpu.pipeline_mode<synchronous>, transform_indices = @transform_3, window_bounds = array<i64: 128, 32>}, {pipeline_mode = #tpu.pipeline_mode<synchronous>, transform_indices = @transform_4, window_bounds = array<i64: 32, 128>}, {pipeline_mode = #tpu.pipeline_mode<synchronous>, transform_indices = @transform_5, window_bounds = array<i64: 128, 384>}, {pipeline_mode = #tpu.pipeline_mode<synchronous>, transform_indices = @transform_6, window_bounds = array<i64: 128, 128>}, {pipeline_mode = #tpu.pipeline_mode<synchronous>, transform_indices = @transform_7, window_bounds = array<i64: 1, 128>}, {transform_indices = @transform_8, window_bounds = array<i64: 1, 8, 64, 128>}]} {
    %c0 = arith.constant 0 : index
    %c0_0 = arith.constant 0 : index
    %c0_1 = arith.constant 0 : index
    %c0_2 = arith.constant 0 : index
    %0 = vector.load %arg1[%c0, %c0_0, %c0_1, %c0_2] : memref<1x8x64x128xf32, #tpu.memory_space<vmem>>, vector<1x8x64x128xf32>
    %1 = vector.shape_cast %0 : vector<1x8x64x128xf32> to vector<8x64x128xf32>
    %2 = vector.shape_cast %1 : vector<8x64x128xf32> to vector<512x128xf32>
    %cst = arith.constant dense<0.000000e+00> : vector<128xf32>
    %3 = vector.multi_reduction <add>, %2, %cst [0] : vector<512x128xf32> to vector<128xf32>
    %4 = vector.shape_cast %3 : vector<128xf32> to vector<1x128xf32>
    %c0_3 = arith.constant 0 : index
    %c0_4 = arith.constant 0 : index
    %5 = vector.load %arg4[%c0_3, %c0_4] : memref<128x32xf32, #tpu.memory_space<vmem>>, vector<128x32xf32>
    %cst_5 = arith.constant dense<0.000000e+00> : vector<1x32xf32>
    %6 = tpu.matmul %4, %5, %cst_5 {dimension_numbers = #tpu.dot_dimension_numbers<[1], [0], [0], [1], [0, 0, 1, 1], [], []>} : vector<1x128xf32>, vector<128x32xf32>, vector<1x32xf32> -> vector<1x32xf32>
    %cst_6 = arith.constant 4.8828125E-4 : f32
    %7 = vector.broadcast %cst_6 : f32 to vector<1x32xf32>
    %8 = arith.mulf %6, %7 : vector<1x32xf32>
    %c0_7 = arith.constant 0 : index
    %c0_8 = arith.constant 0 : index
    %9 = vector.load %arg5[%c0_7, %c0_8] : memref<32x128xf32, #tpu.memory_space<vmem>>, vector<32x128xf32>
    %cst_9 = arith.constant dense<0.000000e+00> : vector<1x128xf32>
    %10 = tpu.matmul %8, %9, %cst_9 {dimension_numbers = #tpu.dot_dimension_numbers<[1], [0], [0], [1], [0, 0, 1, 1], [], []>} : vector<1x32xf32>, vector<32x128xf32>, vector<1x128xf32> -> vector<1x128xf32>
    %11 = vector.broadcast %10 : vector<1x128xf32> to vector<512x128xf32>
    %12 = arith.subf %2, %11 : vector<512x128xf32>
    %13 = arith.mulf %12, %12 : vector<512x128xf32>
    %cst_10 = arith.constant dense<0.000000e+00> : vector<128xf32>
    %14 = vector.multi_reduction <add>, %13, %cst_10 [0] : vector<512x128xf32> to vector<128xf32>
    %15 = vector.shape_cast %14 : vector<128xf32> to vector<1x128xf32>
    %c0_11 = arith.constant 0 : index
    %c0_12 = arith.constant 0 : index
    %16 = vector.load %arg4[%c0_11, %c0_12] : memref<128x32xf32, #tpu.memory_space<vmem>>, vector<128x32xf32>
    %cst_13 = arith.constant dense<0.000000e+00> : vector<1x32xf32>
    %17 = tpu.matmul %15, %16, %cst_13 {dimension_numbers = #tpu.dot_dimension_numbers<[1], [0], [0], [1], [0, 0, 1, 1], [], []>} : vector<1x128xf32>, vector<128x32xf32>, vector<1x32xf32> -> vector<1x32xf32>
    %cst_14 = arith.constant 4.8828125E-4 : f32
    %18 = vector.broadcast %cst_14 : f32 to vector<1x32xf32>
    %19 = arith.mulf %17, %18 : vector<1x32xf32>
    %cst_15 = arith.constant 9.99999974E-6 : f32
    %20 = vector.broadcast %cst_15 : f32 to vector<1x32xf32>
    %21 = arith.addf %19, %20 : vector<1x32xf32>
    %22 = math.rsqrt %21 : vector<1x32xf32>
    %c0_16 = arith.constant 0 : index
    %c0_17 = arith.constant 0 : index
    %23 = vector.load %arg5[%c0_16, %c0_17] : memref<32x128xf32, #tpu.memory_space<vmem>>, vector<32x128xf32>
    %cst_18 = arith.constant dense<0.000000e+00> : vector<1x128xf32>
    %24 = tpu.matmul %22, %23, %cst_18 {dimension_numbers = #tpu.dot_dimension_numbers<[1], [0], [0], [1], [0, 0, 1, 1], [], []>} : vector<1x32xf32>, vector<32x128xf32>, vector<1x128xf32> -> vector<1x128xf32>
    %25 = vector.broadcast %24 : vector<1x128xf32> to vector<512x128xf32>
    %26 = arith.mulf %12, %25 : vector<512x128xf32>
    %c0_19 = arith.constant 0 : index
    %c0_20 = arith.constant 0 : index
    %27 = vector.load %arg2[%c0_19, %c0_20] : memref<1x128xf32, #tpu.memory_space<vmem>>, vector<1x128xf32>
    %28 = vector.broadcast %27 : vector<1x128xf32> to vector<512x128xf32>
    %29 = arith.mulf %26, %28 : vector<512x128xf32>
    %c0_21 = arith.constant 0 : index
    %c0_22 = arith.constant 0 : index
    %30 = vector.load %arg3[%c0_21, %c0_22] : memref<1x128xf32, #tpu.memory_space<vmem>>, vector<1x128xf32>
    %31 = vector.broadcast %30 : vector<1x128xf32> to vector<512x128xf32>
    %32 = arith.addf %29, %31 : vector<512x128xf32>
    %33 = arith.truncf %32 : vector<512x128xf32> to vector<512x128xbf16>
    %c0_23 = arith.constant 0 : index
    %c0_24 = arith.constant 0 : index
    %34 = vector.load %arg6[%c0_23, %c0_24] : memref<128x384xbf16, #tpu.memory_space<vmem>>, vector<128x384xbf16>
    %cst_25 = arith.constant dense<0.000000e+00> : vector<512x384xf32>
    %35 = tpu.matmul %33, %34, %cst_25 {dimension_numbers = #tpu.dot_dimension_numbers<[1], [0], [0], [1], [0, 0, 1, 1], [], []>} : vector<512x128xbf16>, vector<128x384xbf16>, vector<512x384xf32> -> vector<512x384xf32>
    %36 = vector.extract_strided_slice %35 {offsets = [0, 0], sizes = [512, 128], strides = [1, 1]} : vector<512x384xf32> to vector<512x128xf32>
    %37 = arith.truncf %36 : vector<512x128xf32> to vector<512x128xbf16>
    %38 = vector.shape_cast %37 : vector<512x128xbf16> to vector<8x64x128xbf16>
    %39 = vector.extract_strided_slice %35 {offsets = [0, 128], sizes = [512, 128], strides = [1, 1]} : vector<512x384xf32> to vector<512x128xf32>
    %40 = arith.truncf %39 : vector<512x128xf32> to vector<512x128xbf16>
    %41 = vector.shape_cast %40 : vector<512x128xbf16> to vector<8x64x128xbf16>
    %42 = vector.extract_strided_slice %35 {offsets = [0, 256], sizes = [512, 128], strides = [1, 1]} : vector<512x384xf32> to vector<512x128xf32>
    %43 = arith.truncf %42 : vector<512x128xf32> to vector<512x128xbf16>
    %44 = vector.shape_cast %43 : vector<512x128xbf16> to vector<8x64x128xbf16>
    "tpu.trace_start"() <{level = 10 : i32, message = "dsc,dtc->dst"}> : () -> ()
    %cst_26 = arith.constant dense<0.000000e+00> : vector<8x64x64xf32>
    %45 = tpu.matmul %38, %41, %cst_26 {dimension_numbers = #tpu.dot_dimension_numbers<[2], [2], [1], [1], [0, 0, 0, 1, 1, 1], [0], [0]>} : vector<8x64x128xbf16>, vector<8x64x128xbf16>, vector<8x64x64xf32> -> vector<8x64x64xf32>
    "tpu.trace_stop"() : () -> ()
    %cst_27 = arith.constant 0.0883883461 : f32
    %46 = vector.broadcast %cst_27 : f32 to vector<8x64x64xf32>
    %47 = arith.mulf %45, %46 : vector<8x64x64xf32>
    %cst_28 = arith.constant dense<0xFF800000> : vector<64x64xf32>
    %48 = vector.multi_reduction <maximumf>, %47, %cst_28 [0] : vector<8x64x64xf32> to vector<64x64xf32>
    %49 = vector.shape_cast %48 : vector<64x64xf32> to vector<1x64x64xf32>
    %50 = vector.broadcast %49 : vector<1x64x64xf32> to vector<8x64x64xf32>
    %51 = arith.subf %47, %50 : vector<8x64x64xf32>
    %52 = math.exp %51 : vector<8x64x64xf32>
    %cst_29 = arith.constant dense<0.000000e+00> : vector<64x64xf32>
    %53 = vector.multi_reduction <add>, %52, %cst_29 [0] : vector<8x64x64xf32> to vector<64x64xf32>
    %54 = vector.shape_cast %53 : vector<64x64xf32> to vector<1x64x64xf32>
    %55 = tpu.reciprocal %54 {approx = true} : vector<1x64x64xf32> -> vector<1x64x64xf32>
    %56 = vector.broadcast %55 : vector<1x64x64xf32> to vector<8x64x64xf32>
    %57 = arith.mulf %52, %56 : vector<8x64x64xf32>
    %58 = arith.truncf %57 : vector<8x64x64xf32> to vector<8x64x64xbf16>
    "tpu.trace_start"() <{level = 10 : i32, message = "dst,dtc->dsc"}> : () -> ()
    %cst_30 = arith.constant dense<0.000000e+00> : vector<8x64x128xf32>
    %59 = tpu.matmul %58, %44, %cst_30 {dimension_numbers = #tpu.dot_dimension_numbers<[2], [1], [1], [2], [0, 0, 0, 1, 1, 2], [0], [0]>} : vector<8x64x64xbf16>, vector<8x64x128xbf16>, vector<8x64x128xf32> -> vector<8x64x128xf32>
    "tpu.trace_stop"() : () -> ()
    %60 = vector.shape_cast %59 : vector<8x64x128xf32> to vector<512x128xf32>
    %61 = arith.truncf %60 : vector<512x128xf32> to vector<512x128xbf16>
    %c0_31 = arith.constant 0 : index
    %c0_32 = arith.constant 0 : index
    %62 = vector.load %arg7[%c0_31, %c0_32] : memref<128x128xbf16, #tpu.memory_space<vmem>>, vector<128x128xbf16>
    %cst_33 = arith.constant dense<0.000000e+00> : vector<512x128xf32>
    %63 = tpu.matmul %61, %62, %cst_33 {dimension_numbers = #tpu.dot_dimension_numbers<[1], [0], [0], [1], [0, 0, 1, 1], [], []>} : vector<512x128xbf16>, vector<128x128xbf16>, vector<512x128xf32> -> vector<512x128xf32>
    %c0_34 = arith.constant 0 : index
    %c0_35 = arith.constant 0 : index
    %64 = vector.load %arg8[%c0_34, %c0_35] : memref<1x128xf32, #tpu.memory_space<vmem>>, vector<1x128xf32>
    %65 = vector.broadcast %64 : vector<1x128xf32> to vector<512x128xf32>
    %66 = arith.addf %63, %65 : vector<512x128xf32>
    %67 = arith.addf %66, %2 : vector<512x128xf32>
    %68 = vector.shape_cast %67 : vector<512x128xf32> to vector<8x64x128xf32>
    %c0_36 = arith.constant 0 : index
    %c0_37 = arith.constant 0 : index
    %c0_38 = arith.constant 0 : index
    %c0_39 = arith.constant 0 : index
    %69 = vector.load %arg9[%c0_36, %c0_37, %c0_38, %c0_39] : memref<1x8x64x128xf32, #tpu.memory_space<vmem>>, vector<1x8x64x128xf32>
    %70 = vector.shape_cast %69 : vector<1x8x64x128xf32> to vector<8x64x128xf32>
    %71 = vector.shape_cast %68 : vector<8x64x128xf32> to vector<1x8x64x128xf32>
    tpu.vector_store %arg9[%c0_36, %c0_37, %c0_38, %c0_39], %71 {strides = array<i32>} : memref<1x8x64x128xf32, #tpu.memory_space<vmem>>, vector<1x8x64x128xf32>,
    return
  }
  func.func @transform_0(%arg0: i32) -> (i32, i32, i32, i32) {
    %c0_i32 = arith.constant 0 : i32
    %c0_i32_0 = arith.constant 0 : i32
    %c0_i32_1 = arith.constant 0 : i32
    %c0_i32_2 = arith.constant 0 : i32
    return %arg0, %c0_i32, %c0_i32_0, %c0_i32_1 : i32, i32, i32, i32
  }
  func.func @transform_1(%arg0: i32) -> (i32, i32) {
    %c0_i32 = arith.constant 0 : i32
    %c0_i32_0 = arith.constant 0 : i32
    %c0_i32_1 = arith.constant 0 : i32
    return %c0_i32, %c0_i32_0 : i32, i32
  }
  func.func @transform_2(%arg0: i32) -> (i32, i32) {
    %c0_i32 = arith.constant 0 : i32
    %c0_i32_0 = arith.constant 0 : i32
    %c0_i32_1 = arith.constant 0 : i32
    return %c0_i32, %c0_i32_0 : i32, i32
  }
  func.func @transform_3(%arg0: i32) -> (i32, i32) {
    %c0_i32 = arith.constant 0 : i32
    %c0_i32_0 = arith.constant 0 : i32
    %c0_i32_1 = arith.constant 0 : i32
    return %c0_i32, %c0_i32_0 : i32, i32
  }
  func.func @transform_4(%arg0: i32) -> (i32, i32) {
    %c0_i32 = arith.constant 0 : i32
    %c0_i32_0 = arith.constant 0 : i32
    %c0_i32_1 = arith.constant 0 : i32
    return %c0_i32, %c0_i32_0 : i32, i32
  }
  func.func @transform_5(%arg0: i32) -> (i32, i32) {
    %c0_i32 = arith.constant 0 : i32
    %c0_i32_0 = arith.constant 0 : i32
    %c0_i32_1 = arith.constant 0 : i32
    return %c0_i32, %c0_i32_0 : i32, i32
  }
  func.func @transform_6(%arg0: i32) -> (i32, i32) {
    %c0_i32 = arith.constant 0 : i32
    %c0_i32_0 = arith.constant 0 : i32
    %c0_i32_1 = arith.constant 0 : i32
    return %c0_i32, %c0_i32_0 : i32, i32
  }
  func.func @transform_7(%arg0: i32) -> (i32, i32) {
    %c0_i32 = arith.constant 0 : i32
    %c0_i32_0 = arith.constant 0 : i32
    %c0_i32_1 = arith.constant 0 : i32
    return %c0_i32, %c0_i32_0 : i32, i32
  }
  func.func @transform_8(%arg0: i32) -> (i32, i32, i32, i32) {
    %c0_i32 = arith.constant 0 : i32
    %c0_i32_0 = arith.constant 0 : i32
    %c0_i32_1 = arith.constant 0 : i32
    %c0_i32_2 = arith.constant 0 : i32
    return %arg0, %c0_i32, %c0_i32_0, %c0_i32_1 : i32, i32, i32, i32
  }
}

</mosaic_0001>

<llo_original>
// kernel: self_attention.1
$region0: #{self_attention.1}
  #allocation0 [shape = 'u32[]', space=smem, size = 0x4, offset = 0x4, fixed_abs, tag = 'smem constant byte address 0x4 - core index']
  #allocation1 [shape = 'u32[144,128]{1,0:T(1,128)}', space=vmem, size = 0x12000, scoped, tag = 'internal scratch']
  %s0 = inlined_call_operand.vmem [shape: f32[2,8,64,128], index: 0, kind: input, shape index: {}]
  %s1 = inlined_call_operand.vmem [shape: f32[1,128], index: 1, kind: input, shape index: {}]
  %s2 = inlined_call_operand.vmem [shape: f32[1,128], index: 2, kind: input, shape index: {}]
  %s3 = inlined_call_operand.vmem [shape: f32[128,32], index: 3, kind: input, shape index: {}]
  %s4 = inlined_call_operand.vmem [shape: f32[32,128], index: 4, kind: input, shape index: {}]
  %s5 = inlined_call_operand.vmem [shape: bf16[128,384], index: 5, kind: input, shape index: {}]
  %s6 = inlined_call_operand.vmem [shape: bf16[128,128], index: 6, kind: input, shape index: {}]
  %s7 = inlined_call_operand.vmem [shape: f32[1,128], index: 7, kind: input, shape index: {}]
  %s8 = inlined_call_operand.vmem [shape: f32[2,8,64,128], index: 8, kind: output, shape index: {}]
  %s9 = sld [smem:[#allocation0]]
  $region65: #{self_attention.1} parent=0
    _
  %s11 = ssub.s32 1, %s9
  %s12 = scalar_select 0, %s11, %s9
  loop: start=0, step=1, limit=4
  $region2: #{self_attention.1} parent=0 // loop_pre_header
    _
  $region3: #{self_attention.1} parent=0 // loop_header
    %s14 = sphi 0, %s18
    %p15 = scmp.ge.s32.totalorder %s14, 4
    %s24 = sphi 0, %s26
    %s27 = sphi 0, %s24
    %s28 = sphi 0, %s27
    %s44 = sphi 0, %s28
    %s48 = sphi 0, %s48
    %s50 = sphi 0, %s48
    %s51 = sphi 0, %s50
    %s65 = sphi 0, %s51
    %s69 = sphi 0, %s69
    %s71 = sphi 0, %s69
    %s72 = sphi 0, %s71
    %s86 = sphi 0, %s72
    %s90 = sphi 0, %s90
    %s92 = sphi 0, %s90
    %s93 = sphi 0, %s92
    %s107 = sphi 0, %s93
    %s111 = sphi 0, %s111
    %s113 = sphi 0, %s111
    %s114 = sphi 0, %s113
    %s128 = sphi 0, %s114
    %s132 = sphi 0, %s132
    %s134 = sphi 0, %s132
    %s135 = sphi 0, %s134
    %s149 = sphi 0, %s135
    %s153 = sphi 0, %s153
    %s155 = sphi 0, %s153
    %s156 = sphi 0, %s155
    %s170 = sphi 0, %s156
    %s174 = sphi 0, %s174
    %s176 = sphi 0, %s174
    %s177 = sphi 0, %s176
    %s191 = sphi 0, %s177
    %s197 = sphi 0, %s199
    %s200 = sphi 0, %s197
    %s201 = sphi 0, %s200
    %s217 = sphi 0, %s201
  $region4: #{self_attention.1} parent=0 // loop_header_branch
    %17 = sbr.rel (%p15) target = $region8
  $region5: #{self_attention.1} parent=0 // loop_body
    %s19 = ssub.s32 %s14, 1
    %s20 = ssub.s32 %s14, 2
    %s21 = sadd.s32 %s14, 1
    %s22 = ssub.s32 %s14, %s21
    %p23 = scmp.eq.s32.totalorder %s22, 0
    %s25 = sadd.s32 %s24, 1
    %s26 = scalar_select %p23, %s24, %s25
    %p29 = pneg %p23
    %p30 = scmp.eq.s32.totalorder %s14, 1
    %p31 = por %p29, %p30
    %p32 = scmp.ne.s32.totalorder %s24, %s27
    %p33 = scmp.eq.s32.totalorder %s14, 0
    %p34 = por %p32, %p33
    %p35 = scmp.ne.s32.totalorder %s24, %s27
    %p36 = scmp.eq.s32.totalorder %s19, 1
    %p37 = por %p35, %p36
    %p38 = scmp.ne.s32.totalorder %s27, %s28
    %p39 = scmp.eq.s32.totalorder %s19, 0
    %p40 = por %p38, %p39
    %p41 = scmp.ne.s32.totalorder %s27, %s28
    %p42 = scmp.eq.s32.totalorder %s20, 1
    %p43 = por %p41, %p42
    %p45 = scmp.ne.s32.totalorder %s28, %s44
    %p46 = scmp.eq.s32.totalorder %s20, 0
    %p47 = por %p45, %p46
    %s49 = sadd.s32 %s48, 1
    %p52 = scmp.eq.s32.totalorder %s14, 1
    %p53 = scmp.ne.s32.totalorder %s48, %s50
    %p54 = scmp.eq.s32.totalorder %s14, 0
    %p55 = por %p53, %p54
    %p56 = scmp.ne.s32.totalorder %s48, %s50
    %p57 = scmp.eq.s32.totalorder %s19, 1
    %p58 = por %p56, %p57
    %p59 = scmp.ne.s32.totalorder %s50, %s51
    %p60 = scmp.eq.s32.totalorder %s19, 0
    %p61 = por %p59, %p60
    %p62 = scmp.ne.s32.totalorder %s50, %s51
    %p63 = scmp.eq.s32.totalorder %s20, 1
    %p64 = por %p62, %p63
    %p66 = scmp.ne.s32.totalorder %s51, %s65
    %p67 = scmp.eq.s32.totalorder %s20, 0
    %p68 = por %p66, %p67
    %s70 = sadd.s32 %s69, 1
    %p73 = scmp.eq.s32.totalorder %s14, 1
    %p74 = scmp.ne.s32.totalorder %s69, %s71
    %p75 = scmp.eq.s32.totalorder %s14, 0
    %p76 = por %p74, %p75
    %p77 = scmp.ne.s32.totalorder %s69, %s71
    %p78 = scmp.eq.s32.totalorder %s19, 1
    %p79 = por %p77, %p78
    %p80 = scmp.ne.s32.totalorder %s71, %s72
    %p81 = scmp.eq.s32.totalorder %s19, 0
    %p82 = por %p80, %p81
    %p83 = scmp.ne.s32.totalorder %s71, %s72
    %p84 = scmp.eq.s32.totalorder %s20, 1
    %p85 = por %p83, %p84
    %p87 = scmp.ne.s32.totalorder %s72, %s86
    %p88 = scmp.eq.s32.totalorder %s20, 0
    %p89 = por %p87, %p88
    %s91 = sadd.s32 %s90, 1
    %p94 = scmp.eq.s32.totalorder %s14, 1
    %p95 = scmp.ne.s32.totalorder %s90, %s92
    %p96 = scmp.eq.s32.totalorder %s14, 0
    %p97 = por %p95, %p96
    %p98 = scmp.ne.s32.totalorder %s90, %s92
    %p99 = scmp.eq.s32.totalorder %s19, 1
    %p100 = por %p98, %p99
    %p101 = scmp.ne.s32.totalorder %s92, %s93
    %p102 = scmp.eq.s32.totalorder %s19, 0
    %p103 = por %p101, %p102
    %p104 = scmp.ne.s32.totalorder %s92, %s93
    %p105 = scmp.eq.s32.totalorder %s20, 1
    %p106 = por %p104, %p105
    %p108 = scmp.ne.s32.totalorder %s93, %s107
    %p109 = scmp.eq.s32.totalorder %s20, 0
    %p110 = por %p108, %p109
    %s112 = sadd.s32 %s111, 1
    %p115 = scmp.eq.s32.totalorder %s14, 1
    %p116 = scmp.ne.s32.totalorder %s111, %s113
    %p117 = scmp.eq.s32.totalorder %s14, 0
    %p118 = por %p116, %p117
    %p119 = scmp.ne.s32.totalorder %s111, %s113
    %p120 = scmp.eq.s32.totalorder %s19, 1
    %p121 = por %p119, %p120
    %p122 = scmp.ne.s32.totalorder %s113, %s114
    %p123 = scmp.eq.s32.totalorder %s19, 0
    %p124 = por %p122, %p123
    %p125 = scmp.ne.s32.totalorder %s113, %s114
    %p126 = scmp.eq.s32.totalorder %s20, 1
    %p127 = por %p125, %p126
    %p129 = scmp.ne.s32.totalorder %s114, %s128
    %p130 = scmp.eq.s32.totalorder %s20, 0
    %p131 = por %p129, %p130
    %s133 = sadd.s32 %s132, 1
    %p136 = scmp.eq.s32.totalorder %s14, 1
    %p137 = scmp.ne.s32.totalorder %s132, %s134
    %p138 = scmp.eq.s32.totalorder %s14, 0
    %p139 = por %p137, %p138
    %p140 = scmp.ne.s32.totalorder %s132, %s134
    %p141 = scmp.eq.s32.totalorder %s19, 1
    %p142 = por %p140, %p141
    %p143 = scmp.ne.s32.totalorder %s134, %s135
    %p144 = scmp.eq.s32.totalorder %s19, 0
    %p145 = por %p143, %p144
    %p146 = scmp.ne.s32.totalorder %s134, %s135
    %p147 = scmp.eq.s32.totalorder %s20, 1
    %p148 = por %p146, %p147
    %p150 = scmp.ne.s32.totalorder %s135, %s149
    %p151 = scmp.eq.s32.totalorder %s20, 0
    %p152 = por %p150, %p151
    %s154 = sadd.s32 %s153, 1
    %p157 = scmp.eq.s32.totalorder %s14, 1
    %p158 = scmp.ne.s32.totalorder %s153, %s155
    %p159 = scmp.eq.s32.totalorder %s14, 0
    %p160 = por %p158, %p159
    %p161 = scmp.ne.s32.totalorder %s153, %s155
    %p162 = scmp.eq.s32.totalorder %s19, 1
    %p163 = por %p161, %p162
    %p164 = scmp.ne.s32.totalorder %s155, %s156
    %p165 = scmp.eq.s32.totalorder %s19, 0
    %p166 = por %p164, %p165
    %p167 = scmp.ne.s32.totalorder %s155, %s156
    %p168 = scmp.eq.s32.totalorder %s20, 1
    %p169 = por %p167, %p168
    %p171 = scmp.ne.s32.totalorder %s156, %s170
    %p172 = scmp.eq.s32.totalorder %s20, 0
    %p173 = por %p171, %p172
    %s175 = sadd.s32 %s174, 1
    %p178 = scmp.eq.s32.totalorder %s14, 1
    %p179 = scmp.ne.s32.totalorder %s174, %s176
    %p180 = scmp.eq.s32.totalorder %s14, 0
    %p181 = por %p179, %p180
    %p182 = scmp.ne.s32.totalorder %s174, %s176
    %p183 = scmp.eq.s32.totalorder %s19, 1
    %p184 = por %p182, %p183
    %p185 = scmp.ne.s32.totalorder %s176, %s177
    %p186 = scmp.eq.s32.totalorder %s19, 0
    %p187 = por %p185, %p186
    %p188 = scmp.ne.s32.totalorder %s176, %s177
    %p189 = scmp.eq.s32.totalorder %s20, 1
    %p190 = por %p188, %p189
    %p192 = scmp.ne.s32.totalorder %s177, %s191
    %p193 = scmp.eq.s32.totalorder %s20, 0
    %p194 = por %p192, %p193
    %s195 = ssub.s32 %s14, %s21
    %p196 = scmp.eq.s32.totalorder %s195, 0
    %s198 = sadd.s32 %s197, 1
    %s199 = scalar_select %p196, %s197, %s198
    %p202 = pneg %p196
    %p203 = scmp.eq.s32.totalorder %s14, 1
    %p204 = por %p202, %p203
    %p205 = scmp.ne.s32.totalorder %s197, %s200
    %p206 = scmp.eq.s32.totalorder %s14, 0
    %p207 = por %p205, %p206
    %p208 = scmp.ne.s32.totalorder %s197, %s200
    %p209 = scmp.eq.s32.totalorder %s19, 1
    %p210 = por %p208, %p209
    %p211 = scmp.ne.s32.totalorder %s200, %s201
    %p212 = scmp.eq.s32.totalorder %s19, 0
    %p213 = por %p211, %p212
    %p214 = scmp.ne.s32.totalorder %s200, %s201
    %p215 = scmp.eq.s32.totalorder %s20, 1
    %p216 = por %p214, %p215
    %p218 = scmp.ne.s32.totalorder %s201, %s217
    %p219 = scmp.eq.s32.totalorder %s20, 0
    %p220 = por %p218, %p219
    %p221 = scmp.le.s32.totalorder 1, %s14
    %p222 = scmp.lt.s32.totalorder %s14, 3
    %p223 = pnand %p221, %p222
    %p224 = pneg %p223
    // Predicated region
    $region9: #{self_attention.1} parent=5 // pred_check
      _
    $region10: #{self_attention.1} parent=5 // pred_check_branch
      %226 = sbr.rel (%p223) target = $region12
    $region11: #{self_attention.1} parent=5 // pred_region
      %s227 = ssub.s32 %s14, 1
      // Predicated region
      $region13: #{self_attention.1} parent=11 // pred_check
        %p228 = pneg %p61
      $region14: #{self_attention.1} parent=11 // pred_check_branch
        %230 = sbr.rel (%p228) target = $region16
      $region15: #{self_attention.1} parent=11 // pred_region
        _
      $region16: #{self_attention.1} parent=11 // pred_fallthru
        _
      // Predicated region
      $region17: #{self_attention.1} parent=11 // pred_check
        %p231 = pneg %p82
      $region18: #{self_attention.1} parent=11 // pred_check_branch
        %233 = sbr.rel (%p231) target = $region20
      $region19: #{self_attention.1} parent=11 // pred_region
        _
      $region20: #{self_attention.1} parent=11 // pred_fallthru
        _
      // Predicated region
      $region21: #{self_attention.1} parent=11 // pred_check
        %p234 = pneg %p103
      $region22: #{self_attention.1} parent=11 // pred_check_branch
        %236 = sbr.rel (%p234) target = $region24
      $region23: #{self_attention.1} parent=11 // pred_region
        _
      $region24: #{self_attention.1} parent=11 // pred_fallthru
        _
      // Predicated region
      $region25: #{self_attention.1} parent=11 // pred_check
        %p237 = pneg %p124
      $region26: #{self_attention.1} parent=11 // pred_check_branch
        %239 = sbr.rel (%p237) target = $region28
      $region27: #{self_attention.1} parent=11 // pred_region
        _
      $region28: #{self_attention.1} parent=11 // pred_fallthru
        _
      // Predicated region
      $region29: #{self_attention.1} parent=11 // pred_check
        %p240 = pneg %p145
      $region30: #{self_attention.1} parent=11 // pred_check_branch
        %242 = sbr.rel (%p240) target = $region32
      $region31: #{self_attention.1} parent=11 // pred_region
        _
      $region32: #{self_attention.1} parent=11 // pred_fallthru
        _
      // Predicated region
      $region33: #{self_attention.1} parent=11 // pred_check
        %p243 = pneg %p166
      $region34: #{self_attention.1} parent=11 // pred_check_branch
        %245 = sbr.rel (%p243) target = $region36
      $region35: #{self_attention.1} parent=11 // pred_region
        _
      $region36: #{self_attention.1} parent=11 // pred_fallthru
        _
      // Predicated region
      $region37: #{self_attention.1} parent=11 // pred_check
        %p246 = pneg %p187
      $region38: #{self_attention.1} parent=11 // pred_check_branch
        %248 = sbr.rel (%p246) target = $region40
      $region39: #{self_attention.1} parent=11 // pred_region
        _
      $region40: #{self_attention.1} parent=11 // pred_fallthru
        _
    $region12: #{self_attention.1} parent=5 // pred_fallthru
      _
    %p249 = scmp.lt.s32.totalorder %s14, 2
    // Predicated region
    $region41: #{self_attention.1} parent=5 // pred_check
      %p250 = pneg %p249
    $region42: #{self_attention.1} parent=5 // pred_check_branch
      %252 = sbr.rel (%p250) target = $region44
    $region43: #{self_attention.1} parent=5 // pred_region
      // Predicated region
      $region45: #{self_attention.1} parent=43 // pred_check
        %p253 = pneg %p34
      $region46: #{self_attention.1} parent=43 // pred_check_branch
        %255 = sbr.rel (%p253) target = $region48
      $region47: #{self_attention.1} parent=43 // pred_region
        %p256 = scmp.lt.s32.totalorder %s14, 1
        %s257 = scalar_select %p256, %s14, 1
        %s258 = smul.addr %s257, 64
        %s259 = smul.addr %s258, 8
        %s260 = scalar_lea.vmem %s0, %s259
      $region48: #{self_attention.1} parent=43 // pred_fallthru
        _
    $region44: #{self_attention.1} parent=5 // pred_fallthru
      _
    %p261 = scmp.le.s32.totalorder 1, %s14
    %p262 = scmp.lt.s32.totalorder %s14, 3
    %p263 = pnand %p261, %p262
    %p264 = pneg %p263
    // Predicated region
    $region49: #{self_attention.1} parent=5 // pred_check
      _
    $region50: #{self_attention.1} parent=5 // pred_check_branch
      %266 = sbr.rel (%p263) target = $region52
    $region51: #{self_attention.1} parent=5 // pred_region
      %s267 = ssub.s32 %s14, 1
      %p268 = scmp.lt.s32.totalorder %s19, 1
      %s269 = scalar_select %p268, %s19, 1
      %s270 = smul.addr %s269, 64
      %s271 = smul.addr %s270, 8
      %s272 = scalar_lea.vmem %s0, %s271
      %p273 = pneg %p40
      %p274 = pneg %p37
      %p275 = pneg %p61
      %p276 = pneg %p58
      %p277 = pneg %p82
      %p278 = pneg %p79
      %p279 = pneg %p103
      %p280 = pneg %p100
      %p281 = pneg %p124
      %p282 = pneg %p121
      %p283 = pneg %p145
      %p284 = pneg %p142
      %p285 = pneg %p166
      %p286 = pneg %p163
      %p287 = pneg %p187
      %p288 = pneg %p184
      %p289 = pneg %p213
      %p290 = pneg %p210
      %p291 = scmp.lt.s32.totalorder %s19, 1
      %s292 = scalar_select %p291, %s19, 1
      %s293 = smul.addr %s292, 64
      %s294 = smul.addr %s293, 8
      %s295 = scalar_lea.vmem %s8, %s294
      %p296 = scmp.lt.s32.totalorder %s19, 1
      %s297 = scalar_select %p296, %s19, 1
      %s298 = smul.addr %s297, 64
      %s299 = smul.addr %s298, 8
      %s300 = scalar_lea.vmem %s0, %s299
      %p301 = scmp.lt.s32.totalorder %s19, 1
      %s302 = scalar_select %p301, %s19, 1
      %s303 = smul.addr %s302, 64
      %s304 = smul.addr %s303, 8
      %s305 = scalar_lea.vmem %s8, %s304
      %v307 = vld [vmem:[%s300] sm:$0xff]
      %v308 = vld [vmem:[%s300 + $0x8] sm:$0xff]
      %v309 = vld [vmem:[%s300 + $0x10] sm:$0xff]
      %v310 = vld [vmem:[%s300 + $0x18] sm:$0xff]
      %v311 = vld [vmem:[%s300 + $0x20] sm:$0xff]
      %v312 = vld [vmem:[%s300 + $0x28] sm:$0xff]
      %v313 = vld [vmem:[%s300 + $0x30] sm:$0xff]
      %v314 = vld [vmem:[%s300 + $0x38] sm:$0xff]
      %v315 = vld [vmem:[%s300 + $0x40] sm:$0xff]
      %v316 = vld [vmem:[%s300 + $0x48] sm:$0xff]
      %v317 = vld [vmem:[%s300 + $0x50] sm:$0xff]
      %v318 = vld [vmem:[%s300 + $0x58] sm:$0xff]
      %v319 = vld [vmem:[%s300 + $0x60] sm:$0xff]
      %v320 = vld [vmem:[%s300 + $0x68] sm:$0xff]
      %v321 = vld [vmem:[%s300 + $0x70] sm:$0xff]
      %v322 = vld [vmem:[%s300 + $0x78] sm:$0xff]
      %v323 = vld [vmem:[%s300 + $0x80] sm:$0xff]
      %v324 = vld [vmem:[%s300 + $0x88] sm:$0xff]
      %v325 = vld [vmem:[%s300 + $0x90] sm:$0xff]
      %v326 = vld [vmem:[%s300 + $0x98] sm:$0xff]
      %v327 = vld [vmem:[%s300 + $0xa0] sm:$0xff]
      %v328 = vld [vmem:[%s300 + $0xa8] sm:$0xff]
      %v329 = vld [vmem:[%s300 + $0xb0] sm:$0xff]
      %v330 = vld [vmem:[%s300 + $0xb8] sm:$0xff]
      %v331 = vld [vmem:[%s300 + $0xc0] sm:$0xff]
      %v332 = vld [vmem:[%s300 + $0xc8] sm:$0xff]
      %v333 = vld [vmem:[%s300 + $0xd0] sm:$0xff]
      %v334 = vld [vmem:[%s300 + $0xd8] sm:$0xff]
      %v335 = vld [vmem:[%s300 + $0xe0] sm:$0xff]
      %v336 = vld [vmem:[%s300 + $0xe8] sm:$0xff]
      %v337 = vld [vmem:[%s300 + $0xf0] sm:$0xff]
      %v338 = vld [vmem:[%s300 + $0xf8] sm:$0xff]
      %v339 = vld [vmem:[%s300 + $0x100] sm:$0xff]
      %v340 = vld [vmem:[%s300 + $0x108] sm:$0xff]
      %v341 = vld [vmem:[%s300 + $0x110] sm:$0xff]
      %v342 = vld [vmem:[%s300 + $0x118] sm:$0xff]
      %v343 = vld [vmem:[%s300 + $0x120] sm:$0xff]
      %v344 = vld [vmem:[%s300 + $0x128] sm:$0xff]
      %v345 = vld [vmem:[%s300 + $0x130] sm:$0xff]
      %v346 = vld [vmem:[%s300 + $0x138] sm:$0xff]
      %v347 = vld [vmem:[%s300 + $0x140] sm:$0xff]
      %v348 = vld [vmem:[%s300 + $0x148] sm:$0xff]
      %v349 = vld [vmem:[%s300 + $0x150] sm:$0xff]
      %v350 = vld [vmem:[%s300 + $0x158] sm:$0xff]
      %v351 = vld [vmem:[%s300 + $0x160] sm:$0xff]
      %v352 = vld [vmem:[%s300 + $0x168] sm:$0xff]
      %v353 = vld [vmem:[%s300 + $0x170] sm:$0xff]
      %v354 = vld [vmem:[%s300 + $0x178] sm:$0xff]
      %v355 = vld [vmem:[%s300 + $0x180] sm:$0xff]
      %v356 = vld [vmem:[%s300 + $0x188] sm:$0xff]
      %v357 = vld [vmem:[%s300 + $0x190] sm:$0xff]
      %v358 = vld [vmem:[%s300 + $0x198] sm:$0xff]
      %v359 = vld [vmem:[%s300 + $0x1a0] sm:$0xff]
      %v360 = vld [vmem:[%s300 + $0x1a8] sm:$0xff]
      %v361 = vld [vmem:[%s300 + $0x1b0] sm:$0xff]
      %v362 = vld [vmem:[%s300 + $0x1b8] sm:$0xff]
      %v363 = vld [vmem:[%s300 + $0x1c0] sm:$0xff]
      %v364 = vld [vmem:[%s300 + $0x1c8] sm:$0xff]
      %v365 = vld [vmem:[%s300 + $0x1d0] sm:$0xff]
      %v366 = vld [vmem:[%s300 + $0x1d8] sm:$0xff]
      %v367 = vld [vmem:[%s300 + $0x1e0] sm:$0xff]
      %v368 = vld [vmem:[%s300 + $0x1e8] sm:$0xff]
      %v369 = vld [vmem:[%s300 + $0x1f0] sm:$0xff]
      %v370 = vld [vmem:[%s300 + $0x1f8] sm:$0xff]
      %v371 = vadd.f32 %v307, %v308
      %v372 = vadd.f32 %v371, %v309
      %v373 = vadd.f32 %v372, %v310
      %v374 = vadd.f32 %v373, %v311
      %v375 = vadd.f32 %v374, %v312
      %v376 = vadd.f32 %v375, %v313
      %v377 = vadd.f32 %v376, %v314
      %v378 = vadd.f32 %v377, %v315
      %v379 = vadd.f32 %v378, %v316
      %v380 = vadd.f32 %v379, %v317
      %v381 = vadd.f32 %v380, %v318
      %v382 = vadd.f32 %v381, %v319
      %v383 = vadd.f32 %v382, %v320
      %v384 = vadd.f32 %v383, %v321
      %v385 = vadd.f32 %v384, %v322
      %v386 = vadd.f32 %v385, %v323
      %v387 = vadd.f32 %v386, %v324
      %v388 = vadd.f32 %v387, %v325
      %v389 = vadd.f32 %v388, %v326
      %v390 = vadd.f32 %v389, %v327
      %v391 = vadd.f32 %v390, %v328
      %v392 = vadd.f32 %v391, %v329
      %v393 = vadd.f32 %v392, %v330
      %v394 = vadd.f32 %v393, %v331
      %v395 = vadd.f32 %v394, %v332
      %v396 = vadd.f32 %v395, %v333
      %v397 = vadd.f32 %v396, %v334
      %v398 = vadd.f32 %v397, %v335
      %v399 = vadd.f32 %v398, %v336
      %v400 = vadd.f32 %v399, %v337
      %v401 = vadd.f32 %v400, %v338
      %v402 = vadd.f32 %v401, %v339
      %v403 = vadd.f32 %v402, %v340
      %v404 = vadd.f32 %v403, %v341
      %v405 = vadd.f32 %v404, %v342
      %v406 = vadd.f32 %v405, %v343
      %v407 = vadd.f32 %v406, %v344
      %v408 = vadd.f32 %v407, %v345
      %v409 = vadd.f32 %v408, %v346
      %v410 = vadd.f32 %v409, %v347
      %v411 = vadd.f32 %v410, %v348
      %v412 = vadd.f32 %v411, %v349
      %v413 = vadd.f32 %v412, %v350
      %v414 = vadd.f32 %v413, %v351
      %v415 = vadd.f32 %v414, %v352
      %v416 = vadd.f32 %v415, %v353
      %v417 = vadd.f32 %v416, %v354
      %v418 = vadd.f32 %v417, %v355
      %v419 = vadd.f32 %v418, %v356
      %v420 = vadd.f32 %v419, %v357
      %v421 = vadd.f32 %v420, %v358
      %v422 = vadd.f32 %v421, %v359
      %v423 = vadd.f32 %v422, %v360
      %v424 = vadd.f32 %v423, %v361
      %v425 = vadd.f32 %v424, %v362
      %v426 = vadd.f32 %v425, %v363
      %v427 = vadd.f32 %v426, %v364
      %v428 = vadd.f32 %v427, %v365
      %v429 = vadd.f32 %v428, %v366
      %v430 = vadd.f32 %v429, %v367
      %v431 = vadd.f32 %v430, %v368
      %v432 = vadd.f32 %v431, %v369
      %v433 = vadd.f32 %v432, %v370
      %v434 = vrot.slane %v433, 4
      %v435 = vadd.f32 %v433, %v434
      %v436 = vrot.slane %v435, 2
      %v437 = vadd.f32 %v435, %v436
      %v438 = vrot.slane %v437, 1
      %v439 = vadd.f32 %v437, %v438
      %v440 = vld [vmem:[%s3] sm:$0xff]
      %v441 = vld [vmem:[%s3 + $0x8] sm:$0xff]
      %v442 = vld [vmem:[%s3 + $0x10] sm:$0xff]
      %v443 = vld [vmem:[%s3 + $0x18] sm:$0xff]
      %v444 = vld [vmem:[%s3 + $0x20] sm:$0xff]
      %v445 = vld [vmem:[%s3 + $0x28] sm:$0xff]
      %v446 = vld [vmem:[%s3 + $0x30] sm:$0xff]
      %v447 = vld [vmem:[%s3 + $0x38] sm:$0xff]
      %v448 = vld [vmem:[%s3 + $0x40] sm:$0xff]
      %v449 = vld [vmem:[%s3 + $0x48] sm:$0xff]
      %v450 = vld [vmem:[%s3 + $0x50] sm:$0xff]
      %v451 = vld [vmem:[%s3 + $0x58] sm:$0xff]
      %v452 = vld [vmem:[%s3 + $0x60] sm:$0xff]
      %v453 = vld [vmem:[%s3 + $0x68] sm:$0xff]
      %v454 = vld [vmem:[%s3 + $0x70] sm:$0xff]
      %v455 = vld [vmem:[%s3 + $0x78] sm:$0xff]
      %456 = vmatprep.subr.mxu0 0.0
      %457 = vmatpush1.msra.mxu0 %v455
      %458 = vmatprep.subr.mxu0 0.0
      %459 = vmatpush1.msra.mxu0 %v454
      %460 = vmatprep.subr.mxu0 0.0
      %461 = vmatpush1.msra.mxu0 %v453
      %462 = vmatprep.subr.mxu0 0.0
      %463 = vmatpush1.msra.mxu0 %v452
      %464 = vmatprep.subr.mxu0 0.0
      %465 = vmatpush1.msra.mxu0 %v451
      %466 = vmatprep.subr.mxu0 0.0
      %467 = vmatpush1.msra.mxu0 %v450
      %468 = vmatprep.subr.mxu0 0.0
      %469 = vmatpush1.msra.mxu0 %v449
      %470 = vmatprep.subr.mxu0 0.0
      %471 = vmatpush1.msra.mxu0 %v448
      %472 = vmatprep.subr.mxu0 0.0
      %473 = vmatpush1.msra.mxu0 %v447
      %474 = vmatprep.subr.mxu0 0.0
      %475 = vmatpush1.msra.mxu0 %v446
      %476 = vmatprep.subr.mxu0 0.0
      %477 = vmatpush1.msra.mxu0 %v445
      %478 = vmatprep.subr.mxu0 0.0
      %479 = vmatpush1.msra.mxu0 %v444
      %480 = vmatprep.subr.mxu0 0.0
      %481 = vmatpush1.msra.mxu0 %v443
      %482 = vmatprep.subr.mxu0 0.0
      %483 = vmatpush1.msra.mxu0 %v442
      %484 = vmatprep.subr.mxu0 0.0
      %485 = vmatpush1.msra.mxu0 %v441
      %486 = vmatprep.subr.mxu0 0.0
      %487 = vmatpush1.msra.mxu0 %v440
      %488 = vmatprep.subr.mxu0 0.0
      %489 = vmatpush2.msra.mxu0 0.0
      %490 = vmatprep.subr.mxu0 0.0
      %491 = vmatpush2.msra.mxu0 0.0
      %492 = vmatprep.subr.mxu0 0.0
      %493 = vmatpush2.msra.mxu0 0.0
      %494 = vmatprep.subr.mxu0 0.0
      %495 = vmatpush2.msra.mxu0 0.0
      %496 = vmatprep.subr.mxu0 0.0
      %497 = vmatpush2.msra.mxu0 0.0
      %498 = vmatprep.subr.mxu0 0.0
      %499 = vmatpush2.msra.mxu0 0.0
      %500 = vmatprep.subr.mxu0 0.0
      %501 = vmatpush2.msra.mxu0 0.0
      %502 = vmatprep.subr.mxu0 0.0
      %503 = vmatpush2.msra.mxu0 0.0
      %504 = vmatprep.subr.mxu0 0.0
      %505 = vmatpush2.msra.mxu0 0.0
      %506 = vmatprep.subr.mxu0 0.0
      %507 = vmatpush2.msra.mxu0 0.0
      %508 = vmatprep.subr.mxu0 0.0
      %509 = vmatpush2.msra.mxu0 0.0
      %510 = vmatprep.subr.mxu0 0.0
      %511 = vmatpush2.msra.mxu0 0.0
      %512 = vmatprep.subr.mxu0 0.0
      %513 = vmatpush2.msra.mxu0 0.0
      %514 = vmatprep.subr.mxu0 0.0
      %515 = vmatpush2.msra.mxu0 0.0
      %516 = vmatprep.subr.mxu0 0.0
      %517 = vmatpush2.msra.mxu0 0.0
      %518 = vmatprep.subr.mxu0 0.0
      %519 = vmatpush2.msra.mxu0 0.0
      %520 = vmatprep.mubr.f32.mxu0 0.0
      %521 = vmatmul.mubr.f32.gmra.mxu0 %v439
      %v522 = vpop.f32.mrf.mxu0
      %v523 = vadd.f32 0.0, %v522
      %v524 = vpop.f32.mrf.mxu0
      %525 = vdwg.mxu0
      %v526 = vmul.f32 %v523, 0.00048828125
      %v527 = vld [vmem:[%s4] sm:$0xff]
      %v528 = vld [vmem:[%s4 + $0x8] sm:$0xff]
      %v529 = vld [vmem:[%s4 + $0x10] sm:$0xff]
      %v530 = vld [vmem:[%s4 + $0x18] sm:$0xff]
      %vm531 = vcmask 261120
      %v533 = vsel %vm531, %v526, 0
      %535 = vmatprep.subr.mxu0 0.0
      %536 = vmatpush1.msra.mxu0 0.0
      %537 = vmatprep.subr.mxu0 0.0
      %538 = vmatpush1.msra.mxu0 0.0
      %539 = vmatprep.subr.mxu0 0.0
      %540 = vmatpush1.msra.mxu0 0.0
      %541 = vmatprep.subr.mxu0 0.0
      %542 = vmatpush1.msra.mxu0 0.0
      %543 = vmatprep.subr.mxu0 0.0
      %544 = vmatpush1.msra.mxu0 0.0
      %545 = vmatprep.subr.mxu0 0.0
      %546 = vmatpush1.msra.mxu0 0.0
      %547 = vmatprep.subr.mxu0 0.0
      %548 = vmatpush1.msra.mxu0 0.0
      %549 = vmatprep.subr.mxu0 0.0
      %550 = vmatpush1.msra.mxu0 0.0
      %551 = vmatprep.subr.mxu0 0.0
      %552 = vmatpush1.msra.mxu0 0.0
      %553 = vmatprep.subr.mxu0 0.0
      %554 = vmatpush1.msra.mxu0 0.0
      %555 = vmatprep.subr.mxu0 0.0
      %556 = vmatpush1.msra.mxu0 0.0
      %557 = vmatprep.subr.mxu0 0.0
      %558 = vmatpush1.msra.mxu0 0.0
      %559 = vmatprep.subr.mxu0 0.0
      %560 = vmatpush1.msra.mxu0 %v530
      %561 = vmatprep.subr.mxu0 0.0
      %562 = vmatpush1.msra.mxu0 %v529
      %563 = vmatprep.subr.mxu0 0.0
      %564 = vmatpush1.msra.mxu0 %v528
      %565 = vmatprep.subr.mxu0 0.0
      %566 = vmatpush1.msra.mxu0 %v527
      %567 = vmatprep.subr.mxu0 0.0
      %568 = vmatpush2.msra.mxu0 0.0
      %569 = vmatprep.subr.mxu0 0.0
      %570 = vmatpush2.msra.mxu0 0.0
      %571 = vmatprep.subr.mxu0 0.0
      %572 = vmatpush2.msra.mxu0 0.0
      %573 = vmatprep.subr.mxu0 0.0
      %574 = vmatpush2.msra.mxu0 0.0
      %575 = vmatprep.subr.mxu0 0.0
      %576 = vmatpush2.msra.mxu0 0.0
      %577 = vmatprep.subr.mxu0 0.0
      %578 = vmatpush2.msra.mxu0 0.0
      %579 = vmatprep.subr.mxu0 0.0
      %580 = vmatpush2.msra.mxu0 0.0
      %581 = vmatprep.subr.mxu0 0.0
      %582 = vmatpush2.msra.mxu0 0.0
      %583 = vmatprep.subr.mxu0 0.0
      %584 = vmatpush2.msra.mxu0 0.0
      %585 = vmatprep.subr.mxu0 0.0
      %586 = vmatpush2.msra.mxu0 0.0
      %587 = vmatprep.subr.mxu0 0.0
      %588 = vmatpush2.msra.mxu0 0.0
      %589 = vmatprep.subr.mxu0 0.0
      %590 = vmatpush2.msra.mxu0 0.0
      %591 = vmatprep.subr.mxu0 0.0
      %592 = vmatpush2.msra.mxu0 0.0
      %593 = vmatprep.subr.mxu0 0.0
      %594 = vmatpush2.msra.mxu0 0.0
      %595 = vmatprep.subr.mxu0 0.0
      %596 = vmatpush2.msra.mxu0 0.0
      %597 = vmatprep.subr.mxu0 0.0
      %598 = vmatpush2.msra.mxu0 0.0
      %599 = vmatprep.mubr.f32.mxu0 0.0
      %600 = vmatmul.mubr.f32.gmra.mxu0 %v533
      %v601 = vpop.f32.mrf.mxu0
      %v602 = vadd.f32 0.0, %v601
      %v603 = vpop.f32.mrf.mxu0
      %604 = vdwg.mxu0
      %v605 = vlaneseq
      %v606 = vshrl.u32 %v605, 7
      %v607 = vsub.s32 0, %v606
      %v608 = vrot.slane %v602, %v607
      %v609 = vsub.f32 %v307, %v608
      %v610 = vsub.f32 %v308, %v608
      %v611 = vsub.f32 %v309, %v608
      %v612 = vsub.f32 %v310, %v608
      %v613 = vsub.f32 %v311, %v608
      %v614 = vsub.f32 %v312, %v608
      %v615 = vsub.f32 %v313, %v608
      %v616 = vsub.f32 %v314, %v608
      %v617 = vsub.f32 %v315, %v608
      %v618 = vsub.f32 %v316, %v608
      %v619 = vsub.f32 %v317, %v608
      %v620 = vsub.f32 %v318, %v608
      %v621 = vsub.f32 %v319, %v608
      %v622 = vsub.f32 %v320, %v608
      %v623 = vsub.f32 %v321, %v608
      %v624 = vsub.f32 %v322, %v608
      %v625 = vsub.f32 %v323, %v608
      %v626 = vsub.f32 %v324, %v608
      %v627 = vsub.f32 %v325, %v608
      %v628 = vsub.f32 %v326, %v608
      %v629 = vsub.f32 %v327, %v608
      %v630 = vsub.f32 %v328, %v608
      %v631 = vsub.f32 %v329, %v608
      %v632 = vsub.f32 %v330, %v608
      %v633 = vsub.f32 %v331, %v608
      %v634 = vsub.f32 %v332, %v608
      %v635 = vsub.f32 %v333, %v608
      %v636 = vsub.f32 %v334, %v608
      %v637 = vsub.f32 %v335, %v608
      %v638 = vsub.f32 %v336, %v608
      %v639 = vsub.f32 %v337, %v608
      %v640 = vsub.f32 %v338, %v608
      %v641 = vsub.f32 %v339, %v608
      %v642 = vsub.f32 %v340, %v608
      %v643 = vsub.f32 %v341, %v608
      %v644 = vsub.f32 %v342, %v608
      %v645 = vsub.f32 %v343, %v608
      %v646 = vsub.f32 %v344, %v608
      %v647 = vsub.f32 %v345, %v608
      %v648 = vsub.f32 %v346, %v608
      %v649 = vsub.f32 %v347, %v608
      %v650 = vsub.f32 %v348, %v608
      %v651 = vsub.f32 %v349, %v608
      %v652 = vsub.f32 %v350, %v608
      %v653 = vsub.f32 %v351, %v608
      %v654 = vsub.f32 %v352, %v608
      %v655 = vsub.f32 %v353, %v608
      %v656 = vsub.f32 %v354, %v608
      %v657 = vsub.f32 %v355, %v608
      %v658 = vsub.f32 %v356, %v608
      %v659 = vsub.f32 %v357, %v608
      %v660 = vsub.f32 %v358, %v608
      %v661 = vsub.f32 %v359, %v608
      %v662 = vsub.f32 %v360, %v608
      %v663 = vsub.f32 %v361, %v608
      %v664 = vsub.f32 %v362, %v608
      %v665 = vsub.f32 %v363, %v608
      %v666 = vsub.f32 %v364, %v608
      %v667 = vsub.f32 %v365, %v608
      %v668 = vsub.f32 %v366, %v608
      %v669 = vsub.f32 %v367, %v608
      %v670 = vsub.f32 %v368, %v608
      %v671 = vsub.f32 %v369, %v608
      %v672 = vsub.f32 %v370, %v608
      %v673 = vmul.f32 %v609, %v609
      %v674 = vmul.f32 %v610, %v610
      %v675 = vmul.f32 %v611, %v611
      %v676 = vmul.f32 %v612, %v612
      %v677 = vmul.f32 %v613, %v613
      %v678 = vmul.f32 %v614, %v614
      %v679 = vmul.f32 %v615, %v615
      %v680 = vmul.f32 %v616, %v616
      %v681 = vmul.f32 %v617, %v617
      %v682 = vmul.f32 %v618, %v618
      %v683 = vmul.f32 %v619, %v619
      %v684 = vmul.f32 %v620, %v620
      %v685 = vmul.f32 %v621, %v621
      %v686 = vmul.f32 %v622, %v622
      %v687 = vmul.f32 %v623, %v623
      %v688 = vmul.f32 %v624, %v624
      %v689 = vmul.f32 %v625, %v625
      %v690 = vmul.f32 %v626, %v626
      %v691 = vmul.f32 %v627, %v627
      %v692 = vmul.f32 %v628, %v628
      %v693 = vmul.f32 %v629, %v629
      %v694 = vmul.f32 %v630, %v630
      %v695 = vmul.f32 %v631, %v631
      %v696 = vmul.f32 %v632, %v632
      %v697 = vmul.f32 %v633, %v633
      %v698 = vmul.f32 %v634, %v634
      %v699 = vmul.f32 %v635, %v635
      %v700 = vmul.f32 %v636, %v636
      %v701 = vmul.f32 %v637, %v637
      %v702 = vmul.f32 %v638, %v638
      %v703 = vmul.f32 %v639, %v639
      %v704 = vmul.f32 %v640, %v640
      %v705 = vmul.f32 %v641, %v641
      %v706 = vmul.f32 %v642, %v642
      %v707 = vmul.f32 %v643, %v643
      %v708 = vmul.f32 %v644, %v644
      %v709 = vmul.f32 %v645, %v645
      %v710 = vmul.f32 %v646, %v646
      %v711 = vmul.f32 %v647, %v647
      %v712 = vmul.f32 %v648, %v648
      %v713 = vmul.f32 %v649, %v649
      %v714 = vmul.f32 %v650, %v650
      %v715 = vmul.f32 %v651, %v651
      %v716 = vmul.f32 %v652, %v652
      %v717 = vmul.f32 %v653, %v653
      %v718 = vmul.f32 %v654, %v654
      %v719 = vmul.f32 %v655, %v655
      %v720 = vmul.f32 %v656, %v656
      %v721 = vmul.f32 %v657, %v657
      %v722 = vmul.f32 %v658, %v658
      %v723 = vmul.f32 %v659, %v659
      %v724 = vmul.f32 %v660, %v660
      %v725 = vmul.f32 %v661, %v661
      %v726 = vmul.f32 %v662, %v662
      %v727 = vmul.f32 %v663, %v663
      %v728 = vmul.f32 %v664, %v664
      %v729 = vmul.f32 %v665, %v665
      %v730 = vmul.f32 %v666, %v666
      %v731 = vmul.f32 %v667, %v667
      %v732 = vmul.f32 %v668, %v668
      %v733 = vmul.f32 %v669, %v669
      %v734 = vmul.f32 %v670, %v670
      %v735 = vmul.f32 %v671, %v671
      %v736 = vmul.f32 %v672, %v672
      %v737 = vadd.f32 %v673, %v674
      %v738 = vadd.f32 %v737, %v675
      %v739 = vadd.f32 %v738, %v676
      %v740 = vadd.f32 %v739, %v677
      %v741 = vadd.f32 %v740, %v678
      %v742 = vadd.f32 %v741, %v679
      %v743 = vadd.f32 %v742, %v680
      %v744 = vadd.f32 %v743, %v681
      %v745 = vadd.f32 %v744, %v682
      %v746 = vadd.f32 %v745, %v683
      %v747 = vadd.f32 %v746, %v684
      %v748 = vadd.f32 %v747, %v685
      %v749 = vadd.f32 %v748, %v686
      %v750 = vadd.f32 %v749, %v687
      %v751 = vadd.f32 %v750, %v688
      %v752 = vadd.f32 %v751, %v689
      %v753 = vadd.f32 %v752, %v690
      %v754 = vadd.f32 %v753, %v691
      %v755 = vadd.f32 %v754, %v692
      %v756 = vadd.f32 %v755, %v693
      %v757 = vadd.f32 %v756, %v694
      %v758 = vadd.f32 %v757, %v695
      %v759 = vadd.f32 %v758, %v696
      %v760 = vadd.f32 %v759, %v697
      %v761 = vadd.f32 %v760, %v698
      %v762 = vadd.f32 %v761, %v699
      %v763 = vadd.f32 %v762, %v700
      %v764 = vadd.f32 %v763, %v701
      %v765 = vadd.f32 %v764, %v702
      %v766 = vadd.f32 %v765, %v703
      %v767 = vadd.f32 %v766, %v704
      %v768 = vadd.f32 %v767, %v705
      %v769 = vadd.f32 %v768, %v706
      %v770 = vadd.f32 %v769, %v707
      %v771 = vadd.f32 %v770, %v708
      %v772 = vadd.f32 %v771, %v709
      %v773 = vadd.f32 %v772, %v710
      %v774 = vadd.f32 %v773, %v711
      %v775 = vadd.f32 %v774, %v712
      %v776 = vadd.f32 %v775, %v713
      %v777 = vadd.f32 %v776, %v714
      %v778 = vadd.f32 %v777, %v715
      %v779 = vadd.f32 %v778, %v716
      %v780 = vadd.f32 %v779, %v717
      %v781 = vadd.f32 %v780, %v718
      %v782 = vadd.f32 %v781, %v719
      %v783 = vadd.f32 %v782, %v720
      %v784 = vadd.f32 %v783, %v721
      %v785 = vadd.f32 %v784, %v722
      %v786 = vadd.f32 %v785, %v723
      %v787 = vadd.f32 %v786, %v724
      %v788 = vadd.f32 %v787, %v725
      %v789 = vadd.f32 %v788, %v726
      %v790 = vadd.f32 %v789, %v727
      %v791 = vadd.f32 %v790, %v728
      %v792 = vadd.f32 %v791, %v729
      %v793 = vadd.f32 %v792, %v730
      %v794 = vadd.f32 %v793, %v731
      %v795 = vadd.f32 %v794, %v732
      %v796 = vadd.f32 %v795, %v733
      %v797 = vadd.f32 %v796, %v734
      %v798 = vadd.f32 %v797, %v735
      %v799 = vadd.f32 %v798, %v736
      %v800 = vrot.slane %v799, 4
      %v801 = vadd.f32 %v799, %v800
      %v802 = vrot.slane %v801, 2
      %v803 = vadd.f32 %v801, %v802
      %v804 = vrot.slane %v803, 1
      %v805 = vadd.f32 %v803, %v804
      %806 = vmatprep.subr.mxu0 0.0
      %807 = vmatpush1.msra.mxu0 %v455
      %808 = vmatprep.subr.mxu0 0.0
      %809 = vmatpush1.msra.mxu0 %v454
      %810 = vmatprep.subr.mxu0 0.0
      %811 = vmatpush1.msra.mxu0 %v453
      %812 = vmatprep.subr.mxu0 0.0
      %813 = vmatpush1.msra.mxu0 %v452
      %814 = vmatprep.subr.mxu0 0.0
      %815 = vmatpush1.msra.mxu0 %v451
      %816 = vmatprep.subr.mxu0 0.0
      %817 = vmatpush1.msra.mxu0 %v450
      %818 = vmatprep.subr.mxu0 0.0
      %819 = vmatpush1.msra.mxu0 %v449
      %820 = vmatprep.subr.mxu0 0.0
      %821 = vmatpush1.msra.mxu0 %v448
      %822 = vmatprep.subr.mxu0 0.0
      %823 = vmatpush1.msra.mxu0 %v447
      %824 = vmatprep.subr.mxu0 0.0
      %825 = vmatpush1.msra.mxu0 %v446
      %826 = vmatprep.subr.mxu0 0.0
      %827 = vmatpush1.msra.mxu0 %v445
      %828 = vmatprep.subr.mxu0 0.0
      %829 = vmatpush1.msra.mxu0 %v444
      %830 = vmatprep.subr.mxu0 0.0
      %831 = vmatpush1.msra.mxu0 %v443
      %832 = vmatprep.subr.mxu0 0.0
      %833 = vmatpush1.msra.mxu0 %v442
      %834 = vmatprep.subr.mxu0 0.0
      %835 = vmatpush1.msra.mxu0 %v441
      %836 = vmatprep.subr.mxu0 0.0
      %837 = vmatpush1.msra.mxu0 %v440
      %838 = vmatprep.subr.mxu0 0.0
      %839 = vmatpush2.msra.mxu0 0.0
      %840 = vmatprep.subr.mxu0 0.0
      %841 = vmatpush2.msra.mxu0 0.0
      %842 = vmatprep.subr.mxu0 0.0
      %843 = vmatpush2.msra.mxu0 0.0
      %844 = vmatprep.subr.mxu0 0.0
      %845 = vmatpush2.msra.mxu0 0.0
      %846 = vmatprep.subr.mxu0 0.0
      %847 = vmatpush2.msra.mxu0 0.0
      %848 = vmatprep.subr.mxu0 0.0
      %849 = vmatpush2.msra.mxu0 0.0
      %850 = vmatprep.subr.mxu0 0.0
      %851 = vmatpush2.msra.mxu0 0.0
      %852 = vmatprep.subr.mxu0 0.0
      %853 = vmatpush2.msra.mxu0 0.0
      %854 = vmatprep.subr.mxu0 0.0
      %855 = vmatpush2.msra.mxu0 0.0
      %856 = vmatprep.subr.mxu0 0.0
      %857 = vmatpush2.msra.mxu0 0.0
      %858 = vmatprep.subr.mxu0 0.0
      %859 = vmatpush2.msra.mxu0 0.0
      %860 = vmatprep.subr.mxu0 0.0
      %861 = vmatpush2.msra.mxu0 0.0
      %862 = vmatprep.subr.mxu0 0.0
      %863 = vmatpush2.msra.mxu0 0.0
      %864 = vmatprep.subr.mxu0 0.0
      %865 = vmatpush2.msra.mxu0 0.0
      %866 = vmatprep.subr.mxu0 0.0
      %867 = vmatpush2.msra.mxu0 0.0
      %868 = vmatprep.subr.mxu0 0.0
      %869 = vmatpush2.msra.mxu0 0.0
      %870 = vmatprep.mubr.f32.mxu0 0.0
      %871 = vmatmul.mubr.f32.gmra.mxu0 %v805
      %v872 = vpop.f32.mrf.mxu0
      %v873 = vadd.f32 0.0, %v872
      %v874 = vpop.f32.mrf.mxu0
      %875 = vdwg.mxu0
      %v876 = vmul.f32 %v873, 0.00048828125
      %v877 = vadd.f32 %v876, 1e-05
      %v878 = vrsqrt.pop %v877
      %v880 = vsel %vm531, %v878, 0
      %882 = vmatprep.subr.mxu0 0.0
      %883 = vmatpush1.msra.mxu0 0.0
      %884 = vmatprep.subr.mxu0 0.0
      %885 = vmatpush1.msra.mxu0 0.0
      %886 = vmatprep.subr.mxu0 0.0
      %887 = vmatpush1.msra.mxu0 0.0
      %888 = vmatprep.subr.mxu0 0.0
      %889 = vmatpush1.msra.mxu0 0.0
      %890 = vmatprep.subr.mxu0 0.0
      %891 = vmatpush1.msra.mxu0 0.0
      %892 = vmatprep.subr.mxu0 0.0
      %893 = vmatpush1.msra.mxu0 0.0
      %894 = vmatprep.subr.mxu0 0.0
      %895 = vmatpush1.msra.mxu0 0.0
      %896 = vmatprep.subr.mxu0 0.0
      %897 = vmatpush1.msra.mxu0 0.0
      %898 = vmatprep.subr.mxu0 0.0
      %899 = vmatpush1.msra.mxu0 0.0
      %900 = vmatprep.subr.mxu0 0.0
      %901 = vmatpush1.msra.mxu0 0.0
      %902 = vmatprep.subr.mxu0 0.0
      %903 = vmatpush1.msra.mxu0 0.0
      %904 = vmatprep.subr.mxu0 0.0
      %905 = vmatpush1.msra.mxu0 0.0
      %906 = vmatprep.subr.mxu0 0.0
      %907 = vmatpush1.msra.mxu0 %v530
      %908 = vmatprep.subr.mxu0 0.0
      %909 = vmatpush1.msra.mxu0 %v529
      %910 = vmatprep.subr.mxu0 0.0
      %911 = vmatpush1.msra.mxu0 %v528
      %912 = vmatprep.subr.mxu0 0.0
      %913 = vmatpush1.msra.mxu0 %v527
      %914 = vmatprep.subr.mxu0 0.0
      %915 = vmatpush2.msra.mxu0 0.0
      %916 = vmatprep.subr.mxu0 0.0
      %917 = vmatpush2.msra.mxu0 0.0
      %918 = vmatprep.subr.mxu0 0.0
      %919 = vmatpush2.msra.mxu0 0.0
      %920 = vmatprep.subr.mxu0 0.0
      %921 = vmatpush2.msra.mxu0 0.0
      %922 = vmatprep.subr.mxu0 0.0
      %923 = vmatpush2.msra.mxu0 0.0
      %924 = vmatprep.subr.mxu0 0.0
      %925 = vmatpush2.msra.mxu0 0.0
      %926 = vmatprep.subr.mxu0 0.0
      %927 = vmatpush2.msra.mxu0 0.0
      %928 = vmatprep.subr.mxu0 0.0
      %929 = vmatpush2.msra.mxu0 0.0
      %930 = vmatprep.subr.mxu0 0.0
      %931 = vmatpush2.msra.mxu0 0.0
      %932 = vmatprep.subr.mxu0 0.0
      %933 = vmatpush2.msra.mxu0 0.0
      %934 = vmatprep.subr.mxu0 0.0
      %935 = vmatpush2.msra.mxu0 0.0
      %936 = vmatprep.subr.mxu0 0.0
      %937 = vmatpush2.msra.mxu0 0.0
      %938 = vmatprep.subr.mxu0 0.0
      %939 = vmatpush2.msra.mxu0 0.0
      %940 = vmatprep.subr.mxu0 0.0
      %941 = vmatpush2.msra.mxu0 0.0
      %942 = vmatprep.subr.mxu0 0.0
      %943 = vmatpush2.msra.mxu0 0.0
      %944 = vmatprep.subr.mxu0 0.0
      %945 = vmatpush2.msra.mxu0 0.0
      %946 = vmatprep.mubr.f32.mxu0 0.0
      %947 = vmatmul.mubr.f32.gmra.mxu0 %v880
      %v948 = vpop.f32.mrf.mxu0
      %v949 = vadd.f32 0.0, %v948
      %v950 = vpop.f32.mrf.mxu0
      %951 = vdwg.mxu0
      %v952 = vlaneseq
      %v953 = vshrl.u32 %v952, 7
      %v954 = vsub.s32 0, %v953
      %v955 = vrot.slane %v949, %v954
      %v956 = vmul.f32 %v609, %v955
      %v957 = vmul.f32 %v610, %v955
      %v958 = vmul.f32 %v611, %v955
      %v959 = vmul.f32 %v612, %v955
      %v960 = vmul.f32 %v613, %v955
      %v961 = vmul.f32 %v614, %v955
      %v962 = vmul.f32 %v615, %v955
      %v963 = vmul.f32 %v616, %v955
      %v964 = vmul.f32 %v617, %v955
      %v965 = vmul.f32 %v618, %v955
      %v966 = vmul.f32 %v619, %v955
      %v967 = vmul.f32 %v620, %v955
      %v968 = vmul.f32 %v621, %v955
      %v969 = vmul.f32 %v622, %v955
      %v970 = vmul.f32 %v623, %v955
      %v971 = vmul.f32 %v624, %v955
      %v972 = vmul.f32 %v625, %v955
      %v973 = vmul.f32 %v626, %v955
      %v974 = vmul.f32 %v627, %v955
      %v975 = vmul.f32 %v628, %v955
      %v976 = vmul.f32 %v629, %v955
      %v977 = vmul.f32 %v630, %v955
      %v978 = vmul.f32 %v631, %v955
      %v979 = vmul.f32 %v632, %v955
      %v980 = vmul.f32 %v633, %v955
      %v981 = vmul.f32 %v634, %v955
      %v982 = vmul.f32 %v635, %v955
      %v983 = vmul.f32 %v636, %v955
      %v984 = vmul.f32 %v637, %v955
      %v985 = vmul.f32 %v638, %v955
      %v986 = vmul.f32 %v639, %v955
      %v987 = vmul.f32 %v640, %v955
      %v988 = vmul.f32 %v641, %v955
      %v989 = vmul.f32 %v642, %v955
      %v990 = vmul.f32 %v643, %v955
      %v991 = vmul.f32 %v644, %v955
      %v992 = vmul.f32 %v645, %v955
      %v993 = vmul.f32 %v646, %v955
      %v994 = vmul.f32 %v647, %v955
      %v995 = vmul.f32 %v648, %v955
      %v996 = vmul.f32 %v649, %v955
      %v997 = vmul.f32 %v650, %v955
      %v998 = vmul.f32 %v651, %v955
      %v999 = vmul.f32 %v652, %v955
      %v1000 = vmul.f32 %v653, %v955
      %v1001 = vmul.f32 %v654, %v955
      %v1002 = vmul.f32 %v655, %v955
      %v1003 = vmul.f32 %v656, %v955
      %v1004 = vmul.f32 %v657, %v955
      %v1005 = vmul.f32 %v658, %v955
      %v1006 = vmul.f32 %v659, %v955
      %v1007 = vmul.f32 %v660, %v955
      %v1008 = vmul.f32 %v661, %v955
      %v1009 = vmul.f32 %v662, %v955
      %v1010 = vmul.f32 %v663, %v955
      %v1011 = vmul.f32 %v664, %v955
      %v1012 = vmul.f32 %v665, %v955
      %v1013 = vmul.f32 %v666, %v955
      %v1014 = vmul.f32 %v667, %v955
      %v1015 = vmul.f32 %v668, %v955
      %v1016 = vmul.f32 %v669, %v955
      %v1017 = vmul.f32 %v670, %v955
      %v1018 = vmul.f32 %v671, %v955
      %v1019 = vmul.f32 %v672, %v955
      %v1020 = vld [vmem:[%s1] sm:$0x1]
      %v1022 = vlaneseq
      %v1023 = vshrl.u32 %v1022, 7
      %v1024 = vsub.s32 0, %v1023
      %v1025 = vrot.slane %v1020, %v1024
      %v1027 = vmul.f32 %v956, %v1025
      %v1028 = vmul.f32 %v957, %v1025
      %v1029 = vmul.f32 %v958, %v1025
      %v1030 = vmul.f32 %v959, %v1025
      %v1031 = vmul.f32 %v960, %v1025
      %v1032 = vmul.f32 %v961, %v1025
      %v1033 = vmul.f32 %v962, %v1025
      %v1034 = vmul.f32 %v963, %v1025
      %v1035 = vmul.f32 %v964, %v1025
      %v1036 = vmul.f32 %v965, %v1025
      %v1037 = vmul.f32 %v966, %v1025
      %v1038 = vmul.f32 %v967, %v1025
      %v1039 = vmul.f32 %v968, %v1025
      %v1040 = vmul.f32 %v969, %v1025
      %v1041 = vmul.f32 %v970, %v1025
      %v1042 = vmul.f32 %v971, %v1025
      %v1043 = vmul.f32 %v972, %v1025
      %v1044 = vmul.f32 %v973, %v1025
      %v1045 = vmul.f32 %v974, %v1025
      %v1046 = vmul.f32 %v975, %v1025
      %v1047 = vmul.f32 %v976, %v1025
      %v1048 = vmul.f32 %v977, %v1025
      %v1049 = vmul.f32 %v978, %v1025
      %v1050 = vmul.f32 %v979, %v1025
      %v1051 = vmul.f32 %v980, %v1025
      %v1052 = vmul.f32 %v981, %v1025
      %v1053 = vmul.f32 %v982, %v1025
      %v1054 = vmul.f32 %v983, %v1025
      %v1055 = vmul.f32 %v984, %v1025
      %v1056 = vmul.f32 %v985, %v1025
      %v1057 = vmul.f32 %v986, %v1025
      %v1058 = vmul.f32 %v987, %v1025
      %v1059 = vmul.f32 %v988, %v1025
      %v1060 = vmul.f32 %v989, %v1025
      %v1061 = vmul.f32 %v990, %v1025
      %v1062 = vmul.f32 %v991, %v1025
      %v1063 = vmul.f32 %v992, %v1025
      %v1064 = vmul.f32 %v993, %v1025
      %v1065 = vmul.f32 %v994, %v1025
      %v1066 = vmul.f32 %v995, %v1025
      %v1067 = vmul.f32 %v996, %v1025
      %v1068 = vmul.f32 %v997, %v1025
      %v1069 = vmul.f32 %v998, %v1025
      %v1070 = vmul.f32 %v999, %v1025
      %v1071 = vmul.f32 %v1000, %v1025
      %v1072 = vmul.f32 %v1001, %v1025
      %v1073 = vmul.f32 %v1002, %v1025
      %v1074 = vmul.f32 %v1003, %v1025
      %v1075 = vmul.f32 %v1004, %v1025
      %v1076 = vmul.f32 %v1005, %v1025
      %v1077 = vmul.f32 %v1006, %v1025
      %v1078 = vmul.f32 %v1007, %v1025
      %v1079 = vmul.f32 %v1008, %v1025
      %v1080 = vmul.f32 %v1009, %v1025
      %v1081 = vmul.f32 %v1010, %v1025
      %v1082 = vmul.f32 %v1011, %v1025
      %v1083 = vmul.f32 %v1012, %v1025
      %v1084 = vmul.f32 %v1013, %v1025
      %v1085 = vmul.f32 %v1014, %v1025
      %v1086 = vmul.f32 %v1015, %v1025
      %v1087 = vmul.f32 %v1016, %v1025
      %v1088 = vmul.f32 %v1017, %v1025
      %v1089 = vmul.f32 %v1018, %v1025
      %v1090 = vmul.f32 %v1019, %v1025
      %v1091 = vld [vmem:[%s2] sm:$0x1]
      %v1093 = vlaneseq
      %v1094 = vshrl.u32 %v1093, 7
      %v1095 = vsub.s32 0, %v1094
      %v1096 = vrot.slane %v1091, %v1095
      %v1098 = vadd.f32 %v1027, %v1096
      %v1099 = vadd.f32 %v1028, %v1096
      %v1100 = vadd.f32 %v1029, %v1096
      %v1101 = vadd.f32 %v1030, %v1096
      %v1102 = vadd.f32 %v1031, %v1096
      %v1103 = vadd.f32 %v1032, %v1096
      %v1104 = vadd.f32 %v1033, %v1096
      %v1105 = vadd.f32 %v1034, %v1096
      %v1106 = vadd.f32 %v1035, %v1096
      %v1107 = vadd.f32 %v1036, %v1096
      %v1108 = vadd.f32 %v1037, %v1096
      %v1109 = vadd.f32 %v1038, %v1096
      %v1110 = vadd.f32 %v1039, %v1096
      %v1111 = vadd.f32 %v1040, %v1096
      %v1112 = vadd.f32 %v1041, %v1096
      %v1113 = vadd.f32 %v1042, %v1096
      %v1114 = vadd.f32 %v1043, %v1096
      %v1115 = vadd.f32 %v1044, %v1096
      %v1116 = vadd.f32 %v1045, %v1096
      %v1117 = vadd.f32 %v1046, %v1096
      %v1118 = vadd.f32 %v1047, %v1096
      %v1119 = vadd.f32 %v1048, %v1096
      %v1120 = vadd.f32 %v1049, %v1096
      %v1121 = vadd.f32 %v1050, %v1096
      %v1122 = vadd.f32 %v1051, %v1096
      %v1123 = vadd.f32 %v1052, %v1096
      %v1124 = vadd.f32 %v1053, %v1096
      %v1125 = vadd.f32 %v1054, %v1096
      %v1126 = vadd.f32 %v1055, %v1096
      %v1127 = vadd.f32 %v1056, %v1096
      %v1128 = vadd.f32 %v1057, %v1096
      %v1129 = vadd.f32 %v1058, %v1096
      %v1130 = vadd.f32 %v1059, %v1096
      %v1131 = vadd.f32 %v1060, %v1096
      %v1132 = vadd.f32 %v1061, %v1096
      %v1133 = vadd.f32 %v1062, %v1096
      %v1134 = vadd.f32 %v1063, %v1096
      %v1135 = vadd.f32 %v1064, %v1096
      %v1136 = vadd.f32 %v1065, %v1096
      %v1137 = vadd.f32 %v1066, %v1096
      %v1138 = vadd.f32 %v1067, %v1096
      %v1139 = vadd.f32 %v1068, %v1096
      %v1140 = vadd.f32 %v1069, %v1096
      %v1141 = vadd.f32 %v1070, %v1096
      %v1142 = vadd.f32 %v1071, %v1096
      %v1143 = vadd.f32 %v1072, %v1096
      %v1144 = vadd.f32 %v1073, %v1096
      %v1145 = vadd.f32 %v1074, %v1096
      %v1146 = vadd.f32 %v1075, %v1096
      %v1147 = vadd.f32 %v1076, %v1096
      %v1148 = vadd.f32 %v1077, %v1096
      %v1149 = vadd.f32 %v1078, %v1096
      %v1150 = vadd.f32 %v1079, %v1096
      %v1151 = vadd.f32 %v1080, %v1096
      %v1152 = vadd.f32 %v1081, %v1096
      %v1153 = vadd.f32 %v1082, %v1096
      %v1154 = vadd.f32 %v1083, %v1096
      %v1155 = vadd.f32 %v1084, %v1096
      %v1156 = vadd.f32 %v1085, %v1096
      %v1157 = vadd.f32 %v1086, %v1096
      %v1158 = vadd.f32 %v1087, %v1096
      %v1159 = vadd.f32 %v1088, %v1096
      %v1160 = vadd.f32 %v1089, %v1096
      %v1161 = vadd.f32 %v1090, %v1096
      %v1162 = vpack.c.bf16 %v1099, %v1098
      %v1163 = vpack.c.bf16 %v1101, %v1100
      %v1164 = vpack.c.bf16 %v1103, %v1102
      %v1165 = vpack.c.bf16 %v1105, %v1104
      %v1166 = vpack.c.bf16 %v1107, %v1106
      %v1167 = vpack.c.bf16 %v1109, %v1108
      %v1168 = vpack.c.bf16 %v1111, %v1110
      %v1169 = vpack.c.bf16 %v1113, %v1112
      %v1170 = vpack.c.bf16 %v1115, %v1114
      %v1171 = vpack.c.bf16 %v1117, %v1116
      %v1172 = vpack.c.bf16 %v1119, %v1118
      %v1173 = vpack.c.bf16 %v1121, %v1120
      %v1174 = vpack.c.bf16 %v1123, %v1122
      %v1175 = vpack.c.bf16 %v1125, %v1124
      %v1176 = vpack.c.bf16 %v1127, %v1126
      %v1177 = vpack.c.bf16 %v1129, %v1128
      %v1178 = vpack.c.bf16 %v1131, %v1130
      %v1179 = vpack.c.bf16 %v1133, %v1132
      %v1180 = vpack.c.bf16 %v1135, %v1134
      %v1181 = vpack.c.bf16 %v1137, %v1136
      %v1182 = vpack.c.bf16 %v1139, %v1138
      %v1183 = vpack.c.bf16 %v1141, %v1140
      %v1184 = vpack.c.bf16 %v1143, %v1142
      %v1185 = vpack.c.bf16 %v1145, %v1144
      %v1186 = vpack.c.bf16 %v1147, %v1146
      %v1187 = vpack.c.bf16 %v1149, %v1148
      %v1188 = vpack.c.bf16 %v1151, %v1150
      %v1189 = vpack.c.bf16 %v1153, %v1152
      %v1190 = vpack.c.bf16 %v1155, %v1154
      %v1191 = vpack.c.bf16 %v1157, %v1156
      %v1192 = vpack.c.bf16 %v1159, %v1158
      %v1193 = vpack.c.bf16 %v1161, %v1160
      %v1194 = vld [vmem:[%s5] sm:$0xff]
      %v1195 = vld [vmem:[%s5 + $0x8] sm:$0xf]
      %v1196 = vld [vmem:[%s5 + $0xc] sm:$0xff]
      %v1197 = vld [vmem:[%s5 + $0x14] sm:$0xf]
      %v1198 = vld [vmem:[%s5 + $0x18] sm:$0xff]
      %v1199 = vld [vmem:[%s5 + $0x20] sm:$0xf]
      %v1200 = vld [vmem:[%s5 + $0x24] sm:$0xff]
      %v1201 = vld [vmem:[%s5 + $0x2c] sm:$0xf]
      %v1202 = vld [vmem:[%s5 + $0x30] sm:$0xff]
      %v1203 = vld [vmem:[%s5 + $0x38] sm:$0xf]
      %v1204 = vld [vmem:[%s5 + $0x3c] sm:$0xff]
      %v1205 = vld [vmem:[%s5 + $0x44] sm:$0xf]
      %v1206 = vld [vmem:[%s5 + $0x48] sm:$0xff]
      %v1207 = vld [vmem:[%s5 + $0x50] sm:$0xf]
      %v1208 = vld [vmem:[%s5 + $0x54] sm:$0xff]
      %v1209 = vld [vmem:[%s5 + $0x5c] sm:$0xf]
      %v1210 = vld [vmem:[%s5 + $0x60] sm:$0xff]
      %v1211 = vld [vmem:[%s5 + $0x68] sm:$0xf]
      %v1212 = vld [vmem:[%s5 + $0x6c] sm:$0xff]
      %v1213 = vld [vmem:[%s5 + $0x74] sm:$0xf]
      %v1214 = vld [vmem:[%s5 + $0x78] sm:$0xff]
      %v1215 = vld [vmem:[%s5 + $0x80] sm:$0xf]
      %v1216 = vld [vmem:[%s5 + $0x84] sm:$0xff]
      %v1217 = vld [vmem:[%s5 + $0x8c] sm:$0xf]
      %v1218 = vld [vmem:[%s5 + $0x90] sm:$0xff]
      %v1219 = vld [vmem:[%s5 + $0x98] sm:$0xf]
      %v1220 = vld [vmem:[%s5 + $0x9c] sm:$0xff]
      %v1221 = vld [vmem:[%s5 + $0xa4] sm:$0xf]
      %v1222 = vld [vmem:[%s5 + $0xa8] sm:$0xff]
      %v1223 = vld [vmem:[%s5 + $0xb0] sm:$0xf]
      %v1224 = vld [vmem:[%s5 + $0xb4] sm:$0xff]
      %v1225 = vld [vmem:[%s5 + $0xbc] sm:$0xf]
      %v1258 = vunpack.c.l.b16 %v1194
      %v1259 = vunpack.c.h.b16 %v1194
      %v1260 = vunpack.c.l.b16 %v1195
      %v1261 = vunpack.c.l.b16 %v1196
      %v1262 = vunpack.c.h.b16 %v1196
      %v1263 = vunpack.c.l.b16 %v1197
      %v1264 = vunpack.c.l.b16 %v1198
      %v1265 = vunpack.c.h.b16 %v1198
      %v1266 = vunpack.c.l.b16 %v1199
      %v1267 = vunpack.c.l.b16 %v1200
      %v1268 = vunpack.c.h.b16 %v1200
      %v1269 = vunpack.c.l.b16 %v1201
      %v1270 = vunpack.c.l.b16 %v1202
      %v1271 = vunpack.c.h.b16 %v1202
      %v1272 = vunpack.c.l.b16 %v1203
      %v1273 = vunpack.c.l.b16 %v1204
      %v1274 = vunpack.c.h.b16 %v1204
      %v1275 = vunpack.c.l.b16 %v1205
      %v1276 = vunpack.c.l.b16 %v1206
      %v1277 = vunpack.c.h.b16 %v1206
      %v1278 = vunpack.c.l.b16 %v1207
      %v1279 = vunpack.c.l.b16 %v1208
      %v1280 = vunpack.c.h.b16 %v1208
      %v1281 = vunpack.c.l.b16 %v1209
      %v1282 = vunpack.c.l.b16 %v1210
      %v1283 = vunpack.c.h.b16 %v1210
      %v1284 = vunpack.c.l.b16 %v1211
      %v1285 = vunpack.c.l.b16 %v1212
      %v1286 = vunpack.c.h.b16 %v1212
      %v1287 = vunpack.c.l.b16 %v1213
      %v1288 = vunpack.c.l.b16 %v1214
      %v1289 = vunpack.c.h.b16 %v1214
      %v1290 = vunpack.c.l.b16 %v1215
      %v1291 = vunpack.c.l.b16 %v1216
      %v1292 = vunpack.c.h.b16 %v1216
      %v1293 = vunpack.c.l.b16 %v1217
      %v1294 = vunpack.c.l.b16 %v1218
      %v1295 = vunpack.c.h.b16 %v1218
      %v1296 = vunpack.c.l.b16 %v1219
      %v1297 = vunpack.c.l.b16 %v1220
      %v1298 = vunpack.c.h.b16 %v1220
      %v1299 = vunpack.c.l.b16 %v1221
      %v1300 = vunpack.c.l.b16 %v1222
      %v1301 = vunpack.c.h.b16 %v1222
      %v1302 = vunpack.c.l.b16 %v1223
      %v1303 = vunpack.c.l.b16 %v1224
      %v1304 = vunpack.c.h.b16 %v1224
      %v1305 = vunpack.c.l.b16 %v1225
      %v1306 = vpack.c.b16 %v1261, %v1258
      %v1307 = vpack.c.b16 %v1262, %v1259
      %v1308 = vpack.c.b16 %v1263, %v1260
      %v1309 = vpack.c.b16 %v1267, %v1264
      %v1310 = vpack.c.b16 %v1268, %v1265
      %v1311 = vpack.c.b16 %v1269, %v1266
      %v1312 = vpack.c.b16 %v1273, %v1270
      %v1313 = vpack.c.b16 %v1274, %v1271
      %v1314 = vpack.c.b16 %v1275, %v1272
      %v1315 = vpack.c.b16 %v1279, %v1276
      %v1316 = vpack.c.b16 %v1280, %v1277
      %v1317 = vpack.c.b16 %v1281, %v1278
      %v1318 = vpack.c.b16 %v1285, %v1282
      %v1319 = vpack.c.b16 %v1286, %v1283
      %v1320 = vpack.c.b16 %v1287, %v1284
      %v1321 = vpack.c.b16 %v1291, %v1288
      %v1322 = vpack.c.b16 %v1292, %v1289
      %v1323 = vpack.c.b16 %v1293, %v1290
      %v1324 = vpack.c.b16 %v1297, %v1294
      %v1325 = vpack.c.b16 %v1298, %v1295
      %v1326 = vpack.c.b16 %v1299, %v1296
      %v1327 = vpack.c.b16 %v1303, %v1300
      %v1328 = vpack.c.b16 %v1304, %v1301
      %v1329 = vpack.c.b16 %v1305, %v1302
      %1354 = vmatprep.subr.bf16.mxu0 %v1328
      %1355 = vmatpush1.bf16.msra.mxu0 %v1327
      %1356 = vmatprep.subr.bf16.mxu0 %v1325
      %1357 = vmatpush1.bf16.msra.mxu0 %v1324
      %1358 = vmatprep.subr.bf16.mxu0 %v1322
      %1359 = vmatpush1.bf16.msra.mxu0 %v1321
      %1360 = vmatprep.subr.bf16.mxu0 %v1319
      %1361 = vmatpush1.bf16.msra.mxu0 %v1318
      %1362 = vmatprep.subr.bf16.mxu0 %v1316
      %1363 = vmatpush1.bf16.msra.mxu0 %v1315
      %1364 = vmatprep.subr.bf16.mxu0 %v1313
      %1365 = vmatpush1.bf16.msra.mxu0 %v1312
      %1366 = vmatprep.subr.bf16.mxu0 %v1310
      %1367 = vmatpush1.bf16.msra.mxu0 %v1309
      %1368 = vmatprep.subr.bf16.mxu0 %v1307
      %1369 = vmatpush1.bf16.msra.mxu0 %v1306
      %1370 = vmatprep.subr.bf16.mxu0 0
      %1371 = vmatpush2.bf16.msra.mxu0 0
      %1372 = vmatprep.subr.bf16.mxu0 0
      %1373 = vmatpush2.bf16.msra.mxu0 0
      %1374 = vmatprep.subr.bf16.mxu0 0
      %1375 = vmatpush2.bf16.msra.mxu0 0
      %1376 = vmatprep.subr.bf16.mxu0 0
      %1377 = vmatpush2.bf16.msra.mxu0 0
      %1378 = vmatprep.subr.bf16.mxu0 0
      %1379 = vmatpush2.bf16.msra.mxu0 0
      %1380 = vmatprep.subr.bf16.mxu0 0
      %1381 = vmatpush2.bf16.msra.mxu0 0
      %1382 = vmatprep.subr.bf16.mxu0 0
      %1383 = vmatpush2.bf16.msra.mxu0 0
      %1384 = vmatprep.subr.bf16.mxu0 0
      %1385 = vmatpush2.bf16.msra.mxu0 0
      %1386 = vmatprep.mubr.bf16.mxu0 0
      %1387 = vmatmul.mubr.bf16.gmra.mxu0 %v1162
      %v1388 = vpop.f32.mrf.mxu0
      %v1389 = vadd.f32 0.0, %v1388
      %v1390 = vpop.f32.mrf.mxu0
      %v1391 = vadd.f32 0.0, %v1390
      %v1392 = vpop.f32.mrf.mxu0
      %v1393 = vadd.f32 0.0, %v1392
      %v1394 = vpop.f32.mrf.mxu0
      %v1395 = vadd.f32 0.0, %v1394
      %1396 = vmatprep.mubr.bf16.mxu0 0
      %1397 = vmatmul.mubr.bf16.gmra.mxu0 %v1163
      %v1398 = vpop.f32.mrf.mxu0
      %v1399 = vadd.f32 0.0, %v1398
      %v1400 = vpop.f32.mrf.mxu0
      %v1401 = vadd.f32 0.0, %v1400
      %v1402 = vpop.f32.mrf.mxu0
      %v1403 = vadd.f32 0.0, %v1402
      %v1404 = vpop.f32.mrf.mxu0
      %v1405 = vadd.f32 0.0, %v1404
      %1406 = vmatprep.mubr.bf16.mxu0 0
      %1407 = vmatmul.mubr.bf16.gmra.mxu0 %v1164
      %v1408 = vpop.f32.mrf.mxu0
      %v1409 = vadd.f32 0.0, %v1408
      %v1410 = vpop.f32.mrf.mxu0
      %v1411 = vadd.f32 0.0, %v1410
      %v1412 = vpop.f32.mrf.mxu0
      %v1413 = vadd.f32 0.0, %v1412
      %v1414 = vpop.f32.mrf.mxu0
      %v1415 = vadd.f32 0.0, %v1414
      %1416 = vmatprep.mubr.bf16.mxu0 0
      %1417 = vmatmul.mubr.bf16.gmra.mxu0 %v1165
      %v1418 = vpop.f32.mrf.mxu0
      %v1419 = vadd.f32 0.0, %v1418
      %v1420 = vpop.f32.mrf.mxu0
      %v1421 = vadd.f32 0.0, %v1420
      %v1422 = vpop.f32.mrf.mxu0
      %v1423 = vadd.f32 0.0, %v1422
      %v1424 = vpop.f32.mrf.mxu0
      %v1425 = vadd.f32 0.0, %v1424
      %1426 = vmatprep.mubr.bf16.mxu0 0
      %1427 = vmatmul.mubr.bf16.gmra.mxu0 %v1166
      %v1428 = vpop.f32.mrf.mxu0
      %v1429 = vadd.f32 0.0, %v1428
      %v1430 = vpop.f32.mrf.mxu0
      %v1431 = vadd.f32 0.0, %v1430
      %v1432 = vpop.f32.mrf.mxu0
      %v1433 = vadd.f32 0.0, %v1432
      %v1434 = vpop.f32.mrf.mxu0
      %v1435 = vadd.f32 0.0, %v1434
      %1436 = vmatprep.mubr.bf16.mxu0 0
      %1437 = vmatmul.mubr.bf16.gmra.mxu0 %v1167
      %v1438 = vpop.f32.mrf.mxu0
      %v1439 = vadd.f32 0.0, %v1438
      %v1440 = vpop.f32.mrf.mxu0
      %v1441 = vadd.f32 0.0, %v1440
      %v1442 = vpop.f32.mrf.mxu0
      %v1443 = vadd.f32 0.0, %v1442
      %v1444 = vpop.f32.mrf.mxu0
      %v1445 = vadd.f32 0.0, %v1444
      %1446 = vmatprep.mubr.bf16.mxu0 0
      %1447 = vmatmul.mubr.bf16.gmra.mxu0 %v1168
      %v1448 = vpop.f32.mrf.mxu0
      %v1449 = vadd.f32 0.0, %v1448
      %v1450 = vpop.f32.mrf.mxu0
      %v1451 = vadd.f32 0.0, %v1450
      %v1452 = vpop.f32.mrf.mxu0
      %v1453 = vadd.f32 0.0, %v1452
      %v1454 = vpop.f32.mrf.mxu0
      %v1455 = vadd.f32 0.0, %v1454
      %1456 = vmatprep.mubr.bf16.mxu0 0
      %1457 = vmatmul.mubr.bf16.gmra.mxu0 %v1169
      %v1458 = vpop.f32.mrf.mxu0
      %v1459 = vadd.f32 0.0, %v1458
      %v1460 = vpop.f32.mrf.mxu0
      %v1461 = vadd.f32 0.0, %v1460
      %v1462 = vpop.f32.mrf.mxu0
      %v1463 = vadd.f32 0.0, %v1462
      %v1464 = vpop.f32.mrf.mxu0
      %v1465 = vadd.f32 0.0, %v1464
      %1466 = vmatprep.mubr.bf16.mxu0 0
      %1467 = vmatmul.mubr.bf16.gmra.mxu0 %v1170
      %v1468 = vpop.f32.mrf.mxu0
      %v1469 = vadd.f32 0.0, %v1468
      %v1470 = vpop.f32.mrf.mxu0
      %v1471 = vadd.f32 0.0, %v1470
      %v1472 = vpop.f32.mrf.mxu0
      %v1473 = vadd.f32 0.0, %v1472
      %v1474 = vpop.f32.mrf.mxu0
      %v1475 = vadd.f32 0.0, %v1474
      %1476 = vmatprep.mubr.bf16.mxu0 0
      %1477 = vmatmul.mubr.bf16.gmra.mxu0 %v1171
      %v1478 = vpop.f32.mrf.mxu0
      %v1479 = vadd.f32 0.0, %v1478
      %v1480 = vpop.f32.mrf.mxu0
      %v1481 = vadd.f32 0.0, %v1480
      %v1482 = vpop.f32.mrf.mxu0
      %v1483 = vadd.f32 0.0, %v1482
      %v1484 = vpop.f32.mrf.mxu0
      %v1485 = vadd.f32 0.0, %v1484
      %1486 = vmatprep.mubr.bf16.mxu0 0
      %1487 = vmatmul.mubr.bf16.gmra.mxu0 %v1172
      %v1488 = vpop.f32.mrf.mxu0
      %v1489 = vadd.f32 0.0, %v1488
      %v1490 = vpop.f32.mrf.mxu0
      %v1491 = vadd.f32 0.0, %v1490
      %v1492 = vpop.f32.mrf.mxu0
      %v1493 = vadd.f32 0.0, %v1492
      %v1494 = vpop.f32.mrf.mxu0
      %v1495 = vadd.f32 0.0, %v1494
      %1496 = vmatprep.mubr.bf16.mxu0 0
      %1497 = vmatmul.mubr.bf16.gmra.mxu0 %v1173
      %v1498 = vpop.f32.mrf.mxu0
      %v1499 = vadd.f32 0.0, %v1498
      %v1500 = vpop.f32.mrf.mxu0
      %v1501 = vadd.f32 0.0, %v1500
      %v1502 = vpop.f32.mrf.mxu0
      %v1503 = vadd.f32 0.0, %v1502
      %v1504 = vpop.f32.mrf.mxu0
      %v1505 = vadd.f32 0.0, %v1504
      %1506 = vmatprep.mubr.bf16.mxu0 0
      %1507 = vmatmul.mubr.bf16.gmra.mxu0 %v1174
      %v1508 = vpop.f32.mrf.mxu0
      %v1509 = vadd.f32 0.0, %v1508
      %v1510 = vpop.f32.mrf.mxu0
      %v1511 = vadd.f32 0.0, %v1510
      %v1512 = vpop.f32.mrf.mxu0
      %v1513 = vadd.f32 0.0, %v1512
      %v1514 = vpop.f32.mrf.mxu0
      %v1515 = vadd.f32 0.0, %v1514
      %1516 = vmatprep.mubr.bf16.mxu0 0
      %1517 = vmatmul.mubr.bf16.gmra.mxu0 %v1175
      %v1518 = vpop.f32.mrf.mxu0
      %v1519 = vadd.f32 0.0, %v1518
      %v1520 = vpop.f32.mrf.mxu0
      %v1521 = vadd.f32 0.0, %v1520
      %v1522 = vpop.f32.mrf.mxu0
      %v1523 = vadd.f32 0.0, %v1522
      %v1524 = vpop.f32.mrf.mxu0
      %v1525 = vadd.f32 0.0, %v1524
      %1526 = vmatprep.mubr.bf16.mxu0 0
      %1527 = vmatmul.mubr.bf16.gmra.mxu0 %v1176
      %v1528 = vpop.f32.mrf.mxu0
      %v1529 = vadd.f32 0.0, %v1528
      %v1530 = vpop.f32.mrf.mxu0
      %v1531 = vadd.f32 0.0, %v1530
      %v1532 = vpop.f32.mrf.mxu0
      %v1533 = vadd.f32 0.0, %v1532
      %v1534 = vpop.f32.mrf.mxu0
      %v1535 = vadd.f32 0.0, %v1534
      %1536 = vmatprep.mubr.bf16.mxu0 0
      %1537 = vmatmul.mubr.bf16.gmra.mxu0 %v1177
      %v1538 = vpop.f32.mrf.mxu0
      %v1539 = vadd.f32 0.0, %v1538
      %v1540 = vpop.f32.mrf.mxu0
      %v1541 = vadd.f32 0.0, %v1540
      %v1542 = vpop.f32.mrf.mxu0
      %v1543 = vadd.f32 0.0, %v1542
      %v1544 = vpop.f32.mrf.mxu0
      %v1545 = vadd.f32 0.0, %v1544
      %1546 = vmatprep.mubr.bf16.mxu0 0
      %1547 = vmatmul.mubr.bf16.gmra.mxu0 %v1178
      %v1548 = vpop.f32.mrf.mxu0
      %v1549 = vadd.f32 0.0, %v1548
      %v1550 = vpop.f32.mrf.mxu0
      %v1551 = vadd.f32 0.0, %v1550
      %v1552 = vpop.f32.mrf.mxu0
      %v1553 = vadd.f32 0.0, %v1552
      %v1554 = vpop.f32.mrf.mxu0
      %v1555 = vadd.f32 0.0, %v1554
      %1556 = vmatprep.mubr.bf16.mxu0 0
      %1557 = vmatmul.mubr.bf16.gmra.mxu0 %v1179
      %v1558 = vpop.f32.mrf.mxu0
      %v1559 = vadd.f32 0.0, %v1558
      %v1560 = vpop.f32.mrf.mxu0
      %v1561 = vadd.f32 0.0, %v1560
      %v1562 = vpop.f32.mrf.mxu0
      %v1563 = vadd.f32 0.0, %v1562
      %v1564 = vpop.f32.mrf.mxu0
      %v1565 = vadd.f32 0.0, %v1564
      %1566 = vmatprep.mubr.bf16.mxu0 0
      %1567 = vmatmul.mubr.bf16.gmra.mxu0 %v1180
      %v1568 = vpop.f32.mrf.mxu0
      %v1569 = vadd.f32 0.0, %v1568
      %v1570 = vpop.f32.mrf.mxu0
      %v1571 = vadd.f32 0.0, %v1570
      %v1572 = vpop.f32.mrf.mxu0
      %v1573 = vadd.f32 0.0, %v1572
      %v1574 = vpop.f32.mrf.mxu0
      %v1575 = vadd.f32 0.0, %v1574
      %1576 = vmatprep.mubr.bf16.mxu0 0
      %1577 = vmatmul.mubr.bf16.gmra.mxu0 %v1181
      %v1578 = vpop.f32.mrf.mxu0
      %v1579 = vadd.f32 0.0, %v1578
      %v1580 = vpop.f32.mrf.mxu0
      %v1581 = vadd.f32 0.0, %v1580
      %v1582 = vpop.f32.mrf.mxu0
      %v1583 = vadd.f32 0.0, %v1582
      %v1584 = vpop.f32.mrf.mxu0
      %v1585 = vadd.f32 0.0, %v1584
      %1586 = vmatprep.mubr.bf16.mxu0 0
      %1587 = vmatmul.mubr.bf16.gmra.mxu0 %v1182
      %v1588 = vpop.f32.mrf.mxu0
      %v1589 = vadd.f32 0.0, %v1588
      %v1590 = vpop.f32.mrf.mxu0
      %v1591 = vadd.f32 0.0, %v1590
      %v1592 = vpop.f32.mrf.mxu0
      %v1593 = vadd.f32 0.0, %v1592
      %v1594 = vpop.f32.mrf.mxu0
      %v1595 = vadd.f32 0.0, %v1594
      %1596 = vmatprep.mubr.bf16.mxu0 0
      %1597 = vmatmul.mubr.bf16.gmra.mxu0 %v1183
      %v1598 = vpop.f32.mrf.mxu0
      %v1599 = vadd.f32 0.0, %v1598
      %v1600 = vpop.f32.mrf.mxu0
      %v1601 = vadd.f32 0.0, %v1600
      %v1602 = vpop.f32.mrf.mxu0
      %v1603 = vadd.f32 0.0, %v1602
      %v1604 = vpop.f32.mrf.mxu0
      %v1605 = vadd.f32 0.0, %v1604
      %1606 = vmatprep.mubr.bf16.mxu0 0
      %1607 = vmatmul.mubr.bf16.gmra.mxu0 %v1184
      %v1608 = vpop.f32.mrf.mxu0
      %v1609 = vadd.f32 0.0, %v1608
      %v1610 = vpop.f32.mrf.mxu0
      %v1611 = vadd.f32 0.0, %v1610
      %v1612 = vpop.f32.mrf.mxu0
      %v1613 = vadd.f32 0.0, %v1612
      %v1614 = vpop.f32.mrf.mxu0
      %v1615 = vadd.f32 0.0, %v1614
      %1616 = vmatprep.mubr.bf16.mxu0 0
      %1617 = vmatmul.mubr.bf16.gmra.mxu0 %v1185
      %v1618 = vpop.f32.mrf.mxu0
      %v1619 = vadd.f32 0.0, %v1618
      %v1620 = vpop.f32.mrf.mxu0
      %v1621 = vadd.f32 0.0, %v1620
      %v1622 = vpop.f32.mrf.mxu0
      %v1623 = vadd.f32 0.0, %v1622
      %v1624 = vpop.f32.mrf.mxu0
      %v1625 = vadd.f32 0.0, %v1624
      %1626 = vmatprep.mubr.bf16.mxu0 0
      %1627 = vmatmul.mubr.bf16.gmra.mxu0 %v1186
      %v1628 = vpop.f32.mrf.mxu0
      %v1629 = vadd.f32 0.0, %v1628
      %v1630 = vpop.f32.mrf.mxu0
      %v1631 = vadd.f32 0.0, %v1630
      %v1632 = vpop.f32.mrf.mxu0
      %v1633 = vadd.f32 0.0, %v1632
      %v1634 = vpop.f32.mrf.mxu0
      %v1635 = vadd.f32 0.0, %v1634
      %1636 = vmatprep.mubr.bf16.mxu0 0
      %1637 = vmatmul.mubr.bf16.gmra.mxu0 %v1187
      %v1638 = vpop.f32.mrf.mxu0
      %v1639 = vadd.f32 0.0, %v1638
      %v1640 = vpop.f32.mrf.mxu0
      %v1641 = vadd.f32 0.0, %v1640
      %v1642 = vpop.f32.mrf.mxu0
      %v1643 = vadd.f32 0.0, %v1642
      %v1644 = vpop.f32.mrf.mxu0
      %v1645 = vadd.f32 0.0, %v1644
      %1646 = vmatprep.mubr.bf16.mxu0 0
      %1647 = vmatmul.mubr.bf16.gmra.mxu0 %v1188
      %v1648 = vpop.f32.mrf.mxu0
      %v1649 = vadd.f32 0.0, %v1648
      %v1650 = vpop.f32.mrf.mxu0
      %v1651 = vadd.f32 0.0, %v1650
      %v1652 = vpop.f32.mrf.mxu0
      %v1653 = vadd.f32 0.0, %v1652
      %v1654 = vpop.f32.mrf.mxu0
      %v1655 = vadd.f32 0.0, %v1654
      %1656 = vmatprep.mubr.bf16.mxu0 0
      %1657 = vmatmul.mubr.bf16.gmra.mxu0 %v1189
      %v1658 = vpop.f32.mrf.mxu0
      %v1659 = vadd.f32 0.0, %v1658
      %v1660 = vpop.f32.mrf.mxu0
      %v1661 = vadd.f32 0.0, %v1660
      %v1662 = vpop.f32.mrf.mxu0
      %v1663 = vadd.f32 0.0, %v1662
      %v1664 = vpop.f32.mrf.mxu0
      %v1665 = vadd.f32 0.0, %v1664
      %1666 = vmatprep.mubr.bf16.mxu0 0
      %1667 = vmatmul.mubr.bf16.gmra.mxu0 %v1190
      %v1668 = vpop.f32.mrf.mxu0
      %v1669 = vadd.f32 0.0, %v1668
      %v1670 = vpop.f32.mrf.mxu0
      %v1671 = vadd.f32 0.0, %v1670
      %v1672 = vpop.f32.mrf.mxu0
      %v1673 = vadd.f32 0.0, %v1672
      %v1674 = vpop.f32.mrf.mxu0
      %v1675 = vadd.f32 0.0, %v1674
      %1676 = vmatprep.mubr.bf16.mxu0 0
      %1677 = vmatmul.mubr.bf16.gmra.mxu0 %v1191
      %v1678 = vpop.f32.mrf.mxu0
      %v1679 = vadd.f32 0.0, %v1678
      %v1680 = vpop.f32.mrf.mxu0
      %v1681 = vadd.f32 0.0, %v1680
      %v1682 = vpop.f32.mrf.mxu0
      %v1683 = vadd.f32 0.0, %v1682
      %v1684 = vpop.f32.mrf.mxu0
      %v1685 = vadd.f32 0.0, %v1684
      %1686 = vmatprep.mubr.bf16.mxu0 0
      %1687 = vmatmul.mubr.bf16.gmra.mxu0 %v1192
      %v1688 = vpop.f32.mrf.mxu0
      %v1689 = vadd.f32 0.0, %v1688
      %v1690 = vpop.f32.mrf.mxu0
      %v1691 = vadd.f32 0.0, %v1690
      %v1692 = vpop.f32.mrf.mxu0
      %v1693 = vadd.f32 0.0, %v1692
      %v1694 = vpop.f32.mrf.mxu0
      %v1695 = vadd.f32 0.0, %v1694
      %1696 = vmatprep.mubr.bf16.mxu0 0
      %1697 = vmatmul.mubr.bf16.gmra.mxu0 %v1193
      %v1698 = vpop.f32.mrf.mxu0
      %v1699 = vadd.f32 0.0, %v1698
      %v1700 = vpop.f32.mrf.mxu0
      %v1701 = vadd.f32 0.0, %v1700
      %v1702 = vpop.f32.mrf.mxu0
      %v1703 = vadd.f32 0.0, %v1702
      %v1704 = vpop.f32.mrf.mxu0
      %v1705 = vadd.f32 0.0, %v1704
      %1706 = vdwg.mxu0
      %1707 = vmatprep.subr.bf16.mxu0 0
      %1708 = vmatpush1.bf16.msra.mxu0 %v1329
      %1709 = vmatprep.subr.bf16.mxu0 0
      %1710 = vmatpush1.bf16.msra.mxu0 %v1326
      %1711 = vmatprep.subr.bf16.mxu0 0
      %1712 = vmatpush1.bf16.msra.mxu0 %v1323
      %1713 = vmatprep.subr.bf16.mxu0 0
      %1714 = vmatpush1.bf16.msra.mxu0 %v1320
      %1715 = vmatprep.subr.bf16.mxu0 0
      %1716 = vmatpush1.bf16.msra.mxu0 %v1317
      %1717 = vmatprep.subr.bf16.mxu0 0
      %1718 = vmatpush1.bf16.msra.mxu0 %v1314
      %1719 = vmatprep.subr.bf16.mxu0 0
      %1720 = vmatpush1.bf16.msra.mxu0 %v1311
      %1721 = vmatprep.subr.bf16.mxu0 0
      %1722 = vmatpush1.bf16.msra.mxu0 %v1308
      %1723 = vmatprep.subr.bf16.mxu0 0
      %1724 = vmatpush2.bf16.msra.mxu0 0
      %1725 = vmatprep.subr.bf16.mxu0 0
      %1726 = vmatpush2.bf16.msra.mxu0 0
      %1727 = vmatprep.subr.bf16.mxu0 0
      %1728 = vmatpush2.bf16.msra.mxu0 0
      %1729 = vmatprep.subr.bf16.mxu0 0
      %1730 = vmatpush2.bf16.msra.mxu0 0
      %1731 = vmatprep.subr.bf16.mxu0 0
      %1732 = vmatpush2.bf16.msra.mxu0 0
      %1733 = vmatprep.subr.bf16.mxu0 0
      %1734 = vmatpush2.bf16.msra.mxu0 0
      %1735 = vmatprep.subr.bf16.mxu0 0
      %1736 = vmatpush2.bf16.msra.mxu0 0
      %1737 = vmatprep.subr.bf16.mxu0 0
      %1738 = vmatpush2.bf16.msra.mxu0 0
      %1739 = vmatprep.mubr.bf16.mxu0 0
      %1740 = vmatmul.mubr.bf16.gmra.mxu0 %v1162
      %v1741 = vpop.f32.mrf.mxu0
      %v1742 = vadd.f32 0.0, %v1741
      %v1743 = vpop.f32.mrf.mxu0
      %v1744 = vpop.f32.mrf.mxu0
      %v1745 = vadd.f32 0.0, %v1744
      %v1746 = vpop.f32.mrf.mxu0
      %1747 = vmatprep.mubr.bf16.mxu0 0
      %1748 = vmatmul.mubr.bf16.gmra.mxu0 %v1163
      %v1749 = vpop.f32.mrf.mxu0
      %v1750 = vadd.f32 0.0, %v1749
      %v1751 = vpop.f32.mrf.mxu0
      %v1752 = vpop.f32.mrf.mxu0
      %v1753 = vadd.f32 0.0, %v1752
      %v1754 = vpop.f32.mrf.mxu0
      %1755 = vmatprep.mubr.bf16.mxu0 0
      %1756 = vmatmul.mubr.bf16.gmra.mxu0 %v1164
      %v1757 = vpop.f32.mrf.mxu0
      %v1758 = vadd.f32 0.0, %v1757
      %v1759 = vpop.f32.mrf.mxu0
      %v1760 = vpop.f32.mrf.mxu0
      %v1761 = vadd.f32 0.0, %v1760
      %v1762 = vpop.f32.mrf.mxu0
      %1763 = vmatprep.mubr.bf16.mxu0 0
      %1764 = vmatmul.mubr.bf16.gmra.mxu0 %v1165
      %v1765 = vpop.f32.mrf.mxu0
      %v1766 = vadd.f32 0.0, %v1765
      %v1767 = vpop.f32.mrf.mxu0
      %v1768 = vpop.f32.mrf.mxu0
      %v1769 = vadd.f32 0.0, %v1768
      %v1770 = vpop.f32.mrf.mxu0
      %1771 = vmatprep.mubr.bf16.mxu0 0
      %1772 = vmatmul.mubr.bf16.gmra.mxu0 %v1166
      %v1773 = vpop.f32.mrf.mxu0
      %v1774 = vadd.f32 0.0, %v1773
      %v1775 = vpop.f32.mrf.mxu0
      %v1776 = vpop.f32.mrf.mxu0
      %v1777 = vadd.f32 0.0, %v1776
      %v1778 = vpop.f32.mrf.mxu0
      %1779 = vmatprep.mubr.bf16.mxu0 0
      %1780 = vmatmul.mubr.bf16.gmra.mxu0 %v1167
      %v1781 = vpop.f32.mrf.mxu0
      %v1782 = vadd.f32 0.0, %v1781
      %v1783 = vpop.f32.mrf.mxu0
      %v1784 = vpop.f32.mrf.mxu0
      %v1785 = vadd.f32 0.0, %v1784
      %v1786 = vpop.f32.mrf.mxu0
      %1787 = vmatprep.mubr.bf16.mxu0 0
      %1788 = vmatmul.mubr.bf16.gmra.mxu0 %v1168
      %v1789 = vpop.f32.mrf.mxu0
      %v1790 = vadd.f32 0.0, %v1789
      %v1791 = vpop.f32.mrf.mxu0
      %v1792 = vpop.f32.mrf.mxu0
      %v1793 = vadd.f32 0.0, %v1792
      %v1794 = vpop.f32.mrf.mxu0
      %1795 = vmatprep.mubr.bf16.mxu0 0
      %1796 = vmatmul.mubr.bf16.gmra.mxu0 %v1169
      %v1797 = vpop.f32.mrf.mxu0
      %v1798 = vadd.f32 0.0, %v1797
      %v1799 = vpop.f32.mrf.mxu0
      %v1800 = vpop.f32.mrf.mxu0
      %v1801 = vadd.f32 0.0, %v1800
      %v1802 = vpop.f32.mrf.mxu0
      %1803 = vmatprep.mubr.bf16.mxu0 0
      %1804 = vmatmul.mubr.bf16.gmra.mxu0 %v1170
      %v1805 = vpop.f32.mrf.mxu0
      %v1806 = vadd.f32 0.0, %v1805
      %v1807 = vpop.f32.mrf.mxu0
      %v1808 = vpop.f32.mrf.mxu0
      %v1809 = vadd.f32 0.0, %v1808
      %v1810 = vpop.f32.mrf.mxu0
      %1811 = vmatprep.mubr.bf16.mxu0 0
      %1812 = vmatmul.mubr.bf16.gmra.mxu0 %v1171
      %v1813 = vpop.f32.mrf.mxu0
      %v1814 = vadd.f32 0.0, %v1813
      %v1815 = vpop.f32.mrf.mxu0
      %v1816 = vpop.f32.mrf.mxu0
      %v1817 = vadd.f32 0.0, %v1816
      %v1818 = vpop.f32.mrf.mxu0
      %1819 = vmatprep.mubr.bf16.mxu0 0
      %1820 = vmatmul.mubr.bf16.gmra.mxu0 %v1172
      %v1821 = vpop.f32.mrf.mxu0
      %v1822 = vadd.f32 0.0, %v1821
      %v1823 = vpop.f32.mrf.mxu0
      %v1824 = vpop.f32.mrf.mxu0
      %v1825 = vadd.f32 0.0, %v1824
      %v1826 = vpop.f32.mrf.mxu0
      %1827 = vmatprep.mubr.bf16.mxu0 0
      %1828 = vmatmul.mubr.bf16.gmra.mxu0 %v1173
      %v1829 = vpop.f32.mrf.mxu0
      %v1830 = vadd.f32 0.0, %v1829
      %v1831 = vpop.f32.mrf.mxu0
      %v1832 = vpop.f32.mrf.mxu0
      %v1833 = vadd.f32 0.0, %v1832
      %v1834 = vpop.f32.mrf.mxu0
      %1835 = vmatprep.mubr.bf16.mxu0 0
      %1836 = vmatmul.mubr.bf16.gmra.mxu0 %v1174
      %v1837 = vpop.f32.mrf.mxu0
      %v1838 = vadd.f32 0.0, %v1837
      %v1839 = vpop.f32.mrf.mxu0
      %v1840 = vpop.f32.mrf.mxu0
      %v1841 = vadd.f32 0.0, %v1840
      %v1842 = vpop.f32.mrf.mxu0
      %1843 = vmatprep.mubr.bf16.mxu0 0
      %1844 = vmatmul.mubr.bf16.gmra.mxu0 %v1175
      %v1845 = vpop.f32.mrf.mxu0
      %v1846 = vadd.f32 0.0, %v1845
      %v1847 = vpop.f32.mrf.mxu0
      %v1848 = vpop.f32.mrf.mxu0
      %v1849 = vadd.f32 0.0, %v1848
      %v1850 = vpop.f32.mrf.mxu0
      %1851 = vmatprep.mubr.bf16.mxu0 0
      %1852 = vmatmul.mubr.bf16.gmra.mxu0 %v1176
      %v1853 = vpop.f32.mrf.mxu0
      %v1854 = vadd.f32 0.0, %v1853
      %v1855 = vpop.f32.mrf.mxu0
      %v1856 = vpop.f32.mrf.mxu0
      %v1857 = vadd.f32 0.0, %v1856
      %v1858 = vpop.f32.mrf.mxu0
      %1859 = vmatprep.mubr.bf16.mxu0 0
      %1860 = vmatmul.mubr.bf16.gmra.mxu0 %v1177
      %v1861 = vpop.f32.mrf.mxu0
      %v1862 = vadd.f32 0.0, %v1861
      %v1863 = vpop.f32.mrf.mxu0
      %v1864 = vpop.f32.mrf.mxu0
      %v1865 = vadd.f32 0.0, %v1864
      %v1866 = vpop.f32.mrf.mxu0
      %1867 = vmatprep.mubr.bf16.mxu0 0
      %1868 = vmatmul.mubr.bf16.gmra.mxu0 %v1178
      %v1869 = vpop.f32.mrf.mxu0
      %v1870 = vadd.f32 0.0, %v1869
      %v1871 = vpop.f32.mrf.mxu0
      %v1872 = vpop.f32.mrf.mxu0
      %v1873 = vadd.f32 0.0, %v1872
      %v1874 = vpop.f32.mrf.mxu0
      %1875 = vmatprep.mubr.bf16.mxu0 0
      %1876 = vmatmul.mubr.bf16.gmra.mxu0 %v1179
      %v1877 = vpop.f32.mrf.mxu0
      %v1878 = vadd.f32 0.0, %v1877
      %v1879 = vpop.f32.mrf.mxu0
      %v1880 = vpop.f32.mrf.mxu0
      %v1881 = vadd.f32 0.0, %v1880
      %v1882 = vpop.f32.mrf.mxu0
      %1883 = vmatprep.mubr.bf16.mxu0 0
      %1884 = vmatmul.mubr.bf16.gmra.mxu0 %v1180
      %v1885 = vpop.f32.mrf.mxu0
      %v1886 = vadd.f32 0.0, %v1885
      %v1887 = vpop.f32.mrf.mxu0
      %v1888 = vpop.f32.mrf.mxu0
      %v1889 = vadd.f32 0.0, %v1888
      %v1890 = vpop.f32.mrf.mxu0
      %1891 = vmatprep.mubr.bf16.mxu0 0
      %1892 = vmatmul.mubr.bf16.gmra.mxu0 %v1181
      %v1893 = vpop.f32.mrf.mxu0
      %v1894 = vadd.f32 0.0, %v1893
      %v1895 = vpop.f32.mrf.mxu0
      %v1896 = vpop.f32.mrf.mxu0
      %v1897 = vadd.f32 0.0, %v1896
      %v1898 = vpop.f32.mrf.mxu0
      %1899 = vmatprep.mubr.bf16.mxu0 0
      %1900 = vmatmul.mubr.bf16.gmra.mxu0 %v1182
      %v1901 = vpop.f32.mrf.mxu0
      %v1902 = vadd.f32 0.0, %v1901
      %v1903 = vpop.f32.mrf.mxu0
      %v1904 = vpop.f32.mrf.mxu0
      %v1905 = vadd.f32 0.0, %v1904
      %v1906 = vpop.f32.mrf.mxu0
      %1907 = vmatprep.mubr.bf16.mxu0 0
      %1908 = vmatmul.mubr.bf16.gmra.mxu0 %v1183
      %v1909 = vpop.f32.mrf.mxu0
      %v1910 = vadd.f32 0.0, %v1909
      %v1911 = vpop.f32.mrf.mxu0
      %v1912 = vpop.f32.mrf.mxu0
      %v1913 = vadd.f32 0.0, %v1912
      %v1914 = vpop.f32.mrf.mxu0
      %1915 = vmatprep.mubr.bf16.mxu0 0
      %1916 = vmatmul.mubr.bf16.gmra.mxu0 %v1184
      %v1917 = vpop.f32.mrf.mxu0
      %v1918 = vadd.f32 0.0, %v1917
      %v1919 = vpop.f32.mrf.mxu0
      %v1920 = vpop.f32.mrf.mxu0
      %v1921 = vadd.f32 0.0, %v1920
      %v1922 = vpop.f32.mrf.mxu0
      %1923 = vmatprep.mubr.bf16.mxu0 0
      %1924 = vmatmul.mubr.bf16.gmra.mxu0 %v1185
      %v1925 = vpop.f32.mrf.mxu0
      %v1926 = vadd.f32 0.0, %v1925
      %v1927 = vpop.f32.mrf.mxu0
      %v1928 = vpop.f32.mrf.mxu0
      %v1929 = vadd.f32 0.0, %v1928
      %v1930 = vpop.f32.mrf.mxu0
      %1931 = vmatprep.mubr.bf16.mxu0 0
      %1932 = vmatmul.mubr.bf16.gmra.mxu0 %v1186
      %v1933 = vpop.f32.mrf.mxu0
      %v1934 = vadd.f32 0.0, %v1933
      %v1935 = vpop.f32.mrf.mxu0
      %v1936 = vpop.f32.mrf.mxu0
      %v1937 = vadd.f32 0.0, %v1936
      %v1938 = vpop.f32.mrf.mxu0
      %1939 = vmatprep.mubr.bf16.mxu0 0
      %1940 = vmatmul.mubr.bf16.gmra.mxu0 %v1187
      %v1941 = vpop.f32.mrf.mxu0
      %v1942 = vadd.f32 0.0, %v1941
      %v1943 = vpop.f32.mrf.mxu0
      %v1944 = vpop.f32.mrf.mxu0
      %v1945 = vadd.f32 0.0, %v1944
      %v1946 = vpop.f32.mrf.mxu0
      %1947 = vmatprep.mubr.bf16.mxu0 0
      %1948 = vmatmul.mubr.bf16.gmra.mxu0 %v1188
      %v1949 = vpop.f32.mrf.mxu0
      %v1950 = vadd.f32 0.0, %v1949
      %v1951 = vpop.f32.mrf.mxu0
      %v1952 = vpop.f32.mrf.mxu0
      %v1953 = vadd.f32 0.0, %v1952
      %v1954 = vpop.f32.mrf.mxu0
      %1955 = vmatprep.mubr.bf16.mxu0 0
      %1956 = vmatmul.mubr.bf16.gmra.mxu0 %v1189
      %v1957 = vpop.f32.mrf.mxu0
      %v1958 = vadd.f32 0.0, %v1957
      %v1959 = vpop.f32.mrf.mxu0
      %v1960 = vpop.f32.mrf.mxu0
      %v1961 = vadd.f32 0.0, %v1960
      %v1962 = vpop.f32.mrf.mxu0
      %1963 = vmatprep.mubr.bf16.mxu0 0
      %1964 = vmatmul.mubr.bf16.gmra.mxu0 %v1190
      %v1965 = vpop.f32.mrf.mxu0
      %v1966 = vadd.f32 0.0, %v1965
      %v1967 = vpop.f32.mrf.mxu0
      %v1968 = vpop.f32.mrf.mxu0
      %v1969 = vadd.f32 0.0, %v1968
      %v1970 = vpop.f32.mrf.mxu0
      %1971 = vmatprep.mubr.bf16.mxu0 0
      %1972 = vmatmul.mubr.bf16.gmra.mxu0 %v1191
      %v1973 = vpop.f32.mrf.mxu0
      %v1974 = vadd.f32 0.0, %v1973
      %v1975 = vpop.f32.mrf.mxu0
      %v1976 = vpop.f32.mrf.mxu0
      %v1977 = vadd.f32 0.0, %v1976
      %v1978 = vpop.f32.mrf.mxu0
      %1979 = vmatprep.mubr.bf16.mxu0 0
      %1980 = vmatmul.mubr.bf16.gmra.mxu0 %v1192
      %v1981 = vpop.f32.mrf.mxu0
      %v1982 = vadd.f32 0.0, %v1981
      %v1983 = vpop.f32.mrf.mxu0
      %v1984 = vpop.f32.mrf.mxu0
      %v1985 = vadd.f32 0.0, %v1984
      %v1986 = vpop.f32.mrf.mxu0
      %1987 = vmatprep.mubr.bf16.mxu0 0
      %1988 = vmatmul.mubr.bf16.gmra.mxu0 %v1193
      %v1989 = vpop.f32.mrf.mxu0
      %v1990 = vadd.f32 0.0, %v1989
      %v1991 = vpop.f32.mrf.mxu0
      %v1992 = vpop.f32.mrf.mxu0
      %v1993 = vadd.f32 0.0, %v1992
      %v1994 = vpop.f32.mrf.mxu0
      %1995 = vdwg.mxu0
      %v1996 = vpack.c.bf16 %v1393, %v1389
      %v1997 = vpack.c.bf16 %v1403, %v1399
      %v1998 = vpack.c.bf16 %v1413, %v1409
      %v1999 = vpack.c.bf16 %v1423, %v1419
      %v2000 = vpack.c.bf16 %v1433, %v1429
      %v2001 = vpack.c.bf16 %v1443, %v1439
      %v2002 = vpack.c.bf16 %v1453, %v1449
      %v2003 = vpack.c.bf16 %v1463, %v1459
      %v2004 = vpack.c.bf16 %v1473, %v1469
      %v2005 = vpack.c.bf16 %v1483, %v1479
      %v2006 = vpack.c.bf16 %v1493, %v1489
      %v2007 = vpack.c.bf16 %v1503, %v1499
      %v2008 = vpack.c.bf16 %v1513, %v1509
      %v2009 = vpack.c.bf16 %v1523, %v1519
      %v2010 = vpack.c.bf16 %v1533, %v1529
      %v2011 = vpack.c.bf16 %v1543, %v1539
      %v2012 = vpack.c.bf16 %v1553, %v1549
      %v2013 = vpack.c.bf16 %v1563, %v1559
      %v2014 = vpack.c.bf16 %v1573, %v1569
      %v2015 = vpack.c.bf16 %v1583, %v1579
      %v2016 = vpack.c.bf16 %v1593, %v1589
      %v2017 = vpack.c.bf16 %v1603, %v1599
      %v2018 = vpack.c.bf16 %v1613, %v1609
      %v2019 = vpack.c.bf16 %v1623, %v1619
      %v2020 = vpack.c.bf16 %v1633, %v1629
      %v2021 = vpack.c.bf16 %v1643, %v1639
      %v2022 = vpack.c.bf16 %v1653, %v1649
      %v2023 = vpack.c.bf16 %v1663, %v1659
      %v2024 = vpack.c.bf16 %v1673, %v1669
      %v2025 = vpack.c.bf16 %v1683, %v1679
      %v2026 = vpack.c.bf16 %v1693, %v1689
      %v2027 = vpack.c.bf16 %v1703, %v1699
      %v2028 = vpack.c.bf16 %v1395, %v1391
      %v2029 = vpack.c.bf16 %v1405, %v1401
      %v2030 = vpack.c.bf16 %v1415, %v1411
      %v2031 = vpack.c.bf16 %v1425, %v1421
      %v2032 = vpack.c.bf16 %v1435, %v1431
      %v2033 = vpack.c.bf16 %v1445, %v1441
      %v2034 = vpack.c.bf16 %v1455, %v1451
      %v2035 = vpack.c.bf16 %v1465, %v1461
      %v2036 = vpack.c.bf16 %v1475, %v1471
      %v2037 = vpack.c.bf16 %v1485, %v1481
      %v2038 = vpack.c.bf16 %v1495, %v1491
      %v2039 = vpack.c.bf16 %v1505, %v1501
      %v2040 = vpack.c.bf16 %v1515, %v1511
      %v2041 = vpack.c.bf16 %v1525, %v1521
      %v2042 = vpack.c.bf16 %v1535, %v1531
      %v2043 = vpack.c.bf16 %v1545, %v1541
      %v2044 = vpack.c.bf16 %v1555, %v1551
      %v2045 = vpack.c.bf16 %v1565, %v1561
      %v2046 = vpack.c.bf16 %v1575, %v1571
      %v2047 = vpack.c.bf16 %v1585, %v1581
      %v2048 = vpack.c.bf16 %v1595, %v1591
      %v2049 = vpack.c.bf16 %v1605, %v1601
      %v2050 = vpack.c.bf16 %v1615, %v1611
      %v2051 = vpack.c.bf16 %v1625, %v1621
      %v2052 = vpack.c.bf16 %v1635, %v1631
      %v2053 = vpack.c.bf16 %v1645, %v1641
      %v2054 = vpack.c.bf16 %v1655, %v1651
      %v2055 = vpack.c.bf16 %v1665, %v1661
      %v2056 = vpack.c.bf16 %v1675, %v1671
      %v2057 = vpack.c.bf16 %v1685, %v1681
      %v2058 = vpack.c.bf16 %v1695, %v1691
      %v2059 = vpack.c.bf16 %v1705, %v1701
      %v2060 = vpack.c.bf16 %v1745, %v1742
      %v2061 = vpack.c.bf16 %v1753, %v1750
      %v2062 = vpack.c.bf16 %v1761, %v1758
      %v2063 = vpack.c.bf16 %v1769, %v1766
      %v2064 = vpack.c.bf16 %v1777, %v1774
      %v2065 = vpack.c.bf16 %v1785, %v1782
      %v2066 = vpack.c.bf16 %v1793, %v1790
      %v2067 = vpack.c.bf16 %v1801, %v1798
      %v2068 = vpack.c.bf16 %v1809, %v1806
      %v2069 = vpack.c.bf16 %v1817, %v1814
      %v2070 = vpack.c.bf16 %v1825, %v1822
      %v2071 = vpack.c.bf16 %v1833, %v1830
      %v2072 = vpack.c.bf16 %v1841, %v1838
      %v2073 = vpack.c.bf16 %v1849, %v1846
      %v2074 = vpack.c.bf16 %v1857, %v1854
      %v2075 = vpack.c.bf16 %v1865, %v1862
      %v2076 = vpack.c.bf16 %v1873, %v1870
      %v2077 = vpack.c.bf16 %v1881, %v1878
      %v2078 = vpack.c.bf16 %v1889, %v1886
      %v2079 = vpack.c.bf16 %v1897, %v1894
      %v2080 = vpack.c.bf16 %v1905, %v1902
      %v2081 = vpack.c.bf16 %v1913, %v1910
      %v2082 = vpack.c.bf16 %v1921, %v1918
      %v2083 = vpack.c.bf16 %v1929, %v1926
      %v2084 = vpack.c.bf16 %v1937, %v1934
      %v2085 = vpack.c.bf16 %v1945, %v1942
      %v2086 = vpack.c.bf16 %v1953, %v1950
      %v2087 = vpack.c.bf16 %v1961, %v1958
      %v2088 = vpack.c.bf16 %v1969, %v1966
      %v2089 = vpack.c.bf16 %v1977, %v1974
      %v2090 = vpack.c.bf16 %v1985, %v1982
      %v2091 = vpack.c.bf16 %v1993, %v1990
      %2092 = vmatprep.subr.bf16.mxu0 0
      %2093 = vmatpush1.bf16.xpose.msra.mxu0 0
      %2094 = vmatprep.subr.bf16.mxu0 0
      %2095 = vmatpush1.bf16.xpose.msra.mxu0 0
      %2096 = vmatprep.subr.bf16.mxu0 0
      %2097 = vmatpush1.bf16.xpose.msra.mxu0 0
      %2098 = vmatprep.subr.bf16.mxu0 0
      %2099 = vmatpush1.bf16.xpose.msra.mxu0 0
      %2100 = vmatprep.subr.bf16.mxu0 0
      %2101 = vmatpush1.bf16.xpose.msra.mxu0 %v2031
      %2102 = vmatprep.subr.bf16.mxu0 0
      %2103 = vmatpush1.bf16.xpose.msra.mxu0 %v2030
      %2104 = vmatprep.subr.bf16.mxu0 0
      %2105 = vmatpush1.bf16.xpose.msra.mxu0 %v2029
      %2106 = vmatprep.subr.bf16.mxu0 0
      %2107 = vmatpush1.bf16.xpose.msra.mxu0 %v2028
      %2108 = vmatprep.subr.bf16.mxu0 0
      %2109 = vmatpush2.bf16.xpose.msra.mxu0 0
      %2110 = vmatprep.subr.bf16.mxu0 0
      %2111 = vmatpush2.bf16.xpose.msra.mxu0 0
      %2112 = vmatprep.subr.bf16.mxu0 0
      %2113 = vmatpush2.bf16.xpose.msra.mxu0 0
      %2114 = vmatprep.subr.bf16.mxu0 0
      %2115 = vmatpush2.bf16.xpose.msra.mxu0 0
      %2116 = vmatprep.subr.bf16.mxu0 0
      %2117 = vmatpush2.bf16.xpose.msra.mxu0 0
      %2118 = vmatprep.subr.bf16.mxu0 0
      %2119 = vmatpush2.bf16.xpose.msra.mxu0 0
      %2120 = vmatprep.subr.bf16.mxu0 0
      %2121 = vmatpush2.bf16.xpose.msra.mxu0 0
      %2122 = vmatprep.subr.bf16.mxu0 0
      %2123 = vmatpush2.bf16.xpose.msra.mxu0 0
      %2124 = vmatprep.mubr.bf16.mxu0 0
      %2125 = vmatmul.mubr.bf16.gmra.mxu0 %v1996
      %v2126 = vpop.f32.mrf.mxu0
      %v2127 = vadd.f32 0.0, %v2126
      %v2128 = vpop.f32.mrf.mxu0
      %v2129 = vpop.f32.mrf.mxu0
      %v2130 = vadd.f32 0.0, %v2129
      %v2131 = vpop.f32.mrf.mxu0
      %2132 = vmatprep.mubr.bf16.mxu0 0
      %2133 = vmatmul.mubr.bf16.gmra.mxu0 %v1997
      %v2134 = vpop.f32.mrf.mxu0
      %v2135 = vadd.f32 0.0, %v2134
      %v2136 = vpop.f32.mrf.mxu0
      %v2137 = vpop.f32.mrf.mxu0
      %v2138 = vadd.f32 0.0, %v2137
      %v2139 = vpop.f32.mrf.mxu0
      %2140 = vmatprep.mubr.bf16.mxu0 0
      %2141 = vmatmul.mubr.bf16.gmra.mxu0 %v1998
      %v2142 = vpop.f32.mrf.mxu0
      %v2143 = vadd.f32 0.0, %v2142
      %v2144 = vpop.f32.mrf.mxu0
      %v2145 = vpop.f32.mrf.mxu0
      %v2146 = vadd.f32 0.0, %v2145
      %v2147 = vpop.f32.mrf.mxu0
      %2148 = vmatprep.mubr.bf16.mxu0 0
      %2149 = vmatmul.mubr.bf16.gmra.mxu0 %v1999
      %v2150 = vpop.f32.mrf.mxu0
      %v2151 = vadd.f32 0.0, %v2150
      %v2152 = vpop.f32.mrf.mxu0
      %v2153 = vpop.f32.mrf.mxu0
      %v2154 = vadd.f32 0.0, %v2153
      %v2155 = vpop.f32.mrf.mxu0
      %2156 = vdwg.mxu0
      %2157 = vmatprep.subr.bf16.mxu0 0
      %2158 = vmatpush1.bf16.xpose.msra.mxu0 0
      %2159 = vmatprep.subr.bf16.mxu0 0
      %2160 = vmatpush1.bf16.xpose.msra.mxu0 0
      %2161 = vmatprep.subr.bf16.mxu0 0
      %2162 = vmatpush1.bf16.xpose.msra.mxu0 0
      %2163 = vmatprep.subr.bf16.mxu0 0
      %2164 = vmatpush1.bf16.xpose.msra.mxu0 0
      %2165 = vmatprep.subr.bf16.mxu0 0
      %2166 = vmatpush1.bf16.xpose.msra.mxu0 %v2035
      %2167 = vmatprep.subr.bf16.mxu0 0
      %2168 = vmatpush1.bf16.xpose.msra.mxu0 %v2034
      %2169 = vmatprep.subr.bf16.mxu0 0
      %2170 = vmatpush1.bf16.xpose.msra.mxu0 %v2033
      %2171 = vmatprep.subr.bf16.mxu0 0
      %2172 = vmatpush1.bf16.xpose.msra.mxu0 %v2032
      %2173 = vmatprep.subr.bf16.mxu0 0
      %2174 = vmatpush2.bf16.xpose.msra.mxu0 0
      %2175 = vmatprep.subr.bf16.mxu0 0
      %2176 = vmatpush2.bf16.xpose.msra.mxu0 0
      %2177 = vmatprep.subr.bf16.mxu0 0
      %2178 = vmatpush2.bf16.xpose.msra.mxu0 0
      %2179 = vmatprep.subr.bf16.mxu0 0
      %2180 = vmatpush2.bf16.xpose.msra.mxu0 0
      %2181 = vmatprep.subr.bf16.mxu0 0
      %2182 = vmatpush2.bf16.xpose.msra.mxu0 0
      %2183 = vmatprep.subr.bf16.mxu0 0
      %2184 = vmatpush2.bf16.xpose.msra.mxu0 0
      %2185 = vmatprep.subr.bf16.mxu0 0
      %2186 = vmatpush2.bf16.xpose.msra.mxu0 0
      %2187 = vmatprep.subr.bf16.mxu0 0
      %2188 = vmatpush2.bf16.xpose.msra.mxu0 0
      %2189 = vmatprep.mubr.bf16.mxu0 0
      %2190 = vmatmul.mubr.bf16.gmra.mxu0 %v2000
      %v2191 = vpop.f32.mrf.mxu0
      %v2192 = vadd.f32 0.0, %v2191
      %v2193 = vpop.f32.mrf.mxu0
      %v2194 = vpop.f32.mrf.mxu0
      %v2195 = vadd.f32 0.0, %v2194
      %v2196 = vpop.f32.mrf.mxu0
      %2197 = vmatprep.mubr.bf16.mxu0 0
      %2198 = vmatmul.mubr.bf16.gmra.mxu0 %v2001
      %v2199 = vpop.f32.mrf.mxu0
      %v2200 = vadd.f32 0.0, %v2199
      %v2201 = vpop.f32.mrf.mxu0
      %v2202 = vpop.f32.mrf.mxu0
      %v2203 = vadd.f32 0.0, %v2202
      %v2204 = vpop.f32.mrf.mxu0
      %2205 = vmatprep.mubr.bf16.mxu0 0
      %2206 = vmatmul.mubr.bf16.gmra.mxu0 %v2002
      %v2207 = vpop.f32.mrf.mxu0
      %v2208 = vadd.f32 0.0, %v2207
      %v2209 = vpop.f32.mrf.mxu0
      %v2210 = vpop.f32.mrf.mxu0
      %v2211 = vadd.f32 0.0, %v2210
      %v2212 = vpop.f32.mrf.mxu0
      %2213 = vmatprep.mubr.bf16.mxu0 0
      %2214 = vmatmul.mubr.bf16.gmra.mxu0 %v2003
      %v2215 = vpop.f32.mrf.mxu0
      %v2216 = vadd.f32 0.0, %v2215
      %v2217 = vpop.f32.mrf.mxu0
      %v2218 = vpop.f32.mrf.mxu0
      %v2219 = vadd.f32 0.0, %v2218
      %v2220 = vpop.f32.mrf.mxu0
      %2221 = vdwg.mxu0
      %2222 = vmatprep.subr.bf16.mxu0 0
      %2223 = vmatpush1.bf16.xpose.msra.mxu0 0
      %2224 = vmatprep.subr.bf16.mxu0 0
      %2225 = vmatpush1.bf16.xpose.msra.mxu0 0
      %2226 = vmatprep.subr.bf16.mxu0 0
      %2227 = vmatpush1.bf16.xpose.msra.mxu0 0
      %2228 = vmatprep.subr.bf16.mxu0 0
      %2229 = vmatpush1.bf16.xpose.msra.mxu0 0
      %2230 = vmatprep.subr.bf16.mxu0 0
      %2231 = vmatpush1.bf16.xpose.msra.mxu0 %v2039
      %2232 = vmatprep.subr.bf16.mxu0 0
      %2233 = vmatpush1.bf16.xpose.msra.mxu0 %v2038
      %2234 = vmatprep.subr.bf16.mxu0 0
      %2235 = vmatpush1.bf16.xpose.msra.mxu0 %v2037
      %2236 = vmatprep.subr.bf16.mxu0 0
      %2237 = vmatpush1.bf16.xpose.msra.mxu0 %v2036
      %2238 = vmatprep.subr.bf16.mxu0 0
      %2239 = vmatpush2.bf16.xpose.msra.mxu0 0
      %2240 = vmatprep.subr.bf16.mxu0 0
      %2241 = vmatpush2.bf16.xpose.msra.mxu0 0
      %2242 = vmatprep.subr.bf16.mxu0 0
      %2243 = vmatpush2.bf16.xpose.msra.mxu0 0
      %2244 = vmatprep.subr.bf16.mxu0 0
      %2245 = vmatpush2.bf16.xpose.msra.mxu0 0
      %2246 = vmatprep.subr.bf16.mxu0 0
      %2247 = vmatpush2.bf16.xpose.msra.mxu0 0
      %2248 = vmatprep.subr.bf16.mxu0 0
      %2249 = vmatpush2.bf16.xpose.msra.mxu0 0
      %2250 = vmatprep.subr.bf16.mxu0 0
      %2251 = vmatpush2.bf16.xpose.msra.mxu0 0
      %2252 = vmatprep.subr.bf16.mxu0 0
      %2253 = vmatpush2.bf16.xpose.msra.mxu0 0
      %2254 = vmatprep.mubr.bf16.mxu0 0
      %2255 = vmatmul.mubr.bf16.gmra.mxu0 %v2004
      %v2256 = vpop.f32.mrf.mxu0
      %v2257 = vadd.f32 0.0, %v2256
      %v2258 = vpop.f32.mrf.mxu0
      %v2259 = vpop.f32.mrf.mxu0
      %v2260 = vadd.f32 0.0, %v2259
      %v2261 = vpop.f32.mrf.mxu0
      %2262 = vmatprep.mubr.bf16.mxu0 0
      %2263 = vmatmul.mubr.bf16.gmra.mxu0 %v2005
      %v2264 = vpop.f32.mrf.mxu0
      %v2265 = vadd.f32 0.0, %v2264
      %v2266 = vpop.f32.mrf.mxu0
      %v2267 = vpop.f32.mrf.mxu0
      %v2268 = vadd.f32 0.0, %v2267
      %v2269 = vpop.f32.mrf.mxu0
      %2270 = vmatprep.mubr.bf16.mxu0 0
      %2271 = vmatmul.mubr.bf16.gmra.mxu0 %v2006
      %v2272 = vpop.f32.mrf.mxu0
      %v2273 = vadd.f32 0.0, %v2272
      %v2274 = vpop.f32.mrf.mxu0
      %v2275 = vpop.f32.mrf.mxu0
      %v2276 = vadd.f32 0.0, %v2275
      %v2277 = vpop.f32.mrf.mxu0
      %2278 = vmatprep.mubr.bf16.mxu0 0
      %2279 = vmatmul.mubr.bf16.gmra.mxu0 %v2007
      %v2280 = vpop.f32.mrf.mxu0
      %v2281 = vadd.f32 0.0, %v2280
      %v2282 = vpop.f32.mrf.mxu0
      %v2283 = vpop.f32.mrf.mxu0
      %v2284 = vadd.f32 0.0, %v2283
      %v2285 = vpop.f32.mrf.mxu0
      %2286 = vdwg.mxu0
      %2287 = vmatprep.subr.bf16.mxu0 0
      %2288 = vmatpush1.bf16.xpose.msra.mxu0 0
      %2289 = vmatprep.subr.bf16.mxu0 0
      %2290 = vmatpush1.bf16.xpose.msra.mxu0 0
      %2291 = vmatprep.subr.bf16.mxu0 0
      %2292 = vmatpush1.bf16.xpose.msra.mxu0 0
      %2293 = vmatprep.subr.bf16.mxu0 0
      %2294 = vmatpush1.bf16.xpose.msra.mxu0 0
      %2295 = vmatprep.subr.bf16.mxu0 0
      %2296 = vmatpush1.bf16.xpose.msra.mxu0 %v2043
      %2297 = vmatprep.subr.bf16.mxu0 0
      %2298 = vmatpush1.bf16.xpose.msra.mxu0 %v2042
      %2299 = vmatprep.subr.bf16.mxu0 0
      %2300 = vmatpush1.bf16.xpose.msra.mxu0 %v2041
      %2301 = vmatprep.subr.bf16.mxu0 0
      %2302 = vmatpush1.bf16.xpose.msra.mxu0 %v2040
      %2303 = vmatprep.subr.bf16.mxu0 0
      %2304 = vmatpush2.bf16.xpose.msra.mxu0 0
      %2305 = vmatprep.subr.bf16.mxu0 0
      %2306 = vmatpush2.bf16.xpose.msra.mxu0 0
      %2307 = vmatprep.subr.bf16.mxu0 0
      %2308 = vmatpush2.bf16.xpose.msra.mxu0 0
      %2309 = vmatprep.subr.bf16.mxu0 0
      %2310 = vmatpush2.bf16.xpose.msra.mxu0 0
      %2311 = vmatprep.subr.bf16.mxu0 0
      %2312 = vmatpush2.bf16.xpose.msra.mxu0 0
      %2313 = vmatprep.subr.bf16.mxu0 0
      %2314 = vmatpush2.bf16.xpose.msra.mxu0 0
      %2315 = vmatprep.subr.bf16.mxu0 0
      %2316 = vmatpush2.bf16.xpose.msra.mxu0 0
      %2317 = vmatprep.subr.bf16.mxu0 0
      %2318 = vmatpush2.bf16.xpose.msra.mxu0 0
      %2319 = vmatprep.mubr.bf16.mxu0 0
      %2320 = vmatmul.mubr.bf16.gmra.mxu0 %v2008
      %v2321 = vpop.f32.mrf.mxu0
      %v2322 = vadd.f32 0.0, %v2321
      %v2323 = vpop.f32.mrf.mxu0
      %v2324 = vpop.f32.mrf.mxu0
      %v2325 = vadd.f32 0.0, %v2324
      %v2326 = vpop.f32.mrf.mxu0
      %2327 = vmatprep.mubr.bf16.mxu0 0
      %2328 = vmatmul.mubr.bf16.gmra.mxu0 %v2009
      %v2329 = vpop.f32.mrf.mxu0
      %v2330 = vadd.f32 0.0, %v2329
      %v2331 = vpop.f32.mrf.mxu0
      %v2332 = vpop.f32.mrf.mxu0
      %v2333 = vadd.f32 0.0, %v2332
      %v2334 = vpop.f32.mrf.mxu0
      %2335 = vmatprep.mubr.bf16.mxu0 0
      %2336 = vmatmul.mubr.bf16.gmra.mxu0 %v2010
      %v2337 = vpop.f32.mrf.mxu0
      %v2338 = vadd.f32 0.0, %v2337
      %v2339 = vpop.f32.mrf.mxu0
      %v2340 = vpop.f32.mrf.mxu0
      %v2341 = vadd.f32 0.0, %v2340
      %v2342 = vpop.f32.mrf.mxu0
      %2343 = vmatprep.mubr.bf16.mxu0 0
      %2344 = vmatmul.mubr.bf16.gmra.mxu0 %v2011
      %v2345 = vpop.f32.mrf.mxu0
      %v2346 = vadd.f32 0.0, %v2345
      %v2347 = vpop.f32.mrf.mxu0
      %v2348 = vpop.f32.mrf.mxu0
      %v2349 = vadd.f32 0.0, %v2348
      %v2350 = vpop.f32.mrf.mxu0
      %2351 = vdwg.mxu0
      %2352 = vmatprep.subr.bf16.mxu0 0
      %2353 = vmatpush1.bf16.xpose.msra.mxu0 0
      %2354 = vmatprep.subr.bf16.mxu0 0
      %2355 = vmatpush1.bf16.xpose.msra.mxu0 0
      %2356 = vmatprep.subr.bf16.mxu0 0
      %2357 = vmatpush1.bf16.xpose.msra.mxu0 0
      %2358 = vmatprep.subr.bf16.mxu0 0
      %2359 = vmatpush1.bf16.xpose.msra.mxu0 0
      %2360 = vmatprep.subr.bf16.mxu0 0
      %2361 = vmatpush1.bf16.xpose.msra.mxu0 %v2047
      %2362 = vmatprep.subr.bf16.mxu0 0
      %2363 = vmatpush1.bf16.xpose.msra.mxu0 %v2046
      %2364 = vmatprep.subr.bf16.mxu0 0
      %2365 = vmatpush1.bf16.xpose.msra.mxu0 %v2045
      %2366 = vmatprep.subr.bf16.mxu0 0
      %2367 = vmatpush1.bf16.xpose.msra.mxu0 %v2044
      %2368 = vmatprep.subr.bf16.mxu0 0
      %2369 = vmatpush2.bf16.xpose.msra.mxu0 0
      %2370 = vmatprep.subr.bf16.mxu0 0
      %2371 = vmatpush2.bf16.xpose.msra.mxu0 0
      %2372 = vmatprep.subr.bf16.mxu0 0
      %2373 = vmatpush2.bf16.xpose.msra.mxu0 0
      %2374 = vmatprep.subr.bf16.mxu0 0
      %2375 = vmatpush2.bf16.xpose.msra.mxu0 0
      %2376 = vmatprep.subr.bf16.mxu0 0
      %2377 = vmatpush2.bf16.xpose.msra.mxu0 0
      %2378 = vmatprep.subr.bf16.mxu0 0
      %2379 = vmatpush2.bf16.xpose.msra.mxu0 0
      %2380 = vmatprep.subr.bf16.mxu0 0
      %2381 = vmatpush2.bf16.xpose.msra.mxu0 0
      %2382 = vmatprep.subr.bf16.mxu0 0
      %2383 = vmatpush2.bf16.xpose.msra.mxu0 0
      %2384 = vmatprep.mubr.bf16.mxu0 0
      %2385 = vmatmul.mubr.bf16.gmra.mxu0 %v2012
      %v2386 = vpop.f32.mrf.mxu0
      %v2387 = vadd.f32 0.0, %v2386
      %v2388 = vpop.f32.mrf.mxu0
      %v2389 = vpop.f32.mrf.mxu0
      %v2390 = vadd.f32 0.0, %v2389
      %v2391 = vpop.f32.mrf.mxu0
      %2392 = vmatprep.mubr.bf16.mxu0 0
      %2393 = vmatmul.mubr.bf16.gmra.mxu0 %v2013
      %v2394 = vpop.f32.mrf.mxu0
      %v2395 = vadd.f32 0.0, %v2394
      %v2396 = vpop.f32.mrf.mxu0
      %v2397 = vpop.f32.mrf.mxu0
      %v2398 = vadd.f32 0.0, %v2397
      %v2399 = vpop.f32.mrf.mxu0
      %2400 = vmatprep.mubr.bf16.mxu0 0
      %2401 = vmatmul.mubr.bf16.gmra.mxu0 %v2014
      %v2402 = vpop.f32.mrf.mxu0
      %v2403 = vadd.f32 0.0, %v2402
      %v2404 = vpop.f32.mrf.mxu0
      %v2405 = vpop.f32.mrf.mxu0
      %v2406 = vadd.f32 0.0, %v2405
      %v2407 = vpop.f32.mrf.mxu0
      %2408 = vmatprep.mubr.bf16.mxu0 0
      %2409 = vmatmul.mubr.bf16.gmra.mxu0 %v2015
      %v2410 = vpop.f32.mrf.mxu0
      %v2411 = vadd.f32 0.0, %v2410
      %v2412 = vpop.f32.mrf.mxu0
      %v2413 = vpop.f32.mrf.mxu0
      %v2414 = vadd.f32 0.0, %v2413
      %v2415 = vpop.f32.mrf.mxu0
      %2416 = vdwg.mxu0
      %2417 = vmatprep.subr.bf16.mxu0 0
      %2418 = vmatpush1.bf16.xpose.msra.mxu0 0
      %2419 = vmatprep.subr.bf16.mxu0 0
      %2420 = vmatpush1.bf16.xpose.msra.mxu0 0
      %2421 = vmatprep.subr.bf16.mxu0 0
      %2422 = vmatpush1.bf16.xpose.msra.mxu0 0
      %2423 = vmatprep.subr.bf16.mxu0 0
      %2424 = vmatpush1.bf16.xpose.msra.mxu0 0
      %2425 = vmatprep.subr.bf16.mxu0 0
      %2426 = vmatpush1.bf16.xpose.msra.mxu0 %v2051
      %2427 = vmatprep.subr.bf16.mxu0 0
      %2428 = vmatpush1.bf16.xpose.msra.mxu0 %v2050
      %2429 = vmatprep.subr.bf16.mxu0 0
      %2430 = vmatpush1.bf16.xpose.msra.mxu0 %v2049
      %2431 = vmatprep.subr.bf16.mxu0 0
      %2432 = vmatpush1.bf16.xpose.msra.mxu0 %v2048
      %2433 = vmatprep.subr.bf16.mxu0 0
      %2434 = vmatpush2.bf16.xpose.msra.mxu0 0
      %2435 = vmatprep.subr.bf16.mxu0 0
      %2436 = vmatpush2.bf16.xpose.msra.mxu0 0
      %2437 = vmatprep.subr.bf16.mxu0 0
      %2438 = vmatpush2.bf16.xpose.msra.mxu0 0
      %2439 = vmatprep.subr.bf16.mxu0 0
      %2440 = vmatpush2.bf16.xpose.msra.mxu0 0
      %2441 = vmatprep.subr.bf16.mxu0 0
      %2442 = vmatpush2.bf16.xpose.msra.mxu0 0
      %2443 = vmatprep.subr.bf16.mxu0 0
      %2444 = vmatpush2.bf16.xpose.msra.mxu0 0
      %2445 = vmatprep.subr.bf16.mxu0 0
      %2446 = vmatpush2.bf16.xpose.msra.mxu0 0
      %2447 = vmatprep.subr.bf16.mxu0 0
      %2448 = vmatpush2.bf16.xpose.msra.mxu0 0
      %2449 = vmatprep.mubr.bf16.mxu0 0
      %2450 = vmatmul.mubr.bf16.gmra.mxu0 %v2016
      %v2451 = vpop.f32.mrf.mxu0
      %v2452 = vadd.f32 0.0, %v2451
      %v2453 = vpop.f32.mrf.mxu0
      %v2454 = vpop.f32.mrf.mxu0
      %v2455 = vadd.f32 0.0, %v2454
      %v2456 = vpop.f32.mrf.mxu0
      %2457 = vmatprep.mubr.bf16.mxu0 0
      %2458 = vmatmul.mubr.bf16.gmra.mxu0 %v2017
      %v2459 = vpop.f32.mrf.mxu0
      %v2460 = vadd.f32 0.0, %v2459
      %v2461 = vpop.f32.mrf.mxu0
      %v2462 = vpop.f32.mrf.mxu0
      %v2463 = vadd.f32 0.0, %v2462
      %v2464 = vpop.f32.mrf.mxu0
      %2465 = vmatprep.mubr.bf16.mxu0 0
      %2466 = vmatmul.mubr.bf16.gmra.mxu0 %v2018
      %v2467 = vpop.f32.mrf.mxu0
      %v2468 = vadd.f32 0.0, %v2467
      %v2469 = vpop.f32.mrf.mxu0
      %v2470 = vpop.f32.mrf.mxu0
      %v2471 = vadd.f32 0.0, %v2470
      %v2472 = vpop.f32.mrf.mxu0
      %2473 = vmatprep.mubr.bf16.mxu0 0
      %2474 = vmatmul.mubr.bf16.gmra.mxu0 %v2019
      %v2475 = vpop.f32.mrf.mxu0
      %v2476 = vadd.f32 0.0, %v2475
      %v2477 = vpop.f32.mrf.mxu0
      %v2478 = vpop.f32.mrf.mxu0
      %v2479 = vadd.f32 0.0, %v2478
      %v2480 = vpop.f32.mrf.mxu0
      %2481 = vdwg.mxu0
      %2482 = vmatprep.subr.bf16.mxu0 0
      %2483 = vmatpush1.bf16.xpose.msra.mxu0 0
      %2484 = vmatprep.subr.bf16.mxu0 0
      %2485 = vmatpush1.bf16.xpose.msra.mxu0 0
      %2486 = vmatprep.subr.bf16.mxu0 0
      %2487 = vmatpush1.bf16.xpose.msra.mxu0 0
      %2488 = vmatprep.subr.bf16.mxu0 0
      %2489 = vmatpush1.bf16.xpose.msra.mxu0 0
      %2490 = vmatprep.subr.bf16.mxu0 0
      %2491 = vmatpush1.bf16.xpose.msra.mxu0 %v2055
      %2492 = vmatprep.subr.bf16.mxu0 0
      %2493 = vmatpush1.bf16.xpose.msra.mxu0 %v2054
      %2494 = vmatprep.subr.bf16.mxu0 0
      %2495 = vmatpush1.bf16.xpose.msra.mxu0 %v2053
      %2496 = vmatprep.subr.bf16.mxu0 0
      %2497 = vmatpush1.bf16.xpose.msra.mxu0 %v2052
      %2498 = vmatprep.subr.bf16.mxu0 0
      %2499 = vmatpush2.bf16.xpose.msra.mxu0 0
      %2500 = vmatprep.subr.bf16.mxu0 0
      %2501 = vmatpush2.bf16.xpose.msra.mxu0 0
      %2502 = vmatprep.subr.bf16.mxu0 0
      %2503 = vmatpush2.bf16.xpose.msra.mxu0 0
      %2504 = vmatprep.subr.bf16.mxu0 0
      %2505 = vmatpush2.bf16.xpose.msra.mxu0 0
      %2506 = vmatprep.subr.bf16.mxu0 0
      %2507 = vmatpush2.bf16.xpose.msra.mxu0 0
      %2508 = vmatprep.subr.bf16.mxu0 0
      %2509 = vmatpush2.bf16.xpose.msra.mxu0 0
      %2510 = vmatprep.subr.bf16.mxu0 0
      %2511 = vmatpush2.bf16.xpose.msra.mxu0 0
      %2512 = vmatprep.subr.bf16.mxu0 0
      %2513 = vmatpush2.bf16.xpose.msra.mxu0 0
      %2514 = vmatprep.mubr.bf16.mxu0 0
      %2515 = vmatmul.mubr.bf16.gmra.mxu0 %v2020
      %v2516 = vpop.f32.mrf.mxu0
      %v2517 = vadd.f32 0.0, %v2516
      %v2518 = vpop.f32.mrf.mxu0
      %v2519 = vpop.f32.mrf.mxu0
      %v2520 = vadd.f32 0.0, %v2519
      %v2521 = vpop.f32.mrf.mxu0
      %2522 = vmatprep.mubr.bf16.mxu0 0
      %2523 = vmatmul.mubr.bf16.gmra.mxu0 %v2021
      %v2524 = vpop.f32.mrf.mxu0
      %v2525 = vadd.f32 0.0, %v2524
      %v2526 = vpop.f32.mrf.mxu0
      %v2527 = vpop.f32.mrf.mxu0
      %v2528 = vadd.f32 0.0, %v2527
      %v2529 = vpop.f32.mrf.mxu0
      %2530 = vmatprep.mubr.bf16.mxu0 0
      %2531 = vmatmul.mubr.bf16.gmra.mxu0 %v2022
      %v2532 = vpop.f32.mrf.mxu0
      %v2533 = vadd.f32 0.0, %v2532
      %v2534 = vpop.f32.mrf.mxu0
      %v2535 = vpop.f32.mrf.mxu0
      %v2536 = vadd.f32 0.0, %v2535
      %v2537 = vpop.f32.mrf.mxu0
      %2538 = vmatprep.mubr.bf16.mxu0 0
      %2539 = vmatmul.mubr.bf16.gmra.mxu0 %v2023
      %v2540 = vpop.f32.mrf.mxu0
      %v2541 = vadd.f32 0.0, %v2540
      %v2542 = vpop.f32.mrf.mxu0
      %v2543 = vpop.f32.mrf.mxu0
      %v2544 = vadd.f32 0.0, %v2543
      %v2545 = vpop.f32.mrf.mxu0
      %2546 = vdwg.mxu0
      %2547 = vmatprep.subr.bf16.mxu0 0
      %2548 = vmatpush1.bf16.xpose.msra.mxu0 0
      %2549 = vmatprep.subr.bf16.mxu0 0
      %2550 = vmatpush1.bf16.xpose.msra.mxu0 0
      %2551 = vmatprep.subr.bf16.mxu0 0
      %2552 = vmatpush1.bf16.xpose.msra.mxu0 0
      %2553 = vmatprep.subr.bf16.mxu0 0
      %2554 = vmatpush1.bf16.xpose.msra.mxu0 0
      %2555 = vmatprep.subr.bf16.mxu0 0
      %2556 = vmatpush1.bf16.xpose.msra.mxu0 %v2059
      %2557 = vmatprep.subr.bf16.mxu0 0
      %2558 = vmatpush1.bf16.xpose.msra.mxu0 %v2058
      %2559 = vmatprep.subr.bf16.mxu0 0
      %2560 = vmatpush1.bf16.xpose.msra.mxu0 %v2057
      %2561 = vmatprep.subr.bf16.mxu0 0
      %2562 = vmatpush1.bf16.xpose.msra.mxu0 %v2056
      %2563 = vmatprep.subr.bf16.mxu0 0
      %2564 = vmatpush2.bf16.xpose.msra.mxu0 0
      %2565 = vmatprep.subr.bf16.mxu0 0
      %2566 = vmatpush2.bf16.xpose.msra.mxu0 0
      %2567 = vmatprep.subr.bf16.mxu0 0
      %2568 = vmatpush2.bf16.xpose.msra.mxu0 0
      %2569 = vmatprep.subr.bf16.mxu0 0
      %2570 = vmatpush2.bf16.xpose.msra.mxu0 0
      %2571 = vmatprep.subr.bf16.mxu0 0
      %2572 = vmatpush2.bf16.xpose.msra.mxu0 0
      %2573 = vmatprep.subr.bf16.mxu0 0
      %2574 = vmatpush2.bf16.xpose.msra.mxu0 0
      %2575 = vmatprep.subr.bf16.mxu0 0
      %2576 = vmatpush2.bf16.xpose.msra.mxu0 0
      %2577 = vmatprep.subr.bf16.mxu0 0
      %2578 = vmatpush2.bf16.xpose.msra.mxu0 0
      %2579 = vmatprep.mubr.bf16.mxu0 0
      %2580 = vmatmul.mubr.bf16.gmra.mxu0 %v2024
      %v2581 = vpop.f32.mrf.mxu0
      %v2582 = vadd.f32 0.0, %v2581
      %v2583 = vpop.f32.mrf.mxu0
      %v2584 = vpop.f32.mrf.mxu0
      %v2585 = vadd.f32 0.0, %v2584
      %v2586 = vpop.f32.mrf.mxu0
      %2587 = vmatprep.mubr.bf16.mxu0 0
      %2588 = vmatmul.mubr.bf16.gmra.mxu0 %v2025
      %v2589 = vpop.f32.mrf.mxu0
      %v2590 = vadd.f32 0.0, %v2589
      %v2591 = vpop.f32.mrf.mxu0
      %v2592 = vpop.f32.mrf.mxu0
      %v2593 = vadd.f32 0.0, %v2592
      %v2594 = vpop.f32.mrf.mxu0
      %2595 = vmatprep.mubr.bf16.mxu0 0
      %2596 = vmatmul.mubr.bf16.gmra.mxu0 %v2026
      %v2597 = vpop.f32.mrf.mxu0
      %v2598 = vadd.f32 0.0, %v2597
      %v2599 = vpop.f32.mrf.mxu0
      %v2600 = vpop.f32.mrf.mxu0
      %v2601 = vadd.f32 0.0, %v2600
      %v2602 = vpop.f32.mrf.mxu0
      %2603 = vmatprep.mubr.bf16.mxu0 0
      %2604 = vmatmul.mubr.bf16.gmra.mxu0 %v2027
      %v2605 = vpop.f32.mrf.mxu0
      %v2606 = vadd.f32 0.0, %v2605
      %v2607 = vpop.f32.mrf.mxu0
      %v2608 = vpop.f32.mrf.mxu0
      %v2609 = vadd.f32 0.0, %v2608
      %v2610 = vpop.f32.mrf.mxu0
      %2611 = vdwg.mxu0
      %v2612 = vmul.f32 %v2127, 0.088388346
      %v2613 = vmul.f32 %v2130, 0.088388346
      %v2614 = vmul.f32 %v2135, 0.088388346
      %v2615 = vmul.f32 %v2138, 0.088388346
      %v2616 = vmul.f32 %v2143, 0.088388346
      %v2617 = vmul.f32 %v2146, 0.088388346
      %v2618 = vmul.f32 %v2151, 0.088388346
      %v2619 = vmul.f32 %v2154, 0.088388346
      %v2620 = vmul.f32 %v2192, 0.088388346
      %v2621 = vmul.f32 %v2195, 0.088388346
      %v2622 = vmul.f32 %v2200, 0.088388346
      %v2623 = vmul.f32 %v2203, 0.088388346
      %v2624 = vmul.f32 %v2208, 0.088388346
      %v2625 = vmul.f32 %v2211, 0.088388346
      %v2626 = vmul.f32 %v2216, 0.088388346
      %v2627 = vmul.f32 %v2219, 0.088388346
      %v2628 = vmul.f32 %v2257, 0.088388346
      %v2629 = vmul.f32 %v2260, 0.088388346
      %v2630 = vmul.f32 %v2265, 0.088388346
      %v2631 = vmul.f32 %v2268, 0.088388346
      %v2632 = vmul.f32 %v2273, 0.088388346
      %v2633 = vmul.f32 %v2276, 0.088388346
      %v2634 = vmul.f32 %v2281, 0.088388346
      %v2635 = vmul.f32 %v2284, 0.088388346
      %v2636 = vmul.f32 %v2322, 0.088388346
      %v2637 = vmul.f32 %v2325, 0.088388346
      %v2638 = vmul.f32 %v2330, 0.088388346
      %v2639 = vmul.f32 %v2333, 0.088388346
      %v2640 = vmul.f32 %v2338, 0.088388346
      %v2641 = vmul.f32 %v2341, 0.088388346
      %v2642 = vmul.f32 %v2346, 0.088388346
      %v2643 = vmul.f32 %v2349, 0.088388346
      %v2644 = vmul.f32 %v2387, 0.088388346
      %v2645 = vmul.f32 %v2390, 0.088388346
      %v2646 = vmul.f32 %v2395, 0.088388346
      %v2647 = vmul.f32 %v2398, 0.088388346
      %v2648 = vmul.f32 %v2403, 0.088388346
      %v2649 = vmul.f32 %v2406, 0.088388346
      %v2650 = vmul.f32 %v2411, 0.088388346
      %v2651 = vmul.f32 %v2414, 0.088388346
      %v2652 = vmul.f32 %v2452, 0.088388346
      %v2653 = vmul.f32 %v2455, 0.088388346
      %v2654 = vmul.f32 %v2460, 0.088388346
      %v2655 = vmul.f32 %v2463, 0.088388346
      %v2656 = vmul.f32 %v2468, 0.088388346
      %v2657 = vmul.f32 %v2471, 0.088388346
      %v2658 = vmul.f32 %v2476, 0.088388346
      %v2659 = vmul.f32 %v2479, 0.088388346
      %v2660 = vmul.f32 %v2517, 0.088388346
      %v2661 = vmul.f32 %v2520, 0.088388346
      %v2662 = vmul.f32 %v2525, 0.088388346
      %v2663 = vmul.f32 %v2528, 0.088388346
      %v2664 = vmul.f32 %v2533, 0.088388346
      %v2665 = vmul.f32 %v2536, 0.088388346
      %v2666 = vmul.f32 %v2541, 0.088388346
      %v2667 = vmul.f32 %v2544, 0.088388346
      %v2668 = vmul.f32 %v2582, 0.088388346
      %v2669 = vmul.f32 %v2585, 0.088388346
      %v2670 = vmul.f32 %v2590, 0.088388346
      %v2671 = vmul.f32 %v2593, 0.088388346
      %v2672 = vmul.f32 %v2598, 0.088388346
      %v2673 = vmul.f32 %v2601, 0.088388346
      %v2674 = vmul.f32 %v2606, 0.088388346
      %v2675 = vmul.f32 %v2609, 0.088388346
      %vm2676 = vcmask 523264
      %v2677 = vsel %vm2676, %v2612, -inf
      %v2678 = vsel %vm2676, %v2620, -inf
      %v2679 = vmax.f32 %v2677, %v2678
      %v2680 = vsel %vm2676, %v2628, -inf
      %v2681 = vmax.f32 %v2679, %v2680
      %v2682 = vsel %vm2676, %v2636, -inf
      %v2683 = vmax.f32 %v2681, %v2682
      %v2684 = vsel %vm2676, %v2644, -inf
      %v2685 = vmax.f32 %v2683, %v2684
      %v2686 = vsel %vm2676, %v2652, -inf
      %v2687 = vmax.f32 %v2685, %v2686
      %v2688 = vsel %vm2676, %v2660, -inf
      %v2689 = vmax.f32 %v2687, %v2688
      %v2690 = vsel %vm2676, %v2668, -inf
      %v2691 = vmax.f32 %v2689, %v2690
      %v2692 = vsel %vm2676, %v2613, -inf
      %v2693 = vsel %vm2676, %v2621, -inf
      %v2694 = vmax.f32 %v2692, %v2693
      %v2695 = vsel %vm2676, %v2629, -inf
      %v2696 = vmax.f32 %v2694, %v2695
      %v2697 = vsel %vm2676, %v2637, -inf
      %v2698 = vmax.f32 %v2696, %v2697
      %v2699 = vsel %vm2676, %v2645, -inf
      %v2700 = vmax.f32 %v2698, %v2699
      %v2701 = vsel %vm2676, %v2653, -inf
      %v2702 = vmax.f32 %v2700, %v2701
      %v2703 = vsel %vm2676, %v2661, -inf
      %v2704 = vmax.f32 %v2702, %v2703
      %v2705 = vsel %vm2676, %v2669, -inf
      %v2706 = vmax.f32 %v2704, %v2705
      %v2707 = vsel %vm2676, %v2614, -inf
      %v2708 = vsel %vm2676, %v2622, -inf
      %v2709 = vmax.f32 %v2707, %v2708
      %v2710 = vsel %vm2676, %v2630, -inf
      %v2711 = vmax.f32 %v2709, %v2710
      %v2712 = vsel %vm2676, %v2638, -inf
      %v2713 = vmax.f32 %v2711, %v2712
      %v2714 = vsel %vm2676, %v2646, -inf
      %v2715 = vmax.f32 %v2713, %v2714
      %v2716 = vsel %vm2676, %v2654, -inf
      %v2717 = vmax.f32 %v2715, %v2716
      %v2718 = vsel %vm2676, %v2662, -inf
      %v2719 = vmax.f32 %v2717, %v2718
      %v2720 = vsel %vm2676, %v2670, -inf
      %v2721 = vmax.f32 %v2719, %v2720
      %v2722 = vsel %vm2676, %v2615, -inf
      %v2723 = vsel %vm2676, %v2623, -inf
      %v2724 = vmax.f32 %v2722, %v2723
      %v2725 = vsel %vm2676, %v2631, -inf
      %v2726 = vmax.f32 %v2724, %v2725
      %v2727 = vsel %vm2676, %v2639, -inf
      %v2728 = vmax.f32 %v2726, %v2727
      %v2729 = vsel %vm2676, %v2647, -inf
      %v2730 = vmax.f32 %v2728, %v2729
      %v2731 = vsel %vm2676, %v2655, -inf
      %v2732 = vmax.f32 %v2730, %v2731
      %v2733 = vsel %vm2676, %v2663, -inf
      %v2734 = vmax.f32 %v2732, %v2733
      %v2735 = vsel %vm2676, %v2671, -inf
      %v2736 = vmax.f32 %v2734, %v2735
      %v2737 = vsel %vm2676, %v2616, -inf
      %v2738 = vsel %vm2676, %v2624, -inf
      %v2739 = vmax.f32 %v2737, %v2738
      %v2740 = vsel %vm2676, %v2632, -inf
      %v2741 = vmax.f32 %v2739, %v2740
      %v2742 = vsel %vm2676, %v2640, -inf
      %v2743 = vmax.f32 %v2741, %v2742
      %v2744 = vsel %vm2676, %v2648, -inf
      %v2745 = vmax.f32 %v2743, %v2744
      %v2746 = vsel %vm2676, %v2656, -inf
      %v2747 = vmax.f32 %v2745, %v2746
      %v2748 = vsel %vm2676, %v2664, -inf
      %v2749 = vmax.f32 %v2747, %v2748
      %v2750 = vsel %vm2676, %v2672, -inf
      %v2751 = vmax.f32 %v2749, %v2750
      %v2752 = vsel %vm2676, %v2617, -inf
      %v2753 = vsel %vm2676, %v2625, -inf
      %v2754 = vmax.f32 %v2752, %v2753
      %v2755 = vsel %vm2676, %v2633, -inf
      %v2756 = vmax.f32 %v2754, %v2755
      %v2757 = vsel %vm2676, %v2641, -inf
      %v2758 = vmax.f32 %v2756, %v2757
      %v2759 = vsel %vm2676, %v2649, -inf
      %v2760 = vmax.f32 %v2758, %v2759
      %v2761 = vsel %vm2676, %v2657, -inf
      %v2762 = vmax.f32 %v2760, %v2761
      %v2763 = vsel %vm2676, %v2665, -inf
      %v2764 = vmax.f32 %v2762, %v2763
      %v2765 = vsel %vm2676, %v2673, -inf
      %v2766 = vmax.f32 %v2764, %v2765
      %v2767 = vsel %vm2676, %v2618, -inf
      %v2768 = vsel %vm2676, %v2626, -inf
      %v2769 = vmax.f32 %v2767, %v2768
      %v2770 = vsel %vm2676, %v2634, -inf
      %v2771 = vmax.f32 %v2769, %v2770
      %v2772 = vsel %vm2676, %v2642, -inf
      %v2773 = vmax.f32 %v2771, %v2772
      %v2774 = vsel %vm2676, %v2650, -inf
      %v2775 = vmax.f32 %v2773, %v2774
      %v2776 = vsel %vm2676, %v2658, -inf
      %v2777 = vmax.f32 %v2775, %v2776
      %v2778 = vsel %vm2676, %v2666, -inf
      %v2779 = vmax.f32 %v2777, %v2778
      %v2780 = vsel %vm2676, %v2674, -inf
      %v2781 = vmax.f32 %v2779, %v2780
      %v2782 = vsel %vm2676, %v2619, -inf
      %v2783 = vsel %vm2676, %v2627, -inf
      %v2784 = vmax.f32 %v2782, %v2783
      %v2785 = vsel %vm2676, %v2635, -inf
      %v2786 = vmax.f32 %v2784, %v2785
      %v2787 = vsel %vm2676, %v2643, -inf
      %v2788 = vmax.f32 %v2786, %v2787
      %v2789 = vsel %vm2676, %v2651, -inf
      %v2790 = vmax.f32 %v2788, %v2789
      %v2791 = vsel %vm2676, %v2659, -inf
      %v2792 = vmax.f32 %v2790, %v2791
      %v2793 = vsel %vm2676, %v2667, -inf
      %v2794 = vmax.f32 %v2792, %v2793
      %v2795 = vsel %vm2676, %v2675, -inf
      %v2796 = vmax.f32 %v2794, %v2795
      %v2797 = vsub.f32 %v2612, %v2691
      %v2798 = vsub.f32 %v2613, %v2706
      %v2799 = vsub.f32 %v2614, %v2721
      %v2800 = vsub.f32 %v2615, %v2736
      %v2801 = vsub.f32 %v2616, %v2751
      %v2802 = vsub.f32 %v2617, %v2766
      %v2803 = vsub.f32 %v2618, %v2781
      %v2804 = vsub.f32 %v2619, %v2796
      %v2805 = vsub.f32 %v2620, %v2691
      %v2806 = vsub.f32 %v2621, %v2706
      %v2807 = vsub.f32 %v2622, %v2721
      %v2808 = vsub.f32 %v2623, %v2736
      %v2809 = vsub.f32 %v2624, %v2751
      %v2810 = vsub.f32 %v2625, %v2766
      %v2811 = vsub.f32 %v2626, %v2781
      %v2812 = vsub.f32 %v2627, %v2796
      %v2813 = vsub.f32 %v2628, %v2691
      %v2814 = vsub.f32 %v2629, %v2706
      %v2815 = vsub.f32 %v2630, %v2721
      %v2816 = vsub.f32 %v2631, %v2736
      %v2817 = vsub.f32 %v2632, %v2751
      %v2818 = vsub.f32 %v2633, %v2766
      %v2819 = vsub.f32 %v2634, %v2781
      %v2820 = vsub.f32 %v2635, %v2796
      %v2821 = vsub.f32 %v2636, %v2691
      %v2822 = vsub.f32 %v2637, %v2706
      %v2823 = vsub.f32 %v2638, %v2721
      %v2824 = vsub.f32 %v2639, %v2736
      %v2825 = vsub.f32 %v2640, %v2751
      %v2826 = vsub.f32 %v2641, %v2766
      %v2827 = vsub.f32 %v2642, %v2781
      %v2828 = vsub.f32 %v2643, %v2796
      %v2829 = vsub.f32 %v2644, %v2691
      %v2830 = vsub.f32 %v2645, %v2706
      %v2831 = vsub.f32 %v2646, %v2721
      %v2832 = vsub.f32 %v2647, %v2736
      %v2833 = vsub.f32 %v2648, %v2751
      %v2834 = vsub.f32 %v2649, %v2766
      %v2835 = vsub.f32 %v2650, %v2781
      %v2836 = vsub.f32 %v2651, %v2796
      %v2837 = vsub.f32 %v2652, %v2691
      %v2838 = vsub.f32 %v2653, %v2706
      %v2839 = vsub.f32 %v2654, %v2721
      %v2840 = vsub.f32 %v2655, %v2736
      %v2841 = vsub.f32 %v2656, %v2751
      %v2842 = vsub.f32 %v2657, %v2766
      %v2843 = vsub.f32 %v2658, %v2781
      %v2844 = vsub.f32 %v2659, %v2796
      %v2845 = vsub.f32 %v2660, %v2691
      %v2846 = vsub.f32 %v2661, %v2706
      %v2847 = vsub.f32 %v2662, %v2721
      %v2848 = vsub.f32 %v2663, %v2736
      %v2849 = vsub.f32 %v2664, %v2751
      %v2850 = vsub.f32 %v2665, %v2766
      %v2851 = vsub.f32 %v2666, %v2781
      %v2852 = vsub.f32 %v2667, %v2796
      %v2853 = vsub.f32 %v2668, %v2691
      %v2854 = vsub.f32 %v2669, %v2706
      %v2855 = vsub.f32 %v2670, %v2721
      %v2856 = vsub.f32 %v2671, %v2736
      %v2857 = vsub.f32 %v2672, %v2751
      %v2858 = vsub.f32 %v2673, %v2766
      %v2859 = vsub.f32 %v2674, %v2781
      %v2860 = vsub.f32 %v2675, %v2796
      %v2861 = vmul.f32 %v2797, 1.442695
      %v2862 = vpow.pop %v2861
      %v2863 = vmul.f32 %v2798, 1.442695
      %v2864 = vpow.pop %v2863
      %v2865 = vmul.f32 %v2799, 1.442695
      %v2866 = vpow.pop %v2865
      %v2867 = vmul.f32 %v2800, 1.442695
      %v2868 = vpow.pop %v2867
      %v2869 = vmul.f32 %v2801, 1.442695
      %v2870 = vpow.pop %v2869
      %v2871 = vmul.f32 %v2802, 1.442695
      %v2872 = vpow.pop %v2871
      %v2873 = vmul.f32 %v2803, 1.442695
      %v2874 = vpow.pop %v2873
      %v2875 = vmul.f32 %v2804, 1.442695
      %v2876 = vpow.pop %v2875
      %v2877 = vmul.f32 %v2805, 1.442695
      %v2878 = vpow.pop %v2877
      %v2879 = vmul.f32 %v2806, 1.442695
      %v2880 = vpow.pop %v2879
      %v2881 = vmul.f32 %v2807, 1.442695
      %v2882 = vpow.pop %v2881
      %v2883 = vmul.f32 %v2808, 1.442695
      %v2884 = vpow.pop %v2883
      %v2885 = vmul.f32 %v2809, 1.442695
      %v2886 = vpow.pop %v2885
      %v2887 = vmul.f32 %v2810, 1.442695
      %v2888 = vpow.pop %v2887
      %v2889 = vmul.f32 %v2811, 1.442695
      %v2890 = vpow.pop %v2889
      %v2891 = vmul.f32 %v2812, 1.442695
      %v2892 = vpow.pop %v2891
      %v2893 = vmul.f32 %v2813, 1.442695
      %v2894 = vpow.pop %v2893
      %v2895 = vmul.f32 %v2814, 1.442695
      %v2896 = vpow.pop %v2895
      %v2897 = vmul.f32 %v2815, 1.442695
      %v2898 = vpow.pop %v2897
      %v2899 = vmul.f32 %v2816, 1.442695
      %v2900 = vpow.pop %v2899
      %v2901 = vmul.f32 %v2817, 1.442695
      %v2902 = vpow.pop %v2901
      %v2903 = vmul.f32 %v2818, 1.442695
      %v2904 = vpow.pop %v2903
      %v2905 = vmul.f32 %v2819, 1.442695
      %v2906 = vpow.pop %v2905
      %v2907 = vmul.f32 %v2820, 1.442695
      %v2908 = vpow.pop %v2907
      %v2909 = vmul.f32 %v2821, 1.442695
      %v2910 = vpow.pop %v2909
      %v2911 = vmul.f32 %v2822, 1.442695
      %v2912 = vpow.pop %v2911
      %v2913 = vmul.f32 %v2823, 1.442695
      %v2914 = vpow.pop %v2913
      %v2915 = vmul.f32 %v2824, 1.442695
      %v2916 = vpow.pop %v2915
      %v2917 = vmul.f32 %v2825, 1.442695
      %v2918 = vpow.pop %v2917
      %v2919 = vmul.f32 %v2826, 1.442695
      %v2920 = vpow.pop %v2919
      %v2921 = vmul.f32 %v2827, 1.442695
      %v2922 = vpow.pop %v2921
      %v2923 = vmul.f32 %v2828, 1.442695
      %v2924 = vpow.pop %v2923
      %v2925 = vmul.f32 %v2829, 1.442695
      %v2926 = vpow.pop %v2925
      %v2927 = vmul.f32 %v2830, 1.442695
      %v2928 = vpow.pop %v2927
      %v2929 = vmul.f32 %v2831, 1.442695
      %v2930 = vpow.pop %v2929
      %v2931 = vmul.f32 %v2832, 1.442695
      %v2932 = vpow.pop %v2931
      %v2933 = vmul.f32 %v2833, 1.442695
      %v2934 = vpow.pop %v2933
      %v2935 = vmul.f32 %v2834, 1.442695
      %v2936 = vpow.pop %v2935
      %v2937 = vmul.f32 %v2835, 1.442695
      %v2938 = vpow.pop %v2937
      %v2939 = vmul.f32 %v2836, 1.442695
      %v2940 = vpow.pop %v2939
      %v2941 = vmul.f32 %v2837, 1.442695
      %v2942 = vpow.pop %v2941
      %v2943 = vmul.f32 %v2838, 1.442695
      %v2944 = vpow.pop %v2943
      %v2945 = vmul.f32 %v2839, 1.442695
      %v2946 = vpow.pop %v2945
      %v2947 = vmul.f32 %v2840, 1.442695
      %v2948 = vpow.pop %v2947
      %v2949 = vmul.f32 %v2841, 1.442695
      %v2950 = vpow.pop %v2949
      %v2951 = vmul.f32 %v2842, 1.442695
      %v2952 = vpow.pop %v2951
      %v2953 = vmul.f32 %v2843, 1.442695
      %v2954 = vpow.pop %v2953
      %v2955 = vmul.f32 %v2844, 1.442695
      %v2956 = vpow.pop %v2955
      %v2957 = vmul.f32 %v2845, 1.442695
      %v2958 = vpow.pop %v2957
      %v2959 = vmul.f32 %v2846, 1.442695
      %v2960 = vpow.pop %v2959
      %v2961 = vmul.f32 %v2847, 1.442695
      %v2962 = vpow.pop %v2961
      %v2963 = vmul.f32 %v2848, 1.442695
      %v2964 = vpow.pop %v2963
      %v2965 = vmul.f32 %v2849, 1.442695
      %v2966 = vpow.pop %v2965
      %v2967 = vmul.f32 %v2850, 1.442695
      %v2968 = vpow.pop %v2967
      %v2969 = vmul.f32 %v2851, 1.442695
      %v2970 = vpow.pop %v2969
      %v2971 = vmul.f32 %v2852, 1.442695
      %v2972 = vpow.pop %v2971
      %v2973 = vmul.f32 %v2853, 1.442695
      %v2974 = vpow.pop %v2973
      %v2975 = vmul.f32 %v2854, 1.442695
      %v2976 = vpow.pop %v2975
      %v2977 = vmul.f32 %v2855, 1.442695
      %v2978 = vpow.pop %v2977
      %v2979 = vmul.f32 %v2856, 1.442695
      %v2980 = vpow.pop %v2979
      %v2981 = vmul.f32 %v2857, 1.442695
      %v2982 = vpow.pop %v2981
      %v2983 = vmul.f32 %v2858, 1.442695
      %v2984 = vpow.pop %v2983
      %v2985 = vmul.f32 %v2859, 1.442695
      %v2986 = vpow.pop %v2985
      %v2987 = vmul.f32 %v2860, 1.442695
      %v2988 = vpow.pop %v2987
      %v2989 = vsel %vm2676, %v2862, 0.0
      %v2990 = vsel %vm2676, %v2878, 0.0
      %v2991 = vadd.f32 %v2989, %v2990
      %v2992 = vsel %vm2676, %v2894, 0.0
      %v2993 = vadd.f32 %v2991, %v2992
      %v2994 = vsel %vm2676, %v2910, 0.0
      %v2995 = vadd.f32 %v2993, %v2994
      %v2996 = vsel %vm2676, %v2926, 0.0
      %v2997 = vadd.f32 %v2995, %v2996
      %v2998 = vsel %vm2676, %v2942, 0.0
      %v2999 = vadd.f32 %v2997, %v2998
      %v3000 = vsel %vm2676, %v2958, 0.0
      %v3001 = vadd.f32 %v2999, %v3000
      %v3002 = vsel %vm2676, %v2974, 0.0
      %v3003 = vadd.f32 %v3001, %v3002
      %v3004 = vsel %vm2676, %v2864, 0.0
      %v3005 = vsel %vm2676, %v2880, 0.0
      %v3006 = vadd.f32 %v3004, %v3005
      %v3007 = vsel %vm2676, %v2896, 0.0
      %v3008 = vadd.f32 %v3006, %v3007
      %v3009 = vsel %vm2676, %v2912, 0.0
      %v3010 = vadd.f32 %v3008, %v3009
      %v3011 = vsel %vm2676, %v2928, 0.0
      %v3012 = vadd.f32 %v3010, %v3011
      %v3013 = vsel %vm2676, %v2944, 0.0
      %v3014 = vadd.f32 %v3012, %v3013
      %v3015 = vsel %vm2676, %v2960, 0.0
      %v3016 = vadd.f32 %v3014, %v3015
      %v3017 = vsel %vm2676, %v2976, 0.0
      %v3018 = vadd.f32 %v3016, %v3017
      %v3019 = vsel %vm2676, %v2866, 0.0
      %v3020 = vsel %vm2676, %v2882, 0.0
      %v3021 = vadd.f32 %v3019, %v3020
      %v3022 = vsel %vm2676, %v2898, 0.0
      %v3023 = vadd.f32 %v3021, %v3022
      %v3024 = vsel %vm2676, %v2914, 0.0
      %v3025 = vadd.f32 %v3023, %v3024
      %v3026 = vsel %vm2676, %v2930, 0.0
      %v3027 = vadd.f32 %v3025, %v3026
      %v3028 = vsel %vm2676, %v2946, 0.0
      %v3029 = vadd.f32 %v3027, %v3028
      %v3030 = vsel %vm2676, %v2962, 0.0
      %v3031 = vadd.f32 %v3029, %v3030
      %v3032 = vsel %vm2676, %v2978, 0.0
      %v3033 = vadd.f32 %v3031, %v3032
      %v3034 = vsel %vm2676, %v2868, 0.0
      %v3035 = vsel %vm2676, %v2884, 0.0
      %v3036 = vadd.f32 %v3034, %v3035
      %v3037 = vsel %vm2676, %v2900, 0.0
      %v3038 = vadd.f32 %v3036, %v3037
      %v3039 = vsel %vm2676, %v2916, 0.0
      %v3040 = vadd.f32 %v3038, %v3039
      %v3041 = vsel %vm2676, %v2932, 0.0
      %v3042 = vadd.f32 %v3040, %v3041
      %v3043 = vsel %vm2676, %v2948, 0.0
      %v3044 = vadd.f32 %v3042, %v3043
      %v3045 = vsel %vm2676, %v2964, 0.0
      %v3046 = vadd.f32 %v3044, %v3045
      %v3047 = vsel %vm2676, %v2980, 0.0
      %v3048 = vadd.f32 %v3046, %v3047
      %v3049 = vsel %vm2676, %v2870, 0.0
      %v3050 = vsel %vm2676, %v2886, 0.0
      %v3051 = vadd.f32 %v3049, %v3050
      %v3052 = vsel %vm2676, %v2902, 0.0
      %v3053 = vadd.f32 %v3051, %v3052
      %v3054 = vsel %vm2676, %v2918, 0.0
      %v3055 = vadd.f32 %v3053, %v3054
      %v3056 = vsel %vm2676, %v2934, 0.0
      %v3057 = vadd.f32 %v3055, %v3056
      %v3058 = vsel %vm2676, %v2950, 0.0
      %v3059 = vadd.f32 %v3057, %v3058
      %v3060 = vsel %vm2676, %v2966, 0.0
      %v3061 = vadd.f32 %v3059, %v3060
      %v3062 = vsel %vm2676, %v2982, 0.0
      %v3063 = vadd.f32 %v3061, %v3062
      %v3064 = vsel %vm2676, %v2872, 0.0
      %v3065 = vsel %vm2676, %v2888, 0.0
      %v3066 = vadd.f32 %v3064, %v3065
      %v3067 = vsel %vm2676, %v2904, 0.0
      %v3068 = vadd.f32 %v3066, %v3067
      %v3069 = vsel %vm2676, %v2920, 0.0
      %v3070 = vadd.f32 %v3068, %v3069
      %v3071 = vsel %vm2676, %v2936, 0.0
      %v3072 = vadd.f32 %v3070, %v3071
      %v3073 = vsel %vm2676, %v2952, 0.0
      %v3074 = vadd.f32 %v3072, %v3073
      %v3075 = vsel %vm2676, %v2968, 0.0
      %v3076 = vadd.f32 %v3074, %v3075
      %v3077 = vsel %vm2676, %v2984, 0.0
      %v3078 = vadd.f32 %v3076, %v3077
      %v3079 = vsel %vm2676, %v2874, 0.0
      %v3080 = vsel %vm2676, %v2890, 0.0
      %v3081 = vadd.f32 %v3079, %v3080
      %v3082 = vsel %vm2676, %v2906, 0.0
      %v3083 = vadd.f32 %v3081, %v3082
      %v3084 = vsel %vm2676, %v2922, 0.0
      %v3085 = vadd.f32 %v3083, %v3084
      %v3086 = vsel %vm2676, %v2938, 0.0
      %v3087 = vadd.f32 %v3085, %v3086
      %v3088 = vsel %vm2676, %v2954, 0.0
      %v3089 = vadd.f32 %v3087, %v3088
      %v3090 = vsel %vm2676, %v2970, 0.0
      %v3091 = vadd.f32 %v3089, %v3090
      %v3092 = vsel %vm2676, %v2986, 0.0
      %v3093 = vadd.f32 %v3091, %v3092
      %v3094 = vsel %vm2676, %v2876, 0.0
      %v3095 = vsel %vm2676, %v2892, 0.0
      %v3096 = vadd.f32 %v3094, %v3095
      %v3097 = vsel %vm2676, %v2908, 0.0
      %v3098 = vadd.f32 %v3096, %v3097
      %v3099 = vsel %vm2676, %v2924, 0.0
      %v3100 = vadd.f32 %v3098, %v3099
      %v3101 = vsel %vm2676, %v2940, 0.0
      %v3102 = vadd.f32 %v3100, %v3101
      %v3103 = vsel %vm2676, %v2956, 0.0
      %v3104 = vadd.f32 %v3102, %v3103
      %v3105 = vsel %vm2676, %v2972, 0.0
      %v3106 = vadd.f32 %v3104, %v3105
      %v3107 = vsel %vm2676, %v2988, 0.0
      %v3108 = vadd.f32 %v3106, %v3107
      %v3109 = vrcp.pop %v3003
      %v3110 = vrcp.pop %v3018
      %v3111 = vrcp.pop %v3033
      %v3112 = vrcp.pop %v3048
      %v3113 = vrcp.pop %v3063
      %v3114 = vrcp.pop %v3078
      %v3115 = vrcp.pop %v3093
      %v3116 = vrcp.pop %v3108
      %v3117 = vmul.f32 %v2862, %v3109
      %v3118 = vmul.f32 %v2864, %v3110
      %v3119 = vmul.f32 %v2866, %v3111
      %v3120 = vmul.f32 %v2868, %v3112
      %v3121 = vmul.f32 %v2870, %v3113
      %v3122 = vmul.f32 %v2872, %v3114
      %v3123 = vmul.f32 %v2874, %v3115
      %v3124 = vmul.f32 %v2876, %v3116
      %v3125 = vmul.f32 %v2878, %v3109
      %v3126 = vmul.f32 %v2880, %v3110
      %v3127 = vmul.f32 %v2882, %v3111
      %v3128 = vmul.f32 %v2884, %v3112
      %v3129 = vmul.f32 %v2886, %v3113
      %v3130 = vmul.f32 %v2888, %v3114
      %v3131 = vmul.f32 %v2890, %v3115
      %v3132 = vmul.f32 %v2892, %v3116
      %v3133 = vmul.f32 %v2894, %v3109
      %v3134 = vmul.f32 %v2896, %v3110
      %v3135 = vmul.f32 %v2898, %v3111
      %v3136 = vmul.f32 %v2900, %v3112
      %v3137 = vmul.f32 %v2902, %v3113
      %v3138 = vmul.f32 %v2904, %v3114
      %v3139 = vmul.f32 %v2906, %v3115
      %v3140 = vmul.f32 %v2908, %v3116
      %v3141 = vmul.f32 %v2910, %v3109
      %v3142 = vmul.f32 %v2912, %v3110
      %v3143 = vmul.f32 %v2914, %v3111
      %v3144 = vmul.f32 %v2916, %v3112
      %v3145 = vmul.f32 %v2918, %v3113
      %v3146 = vmul.f32 %v2920, %v3114
      %v3147 = vmul.f32 %v2922, %v3115
      %v3148 = vmul.f32 %v2924, %v3116
      %v3149 = vmul.f32 %v2926, %v3109
      %v3150 = vmul.f32 %v2928, %v3110
      %v3151 = vmul.f32 %v2930, %v3111
      %v3152 = vmul.f32 %v2932, %v3112
      %v3153 = vmul.f32 %v2934, %v3113
      %v3154 = vmul.f32 %v2936, %v3114
      %v3155 = vmul.f32 %v2938, %v3115
      %v3156 = vmul.f32 %v2940, %v3116
      %v3157 = vmul.f32 %v2942, %v3109
      %v3158 = vmul.f32 %v2944, %v3110
      %v3159 = vmul.f32 %v2946, %v3111
      %v3160 = vmul.f32 %v2948, %v3112
      %v3161 = vmul.f32 %v2950, %v3113
      %v3162 = vmul.f32 %v2952, %v3114
      %v3163 = vmul.f32 %v2954, %v3115
      %v3164 = vmul.f32 %v2956, %v3116
      %v3165 = vmul.f32 %v2958, %v3109
      %v3166 = vmul.f32 %v2960, %v3110
      %v3167 = vmul.f32 %v2962, %v3111
      %v3168 = vmul.f32 %v2964, %v3112
      %v3169 = vmul.f32 %v2966, %v3113
      %v3170 = vmul.f32 %v2968, %v3114
      %v3171 = vmul.f32 %v2970, %v3115
      %v3172 = vmul.f32 %v2972, %v3116
      %v3173 = vmul.f32 %v2974, %v3109
      %v3174 = vmul.f32 %v2976, %v3110
      %v3175 = vmul.f32 %v2978, %v3111
      %v3176 = vmul.f32 %v2980, %v3112
      %v3177 = vmul.f32 %v2982, %v3113
      %v3178 = vmul.f32 %v2984, %v3114
      %v3179 = vmul.f32 %v2986, %v3115
      %v3180 = vmul.f32 %v2988, %v3116
      %v3181 = vpack.c.bf16 %v3118, %v3117
      %v3182 = vpack.c.bf16 %v3120, %v3119
      %v3183 = vpack.c.bf16 %v3122, %v3121
      %v3184 = vpack.c.bf16 %v3124, %v3123
      %v3185 = vpack.c.bf16 %v3126, %v3125
      %v3186 = vpack.c.bf16 %v3128, %v3127
      %v3187 = vpack.c.bf16 %v3130, %v3129
      %v3188 = vpack.c.bf16 %v3132, %v3131
      %v3189 = vpack.c.bf16 %v3134, %v3133
      %v3190 = vpack.c.bf16 %v3136, %v3135
      %v3191 = vpack.c.bf16 %v3138, %v3137
      %v3192 = vpack.c.bf16 %v3140, %v3139
      %v3193 = vpack.c.bf16 %v3142, %v3141
      %v3194 = vpack.c.bf16 %v3144, %v3143
      %v3195 = vpack.c.bf16 %v3146, %v3145
      %v3196 = vpack.c.bf16 %v3148, %v3147
      %v3197 = vpack.c.bf16 %v3150, %v3149
      %v3198 = vpack.c.bf16 %v3152, %v3151
      %v3199 = vpack.c.bf16 %v3154, %v3153
      %v3200 = vpack.c.bf16 %v3156, %v3155
      %v3201 = vpack.c.bf16 %v3158, %v3157
      %v3202 = vpack.c.bf16 %v3160, %v3159
      %v3203 = vpack.c.bf16 %v3162, %v3161
      %v3204 = vpack.c.bf16 %v3164, %v3163
      %v3205 = vpack.c.bf16 %v3166, %v3165
      %v3206 = vpack.c.bf16 %v3168, %v3167
      %v3207 = vpack.c.bf16 %v3170, %v3169
      %v3208 = vpack.c.bf16 %v3172, %v3171
      %v3209 = vpack.c.bf16 %v3174, %v3173
      %v3210 = vpack.c.bf16 %v3176, %v3175
      %v3211 = vpack.c.bf16 %v3178, %v3177
      %v3212 = vpack.c.bf16 %v3180, %v3179
      %v3214 = vsel %vm2676, %v3181, 0
      %v3217 = vsel %vm2676, %v3182, 0
      %v3220 = vsel %vm2676, %v3183, 0
      %v3223 = vsel %vm2676, %v3184, 0
      %3225 = vmatprep.subr.bf16.mxu0 0
      %3226 = vmatpush1.bf16.msra.mxu0 0
      %3227 = vmatprep.subr.bf16.mxu0 0
      %3228 = vmatpush1.bf16.msra.mxu0 0
      %3229 = vmatprep.subr.bf16.mxu0 0
      %3230 = vmatpush1.bf16.msra.mxu0 0
      %3231 = vmatprep.subr.bf16.mxu0 0
      %3232 = vmatpush1.bf16.msra.mxu0 0
      %3233 = vmatprep.subr.bf16.mxu0 0
      %3234 = vmatpush1.bf16.msra.mxu0 %v2063
      %3235 = vmatprep.subr.bf16.mxu0 0
      %3236 = vmatpush1.bf16.msra.mxu0 %v2062
      %3237 = vmatprep.subr.bf16.mxu0 0
      %3238 = vmatpush1.bf16.msra.mxu0 %v2061
      %3239 = vmatprep.subr.bf16.mxu0 0
      %3240 = vmatpush1.bf16.msra.mxu0 %v2060
      %3241 = vmatprep.subr.bf16.mxu0 0
      %3242 = vmatpush2.bf16.msra.mxu0 0
      %3243 = vmatprep.subr.bf16.mxu0 0
      %3244 = vmatpush2.bf16.msra.mxu0 0
      %3245 = vmatprep.subr.bf16.mxu0 0
      %3246 = vmatpush2.bf16.msra.mxu0 0
      %3247 = vmatprep.subr.bf16.mxu0 0
      %3248 = vmatpush2.bf16.msra.mxu0 0
      %3249 = vmatprep.subr.bf16.mxu0 0
      %3250 = vmatpush2.bf16.msra.mxu0 0
      %3251 = vmatprep.subr.bf16.mxu0 0
      %3252 = vmatpush2.bf16.msra.mxu0 0
      %3253 = vmatprep.subr.bf16.mxu0 0
      %3254 = vmatpush2.bf16.msra.mxu0 0
      %3255 = vmatprep.subr.bf16.mxu0 0
      %3256 = vmatpush2.bf16.msra.mxu0 0
      %3257 = vmatprep.mubr.bf16.mxu0 0
      %3258 = vmatmul.mubr.bf16.gmra.mxu0 %v3214
      %v3259 = vpop.f32.mrf.mxu0
      %v3260 = vadd.f32 0.0, %v3259
      %v3261 = vpop.f32.mrf.mxu0
      %v3262 = vpop.f32.mrf.mxu0
      %v3263 = vadd.f32 0.0, %v3262
      %v3264 = vpop.f32.mrf.mxu0
      %3265 = vmatprep.mubr.bf16.mxu0 0
      %3266 = vmatmul.mubr.bf16.gmra.mxu0 %v3217
      %v3267 = vpop.f32.mrf.mxu0
      %v3268 = vadd.f32 0.0, %v3267
      %v3269 = vpop.f32.mrf.mxu0
      %v3270 = vpop.f32.mrf.mxu0
      %v3271 = vadd.f32 0.0, %v3270
      %v3272 = vpop.f32.mrf.mxu0
      %3273 = vmatprep.mubr.bf16.mxu0 0
      %3274 = vmatmul.mubr.bf16.gmra.mxu0 %v3220
      %v3275 = vpop.f32.mrf.mxu0
      %v3276 = vadd.f32 0.0, %v3275
      %v3277 = vpop.f32.mrf.mxu0
      %v3278 = vpop.f32.mrf.mxu0
      %v3279 = vadd.f32 0.0, %v3278
      %v3280 = vpop.f32.mrf.mxu0
      %3281 = vmatprep.mubr.bf16.mxu0 0
      %3282 = vmatmul.mubr.bf16.gmra.mxu0 %v3223
      %v3283 = vpop.f32.mrf.mxu0
      %v3284 = vadd.f32 0.0, %v3283
      %v3285 = vpop.f32.mrf.mxu0
      %v3286 = vpop.f32.mrf.mxu0
      %v3287 = vadd.f32 0.0, %v3286
      %v3288 = vpop.f32.mrf.mxu0
      %3289 = vdwg.mxu0
      %v3291 = vsel %vm2676, %v3185, 0
      %v3294 = vsel %vm2676, %v3186, 0
      %v3297 = vsel %vm2676, %v3187, 0
      %v3300 = vsel %vm2676, %v3188, 0
      %3302 = vmatprep.subr.bf16.mxu0 0
      %3303 = vmatpush1.bf16.msra.mxu0 0
      %3304 = vmatprep.subr.bf16.mxu0 0
      %3305 = vmatpush1.bf16.msra.mxu0 0
      %3306 = vmatprep.subr.bf16.mxu0 0
      %3307 = vmatpush1.bf16.msra.mxu0 0
      %3308 = vmatprep.subr.bf16.mxu0 0
      %3309 = vmatpush1.bf16.msra.mxu0 0
      %3310 = vmatprep.subr.bf16.mxu0 0
      %3311 = vmatpush1.bf16.msra.mxu0 %v2067
      %3312 = vmatprep.subr.bf16.mxu0 0
      %3313 = vmatpush1.bf16.msra.mxu0 %v2066
      %3314 = vmatprep.subr.bf16.mxu0 0
      %3315 = vmatpush1.bf16.msra.mxu0 %v2065
      %3316 = vmatprep.subr.bf16.mxu0 0
      %3317 = vmatpush1.bf16.msra.mxu0 %v2064
      %3318 = vmatprep.subr.bf16.mxu0 0
      %3319 = vmatpush2.bf16.msra.mxu0 0
      %3320 = vmatprep.subr.bf16.mxu0 0
      %3321 = vmatpush2.bf16.msra.mxu0 0
      %3322 = vmatprep.subr.bf16.mxu0 0
      %3323 = vmatpush2.bf16.msra.mxu0 0
      %3324 = vmatprep.subr.bf16.mxu0 0
      %3325 = vmatpush2.bf16.msra.mxu0 0
      %3326 = vmatprep.subr.bf16.mxu0 0
      %3327 = vmatpush2.bf16.msra.mxu0 0
      %3328 = vmatprep.subr.bf16.mxu0 0
      %3329 = vmatpush2.bf16.msra.mxu0 0
      %3330 = vmatprep.subr.bf16.mxu0 0
      %3331 = vmatpush2.bf16.msra.mxu0 0
      %3332 = vmatprep.subr.bf16.mxu0 0
      %3333 = vmatpush2.bf16.msra.mxu0 0
      %3334 = vmatprep.mubr.bf16.mxu0 0
      %3335 = vmatmul.mubr.bf16.gmra.mxu0 %v3291
      %v3336 = vpop.f32.mrf.mxu0
      %v3337 = vadd.f32 0.0, %v3336
      %v3338 = vpop.f32.mrf.mxu0
      %v3339 = vpop.f32.mrf.mxu0
      %v3340 = vadd.f32 0.0, %v3339
      %v3341 = vpop.f32.mrf.mxu0
      %3342 = vmatprep.mubr.bf16.mxu0 0
      %3343 = vmatmul.mubr.bf16.gmra.mxu0 %v3294
      %v3344 = vpop.f32.mrf.mxu0
      %v3345 = vadd.f32 0.0, %v3344
      %v3346 = vpop.f32.mrf.mxu0
      %v3347 = vpop.f32.mrf.mxu0
      %v3348 = vadd.f32 0.0, %v3347
      %v3349 = vpop.f32.mrf.mxu0
      %3350 = vmatprep.mubr.bf16.mxu0 0
      %3351 = vmatmul.mubr.bf16.gmra.mxu0 %v3297
      %v3352 = vpop.f32.mrf.mxu0
      %v3353 = vadd.f32 0.0, %v3352
      %v3354 = vpop.f32.mrf.mxu0
      %v3355 = vpop.f32.mrf.mxu0
      %v3356 = vadd.f32 0.0, %v3355
      %v3357 = vpop.f32.mrf.mxu0
      %3358 = vmatprep.mubr.bf16.mxu0 0
      %3359 = vmatmul.mubr.bf16.gmra.mxu0 %v3300
      %v3360 = vpop.f32.mrf.mxu0
      %v3361 = vadd.f32 0.0, %v3360
      %v3362 = vpop.f32.mrf.mxu0
      %v3363 = vpop.f32.mrf.mxu0
      %v3364 = vadd.f32 0.0, %v3363
      %v3365 = vpop.f32.mrf.mxu0
      %3366 = vdwg.mxu0
      %v3368 = vsel %vm2676, %v3189, 0
      %v3371 = vsel %vm2676, %v3190, 0
      %v3374 = vsel %vm2676, %v3191, 0
      %v3377 = vsel %vm2676, %v3192, 0
      %3379 = vmatprep.subr.bf16.mxu0 0
      %3380 = vmatpush1.bf16.msra.mxu0 0
      %3381 = vmatprep.subr.bf16.mxu0 0
      %3382 = vmatpush1.bf16.msra.mxu0 0
      %3383 = vmatprep.subr.bf16.mxu0 0
      %3384 = vmatpush1.bf16.msra.mxu0 0
      %3385 = vmatprep.subr.bf16.mxu0 0
      %3386 = vmatpush1.bf16.msra.mxu0 0
      %3387 = vmatprep.subr.bf16.mxu0 0
      %3388 = vmatpush1.bf16.msra.mxu0 %v2071
      %3389 = vmatprep.subr.bf16.mxu0 0
      %3390 = vmatpush1.bf16.msra.mxu0 %v2070
      %3391 = vmatprep.subr.bf16.mxu0 0
      %3392 = vmatpush1.bf16.msra.mxu0 %v2069
      %3393 = vmatprep.subr.bf16.mxu0 0
      %3394 = vmatpush1.bf16.msra.mxu0 %v2068
      %3395 = vmatprep.subr.bf16.mxu0 0
      %3396 = vmatpush2.bf16.msra.mxu0 0
      %3397 = vmatprep.subr.bf16.mxu0 0
      %3398 = vmatpush2.bf16.msra.mxu0 0
      %3399 = vmatprep.subr.bf16.mxu0 0
      %3400 = vmatpush2.bf16.msra.mxu0 0
      %3401 = vmatprep.subr.bf16.mxu0 0
      %3402 = vmatpush2.bf16.msra.mxu0 0
      %3403 = vmatprep.subr.bf16.mxu0 0
      %3404 = vmatpush2.bf16.msra.mxu0 0
      %3405 = vmatprep.subr.bf16.mxu0 0
      %3406 = vmatpush2.bf16.msra.mxu0 0
      %3407 = vmatprep.subr.bf16.mxu0 0
      %3408 = vmatpush2.bf16.msra.mxu0 0
      %3409 = vmatprep.subr.bf16.mxu0 0
      %3410 = vmatpush2.bf16.msra.mxu0 0
      %3411 = vmatprep.mubr.bf16.mxu0 0
      %3412 = vmatmul.mubr.bf16.gmra.mxu0 %v3368
      %v3413 = vpop.f32.mrf.mxu0
      %v3414 = vadd.f32 0.0, %v3413
      %v3415 = vpop.f32.mrf.mxu0
      %v3416 = vpop.f32.mrf.mxu0
      %v3417 = vadd.f32 0.0, %v3416
      %v3418 = vpop.f32.mrf.mxu0
      %3419 = vmatprep.mubr.bf16.mxu0 0
      %3420 = vmatmul.mubr.bf16.gmra.mxu0 %v3371
      %v3421 = vpop.f32.mrf.mxu0
      %v3422 = vadd.f32 0.0, %v3421
      %v3423 = vpop.f32.mrf.mxu0
      %v3424 = vpop.f32.mrf.mxu0
      %v3425 = vadd.f32 0.0, %v3424
      %v3426 = vpop.f32.mrf.mxu0
      %3427 = vmatprep.mubr.bf16.mxu0 0
      %3428 = vmatmul.mubr.bf16.gmra.mxu0 %v3374
      %v3429 = vpop.f32.mrf.mxu0
      %v3430 = vadd.f32 0.0, %v3429
      %v3431 = vpop.f32.mrf.mxu0
      %v3432 = vpop.f32.mrf.mxu0
      %v3433 = vadd.f32 0.0, %v3432
      %v3434 = vpop.f32.mrf.mxu0
      %3435 = vmatprep.mubr.bf16.mxu0 0
      %3436 = vmatmul.mubr.bf16.gmra.mxu0 %v3377
      %v3437 = vpop.f32.mrf.mxu0
      %v3438 = vadd.f32 0.0, %v3437
      %v3439 = vpop.f32.mrf.mxu0
      %v3440 = vpop.f32.mrf.mxu0
      %v3441 = vadd.f32 0.0, %v3440
      %v3442 = vpop.f32.mrf.mxu0
      %3443 = vdwg.mxu0
      %v3445 = vsel %vm2676, %v3193, 0
      %v3448 = vsel %vm2676, %v3194, 0
      %v3451 = vsel %vm2676, %v3195, 0
      %v3454 = vsel %vm2676, %v3196, 0
      %3456 = vmatprep.subr.bf16.mxu0 0
      %3457 = vmatpush1.bf16.msra.mxu0 0
      %3458 = vmatprep.subr.bf16.mxu0 0
      %3459 = vmatpush1.bf16.msra.mxu0 0
      %3460 = vmatprep.subr.bf16.mxu0 0
      %3461 = vmatpush1.bf16.msra.mxu0 0
      %3462 = vmatprep.subr.bf16.mxu0 0
      %3463 = vmatpush1.bf16.msra.mxu0 0
      %3464 = vmatprep.subr.bf16.mxu0 0
      %3465 = vmatpush1.bf16.msra.mxu0 %v2075
      %3466 = vmatprep.subr.bf16.mxu0 0
      %3467 = vmatpush1.bf16.msra.mxu0 %v2074
      %3468 = vmatprep.subr.bf16.mxu0 0
      %3469 = vmatpush1.bf16.msra.mxu0 %v2073
      %3470 = vmatprep.subr.bf16.mxu0 0
      %3471 = vmatpush1.bf16.msra.mxu0 %v2072
      %3472 = vmatprep.subr.bf16.mxu0 0
      %3473 = vmatpush2.bf16.msra.mxu0 0
      %3474 = vmatprep.subr.bf16.mxu0 0
      %3475 = vmatpush2.bf16.msra.mxu0 0
      %3476 = vmatprep.subr.bf16.mxu0 0
      %3477 = vmatpush2.bf16.msra.mxu0 0
      %3478 = vmatprep.subr.bf16.mxu0 0
      %3479 = vmatpush2.bf16.msra.mxu0 0
      %3480 = vmatprep.subr.bf16.mxu0 0
      %3481 = vmatpush2.bf16.msra.mxu0 0
      %3482 = vmatprep.subr.bf16.mxu0 0
      %3483 = vmatpush2.bf16.msra.mxu0 0
      %3484 = vmatprep.subr.bf16.mxu0 0
      %3485 = vmatpush2.bf16.msra.mxu0 0
      %3486 = vmatprep.subr.bf16.mxu0 0
      %3487 = vmatpush2.bf16.msra.mxu0 0
      %3488 = vmatprep.mubr.bf16.mxu0 0
      %3489 = vmatmul.mubr.bf16.gmra.mxu0 %v3445
      %v3490 = vpop.f32.mrf.mxu0
      %v3491 = vadd.f32 0.0, %v3490
      %v3492 = vpop.f32.mrf.mxu0
      %v3493 = vpop.f32.mrf.mxu0
      %v3494 = vadd.f32 0.0, %v3493
      %v3495 = vpop.f32.mrf.mxu0
      %3496 = vmatprep.mubr.bf16.mxu0 0
      %3497 = vmatmul.mubr.bf16.gmra.mxu0 %v3448
      %v3498 = vpop.f32.mrf.mxu0
      %v3499 = vadd.f32 0.0, %v3498
      %v3500 = vpop.f32.mrf.mxu0
      %v3501 = vpop.f32.mrf.mxu0
      %v3502 = vadd.f32 0.0, %v3501
      %v3503 = vpop.f32.mrf.mxu0
      %3504 = vmatprep.mubr.bf16.mxu0 0
      %3505 = vmatmul.mubr.bf16.gmra.mxu0 %v3451
      %v3506 = vpop.f32.mrf.mxu0
      %v3507 = vadd.f32 0.0, %v3506
      %v3508 = vpop.f32.mrf.mxu0
      %v3509 = vpop.f32.mrf.mxu0
      %v3510 = vadd.f32 0.0, %v3509
      %v3511 = vpop.f32.mrf.mxu0
      %3512 = vmatprep.mubr.bf16.mxu0 0
      %3513 = vmatmul.mubr.bf16.gmra.mxu0 %v3454
      %v3514 = vpop.f32.mrf.mxu0
      %v3515 = vadd.f32 0.0, %v3514
      %v3516 = vpop.f32.mrf.mxu0
      %v3517 = vpop.f32.mrf.mxu0
      %v3518 = vadd.f32 0.0, %v3517
      %v3519 = vpop.f32.mrf.mxu0
      %3520 = vdwg.mxu0
      %v3522 = vsel %vm2676, %v3197, 0
      %v3525 = vsel %vm2676, %v3198, 0
      %v3528 = vsel %vm2676, %v3199, 0
      %v3531 = vsel %vm2676, %v3200, 0
      %3533 = vmatprep.subr.bf16.mxu0 0
      %3534 = vmatpush1.bf16.msra.mxu0 0
      %3535 = vmatprep.subr.bf16.mxu0 0
      %3536 = vmatpush1.bf16.msra.mxu0 0
      %3537 = vmatprep.subr.bf16.mxu0 0
      %3538 = vmatpush1.bf16.msra.mxu0 0
      %3539 = vmatprep.subr.bf16.mxu0 0
      %3540 = vmatpush1.bf16.msra.mxu0 0
      %3541 = vmatprep.subr.bf16.mxu0 0
      %3542 = vmatpush1.bf16.msra.mxu0 %v2079
      %3543 = vmatprep.subr.bf16.mxu0 0
      %3544 = vmatpush1.bf16.msra.mxu0 %v2078
      %3545 = vmatprep.subr.bf16.mxu0 0
      %3546 = vmatpush1.bf16.msra.mxu0 %v2077
      %3547 = vmatprep.subr.bf16.mxu0 0
      %3548 = vmatpush1.bf16.msra.mxu0 %v2076
      %3549 = vmatprep.subr.bf16.mxu0 0
      %3550 = vmatpush2.bf16.msra.mxu0 0
      %3551 = vmatprep.subr.bf16.mxu0 0
      %3552 = vmatpush2.bf16.msra.mxu0 0
      %3553 = vmatprep.subr.bf16.mxu0 0
      %3554 = vmatpush2.bf16.msra.mxu0 0
      %3555 = vmatprep.subr.bf16.mxu0 0
      %3556 = vmatpush2.bf16.msra.mxu0 0
      %3557 = vmatprep.subr.bf16.mxu0 0
      %3558 = vmatpush2.bf16.msra.mxu0 0
      %3559 = vmatprep.subr.bf16.mxu0 0
      %3560 = vmatpush2.bf16.msra.mxu0 0
      %3561 = vmatprep.subr.bf16.mxu0 0
      %3562 = vmatpush2.bf16.msra.mxu0 0
      %3563 = vmatprep.subr.bf16.mxu0 0
      %3564 = vmatpush2.bf16.msra.mxu0 0
      %3565 = vmatprep.mubr.bf16.mxu0 0
      %3566 = vmatmul.mubr.bf16.gmra.mxu0 %v3522
      %v3567 = vpop.f32.mrf.mxu0
      %v3568 = vadd.f32 0.0, %v3567
      %v3569 = vpop.f32.mrf.mxu0
      %v3570 = vpop.f32.mrf.mxu0
      %v3571 = vadd.f32 0.0, %v3570
      %v3572 = vpop.f32.mrf.mxu0
      %3573 = vmatprep.mubr.bf16.mxu0 0
      %3574 = vmatmul.mubr.bf16.gmra.mxu0 %v3525
      %v3575 = vpop.f32.mrf.mxu0
      %v3576 = vadd.f32 0.0, %v3575
      %v3577 = vpop.f32.mrf.mxu0
      %v3578 = vpop.f32.mrf.mxu0
      %v3579 = vadd.f32 0.0, %v3578
      %v3580 = vpop.f32.mrf.mxu0
      %3581 = vmatprep.mubr.bf16.mxu0 0
      %3582 = vmatmul.mubr.bf16.gmra.mxu0 %v3528
      %v3583 = vpop.f32.mrf.mxu0
      %v3584 = vadd.f32 0.0, %v3583
      %v3585 = vpop.f32.mrf.mxu0
      %v3586 = vpop.f32.mrf.mxu0
      %v3587 = vadd.f32 0.0, %v3586
      %v3588 = vpop.f32.mrf.mxu0
      %3589 = vmatprep.mubr.bf16.mxu0 0
      %3590 = vmatmul.mubr.bf16.gmra.mxu0 %v3531
      %v3591 = vpop.f32.mrf.mxu0
      %v3592 = vadd.f32 0.0, %v3591
      %v3593 = vpop.f32.mrf.mxu0
      %v3594 = vpop.f32.mrf.mxu0
      %v3595 = vadd.f32 0.0, %v3594
      %v3596 = vpop.f32.mrf.mxu0
      %3597 = vdwg.mxu0
      %v3599 = vsel %vm2676, %v3201, 0
      %v3602 = vsel %vm2676, %v3202, 0
      %v3605 = vsel %vm2676, %v3203, 0
      %v3608 = vsel %vm2676, %v3204, 0
      %3610 = vmatprep.subr.bf16.mxu0 0
      %3611 = vmatpush1.bf16.msra.mxu0 0
      %3612 = vmatprep.subr.bf16.mxu0 0
      %3613 = vmatpush1.bf16.msra.mxu0 0
      %3614 = vmatprep.subr.bf16.mxu0 0
      %3615 = vmatpush1.bf16.msra.mxu0 0
      %3616 = vmatprep.subr.bf16.mxu0 0
      %3617 = vmatpush1.bf16.msra.mxu0 0
      %3618 = vmatprep.subr.bf16.mxu0 0
      %3619 = vmatpush1.bf16.msra.mxu0 %v2083
      %3620 = vmatprep.subr.bf16.mxu0 0
      %3621 = vmatpush1.bf16.msra.mxu0 %v2082
      %3622 = vmatprep.subr.bf16.mxu0 0
      %3623 = vmatpush1.bf16.msra.mxu0 %v2081
      %3624 = vmatprep.subr.bf16.mxu0 0
      %3625 = vmatpush1.bf16.msra.mxu0 %v2080
      %3626 = vmatprep.subr.bf16.mxu0 0
      %3627 = vmatpush2.bf16.msra.mxu0 0
      %3628 = vmatprep.subr.bf16.mxu0 0
      %3629 = vmatpush2.bf16.msra.mxu0 0
      %3630 = vmatprep.subr.bf16.mxu0 0
      %3631 = vmatpush2.bf16.msra.mxu0 0
      %3632 = vmatprep.subr.bf16.mxu0 0
      %3633 = vmatpush2.bf16.msra.mxu0 0
      %3634 = vmatprep.subr.bf16.mxu0 0
      %3635 = vmatpush2.bf16.msra.mxu0 0
      %3636 = vmatprep.subr.bf16.mxu0 0
      %3637 = vmatpush2.bf16.msra.mxu0 0
      %3638 = vmatprep.subr.bf16.mxu0 0
      %3639 = vmatpush2.bf16.msra.mxu0 0
      %3640 = vmatprep.subr.bf16.mxu0 0
      %3641 = vmatpush2.bf16.msra.mxu0 0
      %3642 = vmatprep.mubr.bf16.mxu0 0
      %3643 = vmatmul.mubr.bf16.gmra.mxu0 %v3599
      %v3644 = vpop.f32.mrf.mxu0
      %v3645 = vadd.f32 0.0, %v3644
      %v3646 = vpop.f32.mrf.mxu0
      %v3647 = vpop.f32.mrf.mxu0
      %v3648 = vadd.f32 0.0, %v3647
      %v3649 = vpop.f32.mrf.mxu0
      %3650 = vmatprep.mubr.bf16.mxu0 0
      %3651 = vmatmul.mubr.bf16.gmra.mxu0 %v3602
      %v3652 = vpop.f32.mrf.mxu0
      %v3653 = vadd.f32 0.0, %v3652
      %v3654 = vpop.f32.mrf.mxu0
      %v3655 = vpop.f32.mrf.mxu0
      %v3656 = vadd.f32 0.0, %v3655
      %v3657 = vpop.f32.mrf.mxu0
      %3658 = vmatprep.mubr.bf16.mxu0 0
      %3659 = vmatmul.mubr.bf16.gmra.mxu0 %v3605
      %v3660 = vpop.f32.mrf.mxu0
      %v3661 = vadd.f32 0.0, %v3660
      %v3662 = vpop.f32.mrf.mxu0
      %v3663 = vpop.f32.mrf.mxu0
      %v3664 = vadd.f32 0.0, %v3663
      %v3665 = vpop.f32.mrf.mxu0
      %3666 = vmatprep.mubr.bf16.mxu0 0
      %3667 = vmatmul.mubr.bf16.gmra.mxu0 %v3608
      %v3668 = vpop.f32.mrf.mxu0
      %v3669 = vadd.f32 0.0, %v3668
      %v3670 = vpop.f32.mrf.mxu0
      %v3671 = vpop.f32.mrf.mxu0
      %v3672 = vadd.f32 0.0, %v3671
      %v3673 = vpop.f32.mrf.mxu0
      %3674 = vdwg.mxu0
      %v3676 = vsel %vm2676, %v3205, 0
      %v3679 = vsel %vm2676, %v3206, 0
      %v3682 = vsel %vm2676, %v3207, 0
      %v3685 = vsel %vm2676, %v3208, 0
      %3687 = vmatprep.subr.bf16.mxu0 0
      %3688 = vmatpush1.bf16.msra.mxu0 0
      %3689 = vmatprep.subr.bf16.mxu0 0
      %3690 = vmatpush1.bf16.msra.mxu0 0
      %3691 = vmatprep.subr.bf16.mxu0 0
      %3692 = vmatpush1.bf16.msra.mxu0 0
      %3693 = vmatprep.subr.bf16.mxu0 0
      %3694 = vmatpush1.bf16.msra.mxu0 0
      %3695 = vmatprep.subr.bf16.mxu0 0
      %3696 = vmatpush1.bf16.msra.mxu0 %v2087
      %3697 = vmatprep.subr.bf16.mxu0 0
      %3698 = vmatpush1.bf16.msra.mxu0 %v2086
      %3699 = vmatprep.subr.bf16.mxu0 0
      %3700 = vmatpush1.bf16.msra.mxu0 %v2085
      %3701 = vmatprep.subr.bf16.mxu0 0
      %3702 = vmatpush1.bf16.msra.mxu0 %v2084
      %3703 = vmatprep.subr.bf16.mxu0 0
      %3704 = vmatpush2.bf16.msra.mxu0 0
      %3705 = vmatprep.subr.bf16.mxu0 0
      %3706 = vmatpush2.bf16.msra.mxu0 0
      %3707 = vmatprep.subr.bf16.mxu0 0
      %3708 = vmatpush2.bf16.msra.mxu0 0
      %3709 = vmatprep.subr.bf16.mxu0 0
      %3710 = vmatpush2.bf16.msra.mxu0 0
      %3711 = vmatprep.subr.bf16.mxu0 0
      %3712 = vmatpush2.bf16.msra.mxu0 0
      %3713 = vmatprep.subr.bf16.mxu0 0
      %3714 = vmatpush2.bf16.msra.mxu0 0
      %3715 = vmatprep.subr.bf16.mxu0 0
      %3716 = vmatpush2.bf16.msra.mxu0 0
      %3717 = vmatprep.subr.bf16.mxu0 0
      %3718 = vmatpush2.bf16.msra.mxu0 0
      %3719 = vmatprep.mubr.bf16.mxu0 0
      %3720 = vmatmul.mubr.bf16.gmra.mxu0 %v3676
      %v3721 = vpop.f32.mrf.mxu0
      %v3722 = vadd.f32 0.0, %v3721
      %v3723 = vpop.f32.mrf.mxu0
      %v3724 = vpop.f32.mrf.mxu0
      %v3725 = vadd.f32 0.0, %v3724
      %v3726 = vpop.f32.mrf.mxu0
      %3727 = vmatprep.mubr.bf16.mxu0 0
      %3728 = vmatmul.mubr.bf16.gmra.mxu0 %v3679
      %v3729 = vpop.f32.mrf.mxu0
      %v3730 = vadd.f32 0.0, %v3729
      %v3731 = vpop.f32.mrf.mxu0
      %v3732 = vpop.f32.mrf.mxu0
      %v3733 = vadd.f32 0.0, %v3732
      %v3734 = vpop.f32.mrf.mxu0
      %3735 = vmatprep.mubr.bf16.mxu0 0
      %3736 = vmatmul.mubr.bf16.gmra.mxu0 %v3682
      %v3737 = vpop.f32.mrf.mxu0
      %v3738 = vadd.f32 0.0, %v3737
      %v3739 = vpop.f32.mrf.mxu0
      %v3740 = vpop.f32.mrf.mxu0
      %v3741 = vadd.f32 0.0, %v3740
      %v3742 = vpop.f32.mrf.mxu0
      %3743 = vmatprep.mubr.bf16.mxu0 0
      %3744 = vmatmul.mubr.bf16.gmra.mxu0 %v3685
      %v3745 = vpop.f32.mrf.mxu0
      %v3746 = vadd.f32 0.0, %v3745
      %v3747 = vpop.f32.mrf.mxu0
      %v3748 = vpop.f32.mrf.mxu0
      %v3749 = vadd.f32 0.0, %v3748
      %v3750 = vpop.f32.mrf.mxu0
      %3751 = vdwg.mxu0
      %v3753 = vsel %vm2676, %v3209, 0
      %v3756 = vsel %vm2676, %v3210, 0
      %v3759 = vsel %vm2676, %v3211, 0
      %v3762 = vsel %vm2676, %v3212, 0
      %3764 = vmatprep.subr.bf16.mxu0 0
      %3765 = vmatpush1.bf16.msra.mxu0 0
      %3766 = vmatprep.subr.bf16.mxu0 0
      %3767 = vmatpush1.bf16.msra.mxu0 0
      %3768 = vmatprep.subr.bf16.mxu0 0
      %3769 = vmatpush1.bf16.msra.mxu0 0
      %3770 = vmatprep.subr.bf16.mxu0 0
      %3771 = vmatpush1.bf16.msra.mxu0 0
      %3772 = vmatprep.subr.bf16.mxu0 0
      %3773 = vmatpush1.bf16.msra.mxu0 %v2091
      %3774 = vmatprep.subr.bf16.mxu0 0
      %3775 = vmatpush1.bf16.msra.mxu0 %v2090
      %3776 = vmatprep.subr.bf16.mxu0 0
      %3777 = vmatpush1.bf16.msra.mxu0 %v2089
      %3778 = vmatprep.subr.bf16.mxu0 0
      %3779 = vmatpush1.bf16.msra.mxu0 %v2088
      %3780 = vmatprep.subr.bf16.mxu0 0
      %3781 = vmatpush2.bf16.msra.mxu0 0
      %3782 = vmatprep.subr.bf16.mxu0 0
      %3783 = vmatpush2.bf16.msra.mxu0 0
      %3784 = vmatprep.subr.bf16.mxu0 0
      %3785 = vmatpush2.bf16.msra.mxu0 0
      %3786 = vmatprep.subr.bf16.mxu0 0
      %3787 = vmatpush2.bf16.msra.mxu0 0
      %3788 = vmatprep.subr.bf16.mxu0 0
      %3789 = vmatpush2.bf16.msra.mxu0 0
      %3790 = vmatprep.subr.bf16.mxu0 0
      %3791 = vmatpush2.bf16.msra.mxu0 0
      %3792 = vmatprep.subr.bf16.mxu0 0
      %3793 = vmatpush2.bf16.msra.mxu0 0
      %3794 = vmatprep.subr.bf16.mxu0 0
      %3795 = vmatpush2.bf16.msra.mxu0 0
      %3796 = vmatprep.mubr.bf16.mxu0 0
      %3797 = vmatmul.mubr.bf16.gmra.mxu0 %v3753
      %v3798 = vpop.f32.mrf.mxu0
      %v3799 = vadd.f32 0.0, %v3798
      %v3800 = vpop.f32.mrf.mxu0
      %v3801 = vpop.f32.mrf.mxu0
      %v3802 = vadd.f32 0.0, %v3801
      %v3803 = vpop.f32.mrf.mxu0
      %3804 = vmatprep.mubr.bf16.mxu0 0
      %3805 = vmatmul.mubr.bf16.gmra.mxu0 %v3756
      %v3806 = vpop.f32.mrf.mxu0
      %v3807 = vadd.f32 0.0, %v3806
      %v3808 = vpop.f32.mrf.mxu0
      %v3809 = vpop.f32.mrf.mxu0
      %v3810 = vadd.f32 0.0, %v3809
      %v3811 = vpop.f32.mrf.mxu0
      %3812 = vmatprep.mubr.bf16.mxu0 0
      %3813 = vmatmul.mubr.bf16.gmra.mxu0 %v3759
      %v3814 = vpop.f32.mrf.mxu0
      %v3815 = vadd.f32 0.0, %v3814
      %v3816 = vpop.f32.mrf.mxu0
      %v3817 = vpop.f32.mrf.mxu0
      %v3818 = vadd.f32 0.0, %v3817
      %v3819 = vpop.f32.mrf.mxu0
      %3820 = vmatprep.mubr.bf16.mxu0 0
      %3821 = vmatmul.mubr.bf16.gmra.mxu0 %v3762
      %v3822 = vpop.f32.mrf.mxu0
      %v3823 = vadd.f32 0.0, %v3822
      %v3824 = vpop.f32.mrf.mxu0
      %v3825 = vpop.f32.mrf.mxu0
      %v3826 = vadd.f32 0.0, %v3825
      %v3827 = vpop.f32.mrf.mxu0
      %3828 = vdwg.mxu0
      %v3829 = vpack.c.bf16 %v3263, %v3260
      %v3830 = vpack.c.bf16 %v3271, %v3268
      %v3831 = vpack.c.bf16 %v3279, %v3276
      %v3832 = vpack.c.bf16 %v3287, %v3284
      %v3833 = vpack.c.bf16 %v3340, %v3337
      %v3834 = vpack.c.bf16 %v3348, %v3345
      %v3835 = vpack.c.bf16 %v3356, %v3353
      %v3836 = vpack.c.bf16 %v3364, %v3361
      %v3837 = vpack.c.bf16 %v3417, %v3414
      %v3838 = vpack.c.bf16 %v3425, %v3422
      %v3839 = vpack.c.bf16 %v3433, %v3430
      %v3840 = vpack.c.bf16 %v3441, %v3438
      %v3841 = vpack.c.bf16 %v3494, %v3491
      %v3842 = vpack.c.bf16 %v3502, %v3499
      %v3843 = vpack.c.bf16 %v3510, %v3507
      %v3844 = vpack.c.bf16 %v3518, %v3515
      %v3845 = vpack.c.bf16 %v3571, %v3568
      %v3846 = vpack.c.bf16 %v3579, %v3576
      %v3847 = vpack.c.bf16 %v3587, %v3584
      %v3848 = vpack.c.bf16 %v3595, %v3592
      %v3849 = vpack.c.bf16 %v3648, %v3645
      %v3850 = vpack.c.bf16 %v3656, %v3653
      %v3851 = vpack.c.bf16 %v3664, %v3661
      %v3852 = vpack.c.bf16 %v3672, %v3669
      %v3853 = vpack.c.bf16 %v3725, %v3722
      %v3854 = vpack.c.bf16 %v3733, %v3730
      %v3855 = vpack.c.bf16 %v3741, %v3738
      %v3856 = vpack.c.bf16 %v3749, %v3746
      %v3857 = vpack.c.bf16 %v3802, %v3799
      %v3858 = vpack.c.bf16 %v3810, %v3807
      %v3859 = vpack.c.bf16 %v3818, %v3815
      %v3860 = vpack.c.bf16 %v3826, %v3823
      %v3861 = vld [vmem:[%s6] sm:$0xf]
      %v3862 = vld [vmem:[%s6 + $0x4] sm:$0xf]
      %v3863 = vld [vmem:[%s6 + $0x8] sm:$0xf]
      %v3864 = vld [vmem:[%s6 + $0xc] sm:$0xf]
      %v3865 = vld [vmem:[%s6 + $0x10] sm:$0xf]
      %v3866 = vld [vmem:[%s6 + $0x14] sm:$0xf]
      %v3867 = vld [vmem:[%s6 + $0x18] sm:$0xf]
      %v3868 = vld [vmem:[%s6 + $0x1c] sm:$0xf]
      %v3869 = vld [vmem:[%s6 + $0x20] sm:$0xf]
      %v3870 = vld [vmem:[%s6 + $0x24] sm:$0xf]
      %v3871 = vld [vmem:[%s6 + $0x28] sm:$0xf]
      %v3872 = vld [vmem:[%s6 + $0x2c] sm:$0xf]
      %v3873 = vld [vmem:[%s6 + $0x30] sm:$0xf]
      %v3874 = vld [vmem:[%s6 + $0x34] sm:$0xf]
      %v3875 = vld [vmem:[%s6 + $0x38] sm:$0xf]
      %v3876 = vld [vmem:[%s6 + $0x3c] sm:$0xf]
      %v3877 = vld [vmem:[%s7] sm:$0x1]
      %v3879 = vlaneseq
      %v3880 = vshrl.u32 %v3879, 7
      %v3881 = vsub.s32 0, %v3880
      %v3882 = vrot.slane %v3877, %v3881
      %v3900 = vunpack.c.l.b16 %v3861
      %v3901 = vunpack.c.l.b16 %v3862
      %v3902 = vunpack.c.l.b16 %v3863
      %v3903 = vunpack.c.l.b16 %v3864
      %v3904 = vunpack.c.l.b16 %v3865
      %v3905 = vunpack.c.l.b16 %v3866
      %v3906 = vunpack.c.l.b16 %v3867
      %v3907 = vunpack.c.l.b16 %v3868
      %v3908 = vunpack.c.l.b16 %v3869
      %v3909 = vunpack.c.l.b16 %v3870
      %v3910 = vunpack.c.l.b16 %v3871
      %v3911 = vunpack.c.l.b16 %v3872
      %v3912 = vunpack.c.l.b16 %v3873
      %v3913 = vunpack.c.l.b16 %v3874
      %v3914 = vunpack.c.l.b16 %v3875
      %v3915 = vunpack.c.l.b16 %v3876
      %v3916 = vpack.c.b16 %v3901, %v3900
      %v3917 = vpack.c.b16 %v3903, %v3902
      %v3918 = vpack.c.b16 %v3905, %v3904
      %v3919 = vpack.c.b16 %v3907, %v3906
      %v3920 = vpack.c.b16 %v3909, %v3908
      %v3921 = vpack.c.b16 %v3911, %v3910
      %v3922 = vpack.c.b16 %v3913, %v3912
      %v3923 = vpack.c.b16 %v3915, %v3914
      %3932 = vmatprep.subr.bf16.mxu0 0
      %3933 = vmatpush1.bf16.msra.mxu0 %v3923
      %3934 = vmatprep.subr.bf16.mxu0 0
      %3935 = vmatpush1.bf16.msra.mxu0 %v3922
      %3936 = vmatprep.subr.bf16.mxu0 0
      %3937 = vmatpush1.bf16.msra.mxu0 %v3921
      %3938 = vmatprep.subr.bf16.mxu0 0
      %3939 = vmatpush1.bf16.msra.mxu0 %v3920
      %3940 = vmatprep.subr.bf16.mxu0 0
      %3941 = vmatpush1.bf16.msra.mxu0 %v3919
      %3942 = vmatprep.subr.bf16.mxu0 0
      %3943 = vmatpush1.bf16.msra.mxu0 %v3918
      %3944 = vmatprep.subr.bf16.mxu0 0
      %3945 = vmatpush1.bf16.msra.mxu0 %v3917
      %3946 = vmatprep.subr.bf16.mxu0 0
      %3947 = vmatpush1.bf16.msra.mxu0 %v3916
      %3948 = vmatprep.subr.bf16.mxu0 0
      %3949 = vmatpush2.bf16.msra.mxu0 0
      %3950 = vmatprep.subr.bf16.mxu0 0
      %3951 = vmatpush2.bf16.msra.mxu0 0
      %3952 = vmatprep.subr.bf16.mxu0 0
      %3953 = vmatpush2.bf16.msra.mxu0 0
      %3954 = vmatprep.subr.bf16.mxu0 0
      %3955 = vmatpush2.bf16.msra.mxu0 0
      %3956 = vmatprep.subr.bf16.mxu0 0
      %3957 = vmatpush2.bf16.msra.mxu0 0
      %3958 = vmatprep.subr.bf16.mxu0 0
      %3959 = vmatpush2.bf16.msra.mxu0 0
      %3960 = vmatprep.subr.bf16.mxu0 0
      %3961 = vmatpush2.bf16.msra.mxu0 0
      %3962 = vmatprep.subr.bf16.mxu0 0
      %3963 = vmatpush2.bf16.msra.mxu0 0
      %3964 = vmatprep.mubr.bf16.mxu0 0
      %3965 = vmatmul.mubr.bf16.gmra.mxu0 %v3829
      %v3966 = vpop.f32.mrf.mxu0
      %v3967 = vadd.f32 %v3882, %v3966
      %v3968 = vpop.f32.mrf.mxu0
      %v3969 = vpop.f32.mrf.mxu0
      %v3970 = vadd.f32 %v3882, %v3969
      %v3971 = vpop.f32.mrf.mxu0
      %3972 = vmatprep.mubr.bf16.mxu0 0
      %3973 = vmatmul.mubr.bf16.gmra.mxu0 %v3830
      %v3974 = vpop.f32.mrf.mxu0
      %v3975 = vadd.f32 %v3882, %v3974
      %v3976 = vpop.f32.mrf.mxu0
      %v3977 = vpop.f32.mrf.mxu0
      %v3978 = vadd.f32 %v3882, %v3977
      %v3979 = vpop.f32.mrf.mxu0
      %3980 = vmatprep.mubr.bf16.mxu0 0
      %3981 = vmatmul.mubr.bf16.gmra.mxu0 %v3831
      %v3982 = vpop.f32.mrf.mxu0
      %v3983 = vadd.f32 %v3882, %v3982
      %v3984 = vpop.f32.mrf.mxu0
      %v3985 = vpop.f32.mrf.mxu0
      %v3986 = vadd.f32 %v3882, %v3985
      %v3987 = vpop.f32.mrf.mxu0
      %3988 = vmatprep.mubr.bf16.mxu0 0
      %3989 = vmatmul.mubr.bf16.gmra.mxu0 %v3832
      %v3990 = vpop.f32.mrf.mxu0
      %v3991 = vadd.f32 %v3882, %v3990
      %v3992 = vpop.f32.mrf.mxu0
      %v3993 = vpop.f32.mrf.mxu0
      %v3994 = vadd.f32 %v3882, %v3993
      %v3995 = vpop.f32.mrf.mxu0
      %3996 = vmatprep.mubr.bf16.mxu0 0
      %3997 = vmatmul.mubr.bf16.gmra.mxu0 %v3833
      %v3998 = vpop.f32.mrf.mxu0
      %v3999 = vadd.f32 %v3882, %v3998
      %v4000 = vpop.f32.mrf.mxu0
      %v4001 = vpop.f32.mrf.mxu0
      %v4002 = vadd.f32 %v3882, %v4001
      %v4003 = vpop.f32.mrf.mxu0
      %4004 = vmatprep.mubr.bf16.mxu0 0
      %4005 = vmatmul.mubr.bf16.gmra.mxu0 %v3834
      %v4006 = vpop.f32.mrf.mxu0
      %v4007 = vadd.f32 %v3882, %v4006
      %v4008 = vpop.f32.mrf.mxu0
      %v4009 = vpop.f32.mrf.mxu0
      %v4010 = vadd.f32 %v3882, %v4009
      %v4011 = vpop.f32.mrf.mxu0
      %4012 = vmatprep.mubr.bf16.mxu0 0
      %4013 = vmatmul.mubr.bf16.gmra.mxu0 %v3835
      %v4014 = vpop.f32.mrf.mxu0
      %v4015 = vadd.f32 %v3882, %v4014
      %v4016 = vpop.f32.mrf.mxu0
      %v4017 = vpop.f32.mrf.mxu0
      %v4018 = vadd.f32 %v3882, %v4017
      %v4019 = vpop.f32.mrf.mxu0
      %4020 = vmatprep.mubr.bf16.mxu0 0
      %4021 = vmatmul.mubr.bf16.gmra.mxu0 %v3836
      %v4022 = vpop.f32.mrf.mxu0
      %v4023 = vadd.f32 %v3882, %v4022
      %v4024 = vpop.f32.mrf.mxu0
      %v4025 = vpop.f32.mrf.mxu0
      %v4026 = vadd.f32 %v3882, %v4025
      %v4027 = vpop.f32.mrf.mxu0
      %4028 = vmatprep.mubr.bf16.mxu0 0
      %4029 = vmatmul.mubr.bf16.gmra.mxu0 %v3837
      %v4030 = vpop.f32.mrf.mxu0
      %v4031 = vadd.f32 %v3882, %v4030
      %v4032 = vpop.f32.mrf.mxu0
      %v4033 = vpop.f32.mrf.mxu0
      %v4034 = vadd.f32 %v3882, %v4033
      %v4035 = vpop.f32.mrf.mxu0
      %4036 = vmatprep.mubr.bf16.mxu0 0
      %4037 = vmatmul.mubr.bf16.gmra.mxu0 %v3838
      %v4038 = vpop.f32.mrf.mxu0
      %v4039 = vadd.f32 %v3882, %v4038
      %v4040 = vpop.f32.mrf.mxu0
      %v4041 = vpop.f32.mrf.mxu0
      %v4042 = vadd.f32 %v3882, %v4041
      %v4043 = vpop.f32.mrf.mxu0
      %4044 = vmatprep.mubr.bf16.mxu0 0
      %4045 = vmatmul.mubr.bf16.gmra.mxu0 %v3839
      %v4046 = vpop.f32.mrf.mxu0
      %v4047 = vadd.f32 %v3882, %v4046
      %v4048 = vpop.f32.mrf.mxu0
      %v4049 = vpop.f32.mrf.mxu0
      %v4050 = vadd.f32 %v3882, %v4049
      %v4051 = vpop.f32.mrf.mxu0
      %4052 = vmatprep.mubr.bf16.mxu0 0
      %4053 = vmatmul.mubr.bf16.gmra.mxu0 %v3840
      %v4054 = vpop.f32.mrf.mxu0
      %v4055 = vadd.f32 %v3882, %v4054
      %v4056 = vpop.f32.mrf.mxu0
      %v4057 = vpop.f32.mrf.mxu0
      %v4058 = vadd.f32 %v3882, %v4057
      %v4059 = vpop.f32.mrf.mxu0
      %4060 = vmatprep.mubr.bf16.mxu0 0
      %4061 = vmatmul.mubr.bf16.gmra.mxu0 %v3841
      %v4062 = vpop.f32.mrf.mxu0
      %v4063 = vadd.f32 %v3882, %v4062
      %v4064 = vpop.f32.mrf.mxu0
      %v4065 = vpop.f32.mrf.mxu0
      %v4066 = vadd.f32 %v3882, %v4065
      %v4067 = vpop.f32.mrf.mxu0
      %4068 = vmatprep.mubr.bf16.mxu0 0
      %4069 = vmatmul.mubr.bf16.gmra.mxu0 %v3842
      %v4070 = vpop.f32.mrf.mxu0
      %v4071 = vadd.f32 %v3882, %v4070
      %v4072 = vpop.f32.mrf.mxu0
      %v4073 = vpop.f32.mrf.mxu0
      %v4074 = vadd.f32 %v3882, %v4073
      %v4075 = vpop.f32.mrf.mxu0
      %4076 = vmatprep.mubr.bf16.mxu0 0
      %4077 = vmatmul.mubr.bf16.gmra.mxu0 %v3843
      %v4078 = vpop.f32.mrf.mxu0
      %v4079 = vadd.f32 %v3882, %v4078
      %v4080 = vpop.f32.mrf.mxu0
      %v4081 = vpop.f32.mrf.mxu0
      %v4082 = vadd.f32 %v3882, %v4081
      %v4083 = vpop.f32.mrf.mxu0
      %4084 = vmatprep.mubr.bf16.mxu0 0
      %4085 = vmatmul.mubr.bf16.gmra.mxu0 %v3844
      %v4086 = vpop.f32.mrf.mxu0
      %v4087 = vadd.f32 %v3882, %v4086
      %v4088 = vpop.f32.mrf.mxu0
      %v4089 = vpop.f32.mrf.mxu0
      %v4090 = vadd.f32 %v3882, %v4089
      %v4091 = vpop.f32.mrf.mxu0
      %4092 = vmatprep.mubr.bf16.mxu0 0
      %4093 = vmatmul.mubr.bf16.gmra.mxu0 %v3845
      %v4094 = vpop.f32.mrf.mxu0
      %v4095 = vadd.f32 %v3882, %v4094
      %v4096 = vpop.f32.mrf.mxu0
      %v4097 = vpop.f32.mrf.mxu0
      %v4098 = vadd.f32 %v3882, %v4097
      %v4099 = vpop.f32.mrf.mxu0
      %4100 = vmatprep.mubr.bf16.mxu0 0
      %4101 = vmatmul.mubr.bf16.gmra.mxu0 %v3846
      %v4102 = vpop.f32.mrf.mxu0
      %v4103 = vadd.f32 %v3882, %v4102
      %v4104 = vpop.f32.mrf.mxu0
      %v4105 = vpop.f32.mrf.mxu0
      %v4106 = vadd.f32 %v3882, %v4105
      %v4107 = vpop.f32.mrf.mxu0
      %4108 = vmatprep.mubr.bf16.mxu0 0
      %4109 = vmatmul.mubr.bf16.gmra.mxu0 %v3847
      %v4110 = vpop.f32.mrf.mxu0
      %v4111 = vadd.f32 %v3882, %v4110
      %v4112 = vpop.f32.mrf.mxu0
      %v4113 = vpop.f32.mrf.mxu0
      %v4114 = vadd.f32 %v3882, %v4113
      %v4115 = vpop.f32.mrf.mxu0
      %4116 = vmatprep.mubr.bf16.mxu0 0
      %4117 = vmatmul.mubr.bf16.gmra.mxu0 %v3848
      %v4118 = vpop.f32.mrf.mxu0
      %v4119 = vadd.f32 %v3882, %v4118
      %v4120 = vpop.f32.mrf.mxu0
      %v4121 = vpop.f32.mrf.mxu0
      %v4122 = vadd.f32 %v3882, %v4121
      %v4123 = vpop.f32.mrf.mxu0
      %4124 = vmatprep.mubr.bf16.mxu0 0
      %4125 = vmatmul.mubr.bf16.gmra.mxu0 %v3849
      %v4126 = vpop.f32.mrf.mxu0
      %v4127 = vadd.f32 %v3882, %v4126
      %v4128 = vpop.f32.mrf.mxu0
      %v4129 = vpop.f32.mrf.mxu0
      %v4130 = vadd.f32 %v3882, %v4129
      %v4131 = vpop.f32.mrf.mxu0
      %4132 = vmatprep.mubr.bf16.mxu0 0
      %4133 = vmatmul.mubr.bf16.gmra.mxu0 %v3850
      %v4134 = vpop.f32.mrf.mxu0
      %v4135 = vadd.f32 %v3882, %v4134
      %v4136 = vpop.f32.mrf.mxu0
      %v4137 = vpop.f32.mrf.mxu0
      %v4138 = vadd.f32 %v3882, %v4137
      %v4139 = vpop.f32.mrf.mxu0
      %4140 = vmatprep.mubr.bf16.mxu0 0
      %4141 = vmatmul.mubr.bf16.gmra.mxu0 %v3851
      %v4142 = vpop.f32.mrf.mxu0
      %v4143 = vadd.f32 %v3882, %v4142
      %v4144 = vpop.f32.mrf.mxu0
      %v4145 = vpop.f32.mrf.mxu0
      %v4146 = vadd.f32 %v3882, %v4145
      %v4147 = vpop.f32.mrf.mxu0
      %4148 = vmatprep.mubr.bf16.mxu0 0
      %4149 = vmatmul.mubr.bf16.gmra.mxu0 %v3852
      %v4150 = vpop.f32.mrf.mxu0
      %v4151 = vadd.f32 %v3882, %v4150
      %v4152 = vpop.f32.mrf.mxu0
      %v4153 = vpop.f32.mrf.mxu0
      %v4154 = vadd.f32 %v3882, %v4153
      %v4155 = vpop.f32.mrf.mxu0
      %4156 = vmatprep.mubr.bf16.mxu0 0
      %4157 = vmatmul.mubr.bf16.gmra.mxu0 %v3853
      %v4158 = vpop.f32.mrf.mxu0
      %v4159 = vadd.f32 %v3882, %v4158
      %v4160 = vpop.f32.mrf.mxu0
      %v4161 = vpop.f32.mrf.mxu0
      %v4162 = vadd.f32 %v3882, %v4161
      %v4163 = vpop.f32.mrf.mxu0
      %4164 = vmatprep.mubr.bf16.mxu0 0
      %4165 = vmatmul.mubr.bf16.gmra.mxu0 %v3854
      %v4166 = vpop.f32.mrf.mxu0
      %v4167 = vadd.f32 %v3882, %v4166
      %v4168 = vpop.f32.mrf.mxu0
      %v4169 = vpop.f32.mrf.mxu0
      %v4170 = vadd.f32 %v3882, %v4169
      %v4171 = vpop.f32.mrf.mxu0
      %4172 = vmatprep.mubr.bf16.mxu0 0
      %4173 = vmatmul.mubr.bf16.gmra.mxu0 %v3855
      %v4174 = vpop.f32.mrf.mxu0
      %v4175 = vadd.f32 %v3882, %v4174
      %v4176 = vpop.f32.mrf.mxu0
      %v4177 = vpop.f32.mrf.mxu0
      %v4178 = vadd.f32 %v3882, %v4177
      %v4179 = vpop.f32.mrf.mxu0
      %4180 = vmatprep.mubr.bf16.mxu0 0
      %4181 = vmatmul.mubr.bf16.gmra.mxu0 %v3856
      %v4182 = vpop.f32.mrf.mxu0
      %v4183 = vadd.f32 %v3882, %v4182
      %v4184 = vpop.f32.mrf.mxu0
      %v4185 = vpop.f32.mrf.mxu0
      %v4186 = vadd.f32 %v3882, %v4185
      %v4187 = vpop.f32.mrf.mxu0
      %4188 = vmatprep.mubr.bf16.mxu0 0
      %4189 = vmatmul.mubr.bf16.gmra.mxu0 %v3857
      %v4190 = vpop.f32.mrf.mxu0
      %v4191 = vadd.f32 %v3882, %v4190
      %v4192 = vpop.f32.mrf.mxu0
      %v4193 = vpop.f32.mrf.mxu0
      %v4194 = vadd.f32 %v3882, %v4193
      %v4195 = vpop.f32.mrf.mxu0
      %4196 = vmatprep.mubr.bf16.mxu0 0
      %4197 = vmatmul.mubr.bf16.gmra.mxu0 %v3858
      %v4198 = vpop.f32.mrf.mxu0
      %v4199 = vadd.f32 %v3882, %v4198
      %v4200 = vpop.f32.mrf.mxu0
      %v4201 = vpop.f32.mrf.mxu0
      %v4202 = vadd.f32 %v3882, %v4201
      %v4203 = vpop.f32.mrf.mxu0
      %4204 = vmatprep.mubr.bf16.mxu0 0
      %4205 = vmatmul.mubr.bf16.gmra.mxu0 %v3859
      %v4206 = vpop.f32.mrf.mxu0
      %v4207 = vadd.f32 %v3882, %v4206
      %v4208 = vpop.f32.mrf.mxu0
      %v4209 = vpop.f32.mrf.mxu0
      %v4210 = vadd.f32 %v3882, %v4209
      %v4211 = vpop.f32.mrf.mxu0
      %4212 = vmatprep.mubr.bf16.mxu0 0
      %4213 = vmatmul.mubr.bf16.gmra.mxu0 %v3860
      %v4214 = vpop.f32.mrf.mxu0
      %v4215 = vadd.f32 %v3882, %v4214
      %v4216 = vpop.f32.mrf.mxu0
      %v4217 = vpop.f32.mrf.mxu0
      %v4218 = vadd.f32 %v3882, %v4217
      %v4219 = vpop.f32.mrf.mxu0
      %4220 = vdwg.mxu0
      %v4221 = vadd.f32 %v3967, %v307
      %v4222 = vadd.f32 %v3970, %v308
      %v4223 = vadd.f32 %v3975, %v309
      %v4224 = vadd.f32 %v3978, %v310
      %v4225 = vadd.f32 %v3983, %v311
      %v4226 = vadd.f32 %v3986, %v312
      %v4227 = vadd.f32 %v3991, %v313
      %v4228 = vadd.f32 %v3994, %v314
      %v4229 = vadd.f32 %v3999, %v315
      %v4230 = vadd.f32 %v4002, %v316
      %v4231 = vadd.f32 %v4007, %v317
      %v4232 = vadd.f32 %v4010, %v318
      %v4233 = vadd.f32 %v4015, %v319
      %v4234 = vadd.f32 %v4018, %v320
      %v4235 = vadd.f32 %v4023, %v321
      %v4236 = vadd.f32 %v4026, %v322
      %v4237 = vadd.f32 %v4031, %v323
      %v4238 = vadd.f32 %v4034, %v324
      %v4239 = vadd.f32 %v4039, %v325
      %v4240 = vadd.f32 %v4042, %v326
      %v4241 = vadd.f32 %v4047, %v327
      %v4242 = vadd.f32 %v4050, %v328
      %v4243 = vadd.f32 %v4055, %v329
      %v4244 = vadd.f32 %v4058, %v330
      %v4245 = vadd.f32 %v4063, %v331
      %v4246 = vadd.f32 %v4066, %v332
      %v4247 = vadd.f32 %v4071, %v333
      %v4248 = vadd.f32 %v4074, %v334
      %v4249 = vadd.f32 %v4079, %v335
      %v4250 = vadd.f32 %v4082, %v336
      %v4251 = vadd.f32 %v4087, %v337
      %v4252 = vadd.f32 %v4090, %v338
      %v4253 = vadd.f32 %v4095, %v339
      %v4254 = vadd.f32 %v4098, %v340
      %v4255 = vadd.f32 %v4103, %v341
      %v4256 = vadd.f32 %v4106, %v342
      %v4257 = vadd.f32 %v4111, %v343
      %v4258 = vadd.f32 %v4114, %v344
      %v4259 = vadd.f32 %v4119, %v345
      %v4260 = vadd.f32 %v4122, %v346
      %v4261 = vadd.f32 %v4127, %v347
      %v4262 = vadd.f32 %v4130, %v348
      %v4263 = vadd.f32 %v4135, %v349
      %v4264 = vadd.f32 %v4138, %v350
      %v4265 = vadd.f32 %v4143, %v351
      %v4266 = vadd.f32 %v4146, %v352
      %v4267 = vadd.f32 %v4151, %v353
      %v4268 = vadd.f32 %v4154, %v354
      %v4269 = vadd.f32 %v4159, %v355
      %v4270 = vadd.f32 %v4162, %v356
      %v4271 = vadd.f32 %v4167, %v357
      %v4272 = vadd.f32 %v4170, %v358
      %v4273 = vadd.f32 %v4175, %v359
      %v4274 = vadd.f32 %v4178, %v360
      %v4275 = vadd.f32 %v4183, %v361
      %v4276 = vadd.f32 %v4186, %v362
      %v4277 = vadd.f32 %v4191, %v363
      %v4278 = vadd.f32 %v4194, %v364
      %v4279 = vadd.f32 %v4199, %v365
      %v4280 = vadd.f32 %v4202, %v366
      %v4281 = vadd.f32 %v4207, %v367
      %v4282 = vadd.f32 %v4210, %v368
      %v4283 = vadd.f32 %v4215, %v369
      %v4284 = vadd.f32 %v4218, %v370
      %4285 = vst [vmem:[%s305] sm:$0xff] %v4221
      %4286 = vst [vmem:[%s305 + $0x8] sm:$0xff] %v4222
      %4287 = vst [vmem:[%s305 + $0x10] sm:$0xff] %v4223
      %4288 = vst [vmem:[%s305 + $0x18] sm:$0xff] %v4224
      %4289 = vst [vmem:[%s305 + $0x20] sm:$0xff] %v4225
      %4290 = vst [vmem:[%s305 + $0x28] sm:$0xff] %v4226
      %4291 = vst [vmem:[%s305 + $0x30] sm:$0xff] %v4227
      %4292 = vst [vmem:[%s305 + $0x38] sm:$0xff] %v4228
      %4293 = vst [vmem:[%s305 + $0x40] sm:$0xff] %v4229
      %4294 = vst [vmem:[%s305 + $0x48] sm:$0xff] %v4230
      %4295 = vst [vmem:[%s305 + $0x50] sm:$0xff] %v4231
      %4296 = vst [vmem:[%s305 + $0x58] sm:$0xff] %v4232
      %4297 = vst [vmem:[%s305 + $0x60] sm:$0xff] %v4233
      %4298 = vst [vmem:[%s305 + $0x68] sm:$0xff] %v4234
      %4299 = vst [vmem:[%s305 + $0x70] sm:$0xff] %v4235
      %4300 = vst [vmem:[%s305 + $0x78] sm:$0xff] %v4236
      %4301 = vst [vmem:[%s305 + $0x80] sm:$0xff] %v4237
      %4302 = vst [vmem:[%s305 + $0x88] sm:$0xff] %v4238
      %4303 = vst [vmem:[%s305 + $0x90] sm:$0xff] %v4239
      %4304 = vst [vmem:[%s305 + $0x98] sm:$0xff] %v4240
      %4305 = vst [vmem:[%s305 + $0xa0] sm:$0xff] %v4241
      %4306 = vst [vmem:[%s305 + $0xa8] sm:$0xff] %v4242
      %4307 = vst [vmem:[%s305 + $0xb0] sm:$0xff] %v4243
      %4308 = vst [vmem:[%s305 + $0xb8] sm:$0xff] %v4244
      %4309 = vst [vmem:[%s305 + $0xc0] sm:$0xff] %v4245
      %4310 = vst [vmem:[%s305 + $0xc8] sm:$0xff] %v4246
      %4311 = vst [vmem:[%s305 + $0xd0] sm:$0xff] %v4247
      %4312 = vst [vmem:[%s305 + $0xd8] sm:$0xff] %v4248
      %4313 = vst [vmem:[%s305 + $0xe0] sm:$0xff] %v4249
      %4314 = vst [vmem:[%s305 + $0xe8] sm:$0xff] %v4250
      %4315 = vst [vmem:[%s305 + $0xf0] sm:$0xff] %v4251
      %4316 = vst [vmem:[%s305 + $0xf8] sm:$0xff] %v4252
      %4317 = vst [vmem:[%s305 + $0x100] sm:$0xff] %v4253
      %4318 = vst [vmem:[%s305 + $0x108] sm:$0xff] %v4254
      %4319 = vst [vmem:[%s305 + $0x110] sm:$0xff] %v4255
      %4320 = vst [vmem:[%s305 + $0x118] sm:$0xff] %v4256
      %4321 = vst [vmem:[%s305 + $0x120] sm:$0xff] %v4257
      %4322 = vst [vmem:[%s305 + $0x128] sm:$0xff] %v4258
      %4323 = vst [vmem:[%s305 + $0x130] sm:$0xff] %v4259
      %4324 = vst [vmem:[%s305 + $0x138] sm:$0xff] %v4260
      %4325 = vst [vmem:[%s305 + $0x140] sm:$0xff] %v4261
      %4326 = vst [vmem:[%s305 + $0x148] sm:$0xff] %v4262
      %4327 = vst [vmem:[%s305 + $0x150] sm:$0xff] %v4263
      %4328 = vst [vmem:[%s305 + $0x158] sm:$0xff] %v4264
      %4329 = vst [vmem:[%s305 + $0x160] sm:$0xff] %v4265
      %4330 = vst [vmem:[%s305 + $0x168] sm:$0xff] %v4266
      %4331 = vst [vmem:[%s305 + $0x170] sm:$0xff] %v4267
      %4332 = vst [vmem:[%s305 + $0x178] sm:$0xff] %v4268
      %4333 = vst [vmem:[%s305 + $0x180] sm:$0xff] %v4269
      %4334 = vst [vmem:[%s305 + $0x188] sm:$0xff] %v4270
      %4335 = vst [vmem:[%s305 + $0x190] sm:$0xff] %v4271
      %4336 = vst [vmem:[%s305 + $0x198] sm:$0xff] %v4272
      %4337 = vst [vmem:[%s305 + $0x1a0] sm:$0xff] %v4273
      %4338 = vst [vmem:[%s305 + $0x1a8] sm:$0xff] %v4274
      %4339 = vst [vmem:[%s305 + $0x1b0] sm:$0xff] %v4275
      %4340 = vst [vmem:[%s305 + $0x1b8] sm:$0xff] %v4276
      %4341 = vst [vmem:[%s305 + $0x1c0] sm:$0xff] %v4277
      %4342 = vst [vmem:[%s305 + $0x1c8] sm:$0xff] %v4278
      %4343 = vst [vmem:[%s305 + $0x1d0] sm:$0xff] %v4279
      %4344 = vst [vmem:[%s305 + $0x1d8] sm:$0xff] %v4280
      %4345 = vst [vmem:[%s305 + $0x1e0] sm:$0xff] %v4281
      %4346 = vst [vmem:[%s305 + $0x1e8] sm:$0xff] %v4282
      %4347 = vst [vmem:[%s305 + $0x1f0] sm:$0xff] %v4283
      %4348 = vst [vmem:[%s305 + $0x1f8] sm:$0xff] %v4284
      %p4349 = scmp.lt.s32.totalorder %s19, 1
      %s4350 = scalar_select %p4349, %s19, 1
      %s4351 = smul.addr %s4350, 64
      %s4352 = smul.addr %s4351, 8
      %s4353 = scalar_lea.vmem %s8, %s4352
      // Predicated region
      $region53: #{self_attention.1} parent=51 // pred_check
        %p4354 = pneg %p210
      $region54: #{self_attention.1} parent=51 // pred_check_branch
        %4356 = sbr.rel (%p4354) target = $region56
      $region55: #{self_attention.1} parent=51 // pred_region
        _
      $region56: #{self_attention.1} parent=51 // pred_fallthru
        _
    $region52: #{self_attention.1} parent=5 // pred_fallthru
      _
    %p4357 = scmp.le.s32.totalorder 2, %s14
    // Predicated region
    $region57: #{self_attention.1} parent=5 // pred_check
      %p4358 = pneg %p4357
    $region58: #{self_attention.1} parent=5 // pred_check_branch
      %4360 = sbr.rel (%p4358) target = $region60
    $region59: #{self_attention.1} parent=5 // pred_region
      %s4361 = ssub.s32 %s14, 2
      // Predicated region
      $region61: #{self_attention.1} parent=59 // pred_check
        %p4362 = pneg %p216
      $region62: #{self_attention.1} parent=59 // pred_check_branch
        %4364 = sbr.rel (%p4362) target = $region64
      $region63: #{self_attention.1} parent=59 // pred_region
        %p4365 = scmp.lt.s32.totalorder %s20, 1
        %s4366 = scalar_select %p4365, %s20, 1
        %s4367 = smul.addr %s4366, 64
        %s4368 = smul.addr %s4367, 8
        %s4369 = scalar_lea.vmem %s8, %s4368
      $region64: #{self_attention.1} parent=59 // pred_fallthru
        _
    $region60: #{self_attention.1} parent=5 // pred_fallthru
      _
  $region6: #{self_attention.1} parent=0 // loop_footer
    %s18 = sadd.s32 1, %s14
  $region7: #{self_attention.1} parent=0 // loop_footer_branch
    %13 = sbr.rel target = $region3
  $region8: #{self_attention.1} parent=0 // loop_exit
    _

</llo_original>
